<compile_context>
chip_gen: v5e
topology: v5e:2x2
jax: 0.10.0
libtpu: 0.0.40
codegen_flags: <defaults>
</compile_context>

<pallas_src>
import math

import jax
import jax.numpy as jnp
from jax.experimental import pallas as pl
from jax.experimental.pallas import tpu as pltpu


def pose_decoder_kernel(x_ref, w1_ref, b1_ref, w2_ref, b2_ref, w3_ref, b3_ref,
                        out_ref, pooled_acc):
    """Grid = (batch tiles [parallel], HW tiles [arbitrary / reduction])."""
    j = pl.program_id(1)

    @pl.when(j == 0)
    def _init():
        pooled_acc[...] = jnp.zeros_like(pooled_acc)

    # Partial global-average-pool: sum this (n_tile, C, hw_tile) chunk over the
    # lane (H*W) axis.  The 1/(H*W) scale is folded into w1.
    pooled_acc[...] += jnp.sum(x_ref[...], axis=-1)

    @pl.when(j == pl.num_programs(1) - 1)
    def _finalize():
        pooled = pooled_acc[...]                                    # (n_tile, C)
        # Fused heads: features laid out as [height | angle].
        h1 = jnp.maximum(
            jnp.dot(pooled, w1_ref[...],
                    preferred_element_type=jnp.float32) + b1_ref[...], 0.0)
        h2 = jnp.maximum(
            jnp.dot(h1, w2_ref[...],
                    preferred_element_type=jnp.float32) + b2_ref[...], 0.0)
        raw = jnp.dot(h2, w3_ref[...],
                      preferred_element_type=jnp.float32) + b3_ref[...]  # (n_tile, 2)
        # col 0 = camera_height (identity); col 1 = pi/2 * sigmoid(camera_angle)
        col = jax.lax.broadcasted_iota(jnp.int32, raw.shape, 1)
        out_ref[...] = jnp.where(col == 0, raw,
                                 (math.pi / 2.0) * jax.nn.sigmoid(raw))


def _choose_hw_tile(hw, n_tile, c, max_tile=512, buf_budget_bytes=8 << 20):
    """Largest multiple of 128 dividing hw, capped by max_tile and a per-buffer
    VMEM budget; falls back to the full extent when hw is not 128-aligned."""
    if hw % 128 != 0:
        return hw
    best = 128
    t = 128
    while t <= min(hw, max_tile):
        if hw % t == 0 and n_tile * c * t * 4 <= buf_budget_bytes:
            best = t
        t += 128
    return best


def _vmem_limit_bytes(n_tile, c, hw_tile, weight_bytes):
    x_tile = n_tile * c * hw_tile * 4
    pooled = max(n_tile, 8) * max(c, 128) * 4
    out_tile = 8 * 128 * 4
    # Inputs/outputs are (up to) double-buffered by the BlockSpec pipeline.
    total = 2 * (x_tile + weight_bytes + out_tile) + pooled + (4 << 20)
    # Stay inside the tightest physical budget (v7x: 64 MiB per TensorCore).
    return int(min(max(total, 16 << 20), 48 << 20))


def pose_decoder(x_nchw, packed_params):
    """x_nchw: (N, C, H, W) float32.  packed_params: from pack_params().
    Returns dict of (N,) vectors."""
    N, C, H, W = x_nchw.shape
    HW = H * W
    x = x_nchw.reshape(N, C, HW)            # free reshape; no HBM transpose

    w1, b1, w2, b2, w3, b3 = packed_params
    n_tile = 8 if N % 8 == 0 else N
    hw_tile = _choose_hw_tile(HW, n_tile, C)
    grid = (N // n_tile, HW // hw_tile)

    weight_bytes = sum(int(p.size) * p.dtype.itemsize for p in packed_params)
    vmem_limit = _vmem_limit_bytes(n_tile, C, hw_tile, weight_bytes)

    def _const(shape):
        # Constant index_map: DMA'd once, stays resident across the whole grid.
        return pl.BlockSpec(shape, lambda i, j: (0, 0))

    out = pl.pallas_call(
        pose_decoder_kernel,
        out_shape=jax.ShapeDtypeStruct((N, 2), jnp.float32),
        grid_spec=pltpu.PrefetchScalarGridSpec(
            num_scalar_prefetch=0,
            grid=grid,
            in_specs=[
                pl.BlockSpec((n_tile, C, hw_tile), lambda i, j: (i, 0, j)),
                _const(w1.shape), _const(b1.shape),
                _const(w2.shape), _const(b2.shape),
                _const(w3.shape), _const(b3.shape),
            ],
            out_specs=pl.BlockSpec((n_tile, 2), lambda i, j: (i, 0)),
            scratch_shapes=[pltpu.VMEM((n_tile, C), jnp.float32)],
        ),
        compiler_params=pltpu.CompilerParams(
            dimension_semantics=("parallel", "arbitrary"),
            vmem_limit_bytes=vmem_limit,
        ),
    )(x, w1, b1, w2, b2, w3, b3)

    return dict(camera_height=out[:, 0], camera_angle=out[:, 1])


def init_params(key, in_channels):
    """Per-head params, PyTorch-Linear-style uniform(+-1/sqrt(fan_in)) init."""
    def linear(k, fan_in, fan_out):
        kw, kb = jax.random.split(k)
        bound = 1.0 / math.sqrt(fan_in)
        w = jax.random.uniform(kw, (fan_in, fan_out), jnp.float32, -bound, bound)
        b = jax.random.uniform(kb, (1, fan_out), jnp.float32, -bound, bound)
        return w, b

    keys = jax.random.split(key, 6)
    w1h, b1h = linear(keys[0], in_channels, 512)
    w2h, b2h = linear(keys[1], 512, 128)
    w3h, b3h = linear(keys[2], 128, 1)
    w1a, b1a = linear(keys[3], in_channels, 512)
    w2a, b2a = linear(keys[4], 512, 128)
    w3a, b3a = linear(keys[5], 128, 1)
    return (w1h, b1h, w2h, b2h, w3h, b3h,
            w1a, b1a, w2a, b2a, w3a, b3a)


def pack_params(raw_params, hw):
    """Fuse the two heads into single weight slabs and fold the 1/(H*W)
    average-pool scale into layer 1.  One-time packing, outside the kernel."""
    (w1h, b1h, w2h, b2h, w3h, b3h,
     w1a, b1a, w2a, b2a, w3a, b3a) = raw_params
    inv_hw = 1.0 / float(hw)
    w1 = jnp.concatenate([w1h, w1a], axis=1) * inv_hw            # (C, 1024)
    b1 = jnp.concatenate([b1h, b1a], axis=1)                     # (1, 1024)
    z2 = jnp.zeros_like(w2h)
    w2 = jnp.block([[w2h, z2], [z2, w2a]])                       # (1024, 256)
    b2 = jnp.concatenate([b2h, b2a], axis=1)                     # (1, 256)
    z3 = jnp.zeros_like(w3h)
    w3 = jnp.block([[w3h, z3], [z3, w3a]])                       # (256, 2)
    b3 = jnp.concatenate([b3h, b3a], axis=1)                     # (1, 2)
    return w1, b1, w2, b2, w3, b3


def pose_decoder_reference(x_nchw, raw_params):
    """Pure-JAX f32 reference matching the PyTorch eval-mode forward."""
    (w1h, b1h, w2h, b2h, w3h, b3h,
     w1a, b1a, w2a, b2a, w3a, b3a) = raw_params
    hp = jax.lax.Precision.HIGHEST
    pooled = jnp.mean(x_nchw, axis=(2, 3))                       # (N, C)

    def head(w1, b1, w2, b2, w3, b3):
        h1 = jax.nn.relu(jnp.dot(pooled, w1, precision=hp) + b1)
        h2 = jax.nn.relu(jnp.dot(h1, w2, precision=hp) + b2)
        return jnp.dot(h2, w3, precision=hp) + b3                # (N, 1)

    h = head(w1h, b1h, w2h, b2h, w3h, b3h)
    a = head(w1a, b1a, w2a, b2a, w3a, b3a)
    return dict(camera_height=h.reshape(-1),
                camera_angle=(math.pi / 2.0) * jax.nn.sigmoid(a).reshape(-1))


if __name__ == "__main__":
    key = jax.random.PRNGKey(0)
    k_x, k_p = jax.random.split(key)

    # Small shapes (module default is in_channels=2048 ResNet features).
    N, C, H, W = 2, 256, 32, 32
    x = jax.random.normal(k_x, (N, C, H, W), dtype=jnp.float32)

    raw_params = init_params(k_p, C)
    packed_params = pack_params(raw_params, H * W)

    out = pose_decoder(x, packed_params)
    jax.block_until_ready(out)

    assert out["camera_height"].shape == (N,)
    assert out["camera_angle"].shape == (N,)

    ref = pose_decoder_reference(x, raw_params)
    assert jnp.allclose(out["camera_height"], ref["camera_height"],
                        rtol=1e-3, atol=1e-3)
    assert jnp.allclose(out["camera_angle"], ref["camera_angle"],
                        rtol=1e-3, atol=1e-3)

    print("KERNEL_OK")
</pallas_src>

<mosaic_0001>
module attributes {stable_mosaic.version = 11 : i64} {
  func.func @pose_decoder_kernel(%arg0: i32, %arg1: i32, %arg2: memref<2x256x512xf32, #tpu.memory_space<vmem>>, %arg3: memref<256x1024xf32, #tpu.memory_space<vmem>>, %arg4: memref<1x1024xf32, #tpu.memory_space<vmem>>, %arg5: memref<1024x256xf32, #tpu.memory_space<vmem>>, %arg6: memref<1x256xf32, #tpu.memory_space<vmem>>, %arg7: memref<256x2xf32, #tpu.memory_space<vmem>>, %arg8: memref<1x2xf32, #tpu.memory_space<vmem>>, %arg9: memref<2x2xf32, #tpu.memory_space<vmem>>, %arg10: memref<2x256xf32, #tpu.memory_space<vmem>>) attributes {dimension_semantics = [#tpu.dimension_semantics<parallel>, #tpu.dimension_semantics<arbitrary>], iteration_bounds = array<i64: 1, 2>, scalar_prefetch = 0 : i64, scratch_operands = 1 : i64, tpu.core_type = #tpu.core_type<tc>, window_params = [{transform_indices = @transform_0, window_bounds = array<i64: 2, 256, 512>}, {pipeline_mode = #tpu.pipeline_mode<synchronous>, transform_indices = @transform_1, window_bounds = array<i64: 256, 1024>}, {pipeline_mode = #tpu.pipeline_mode<synchronous>, transform_indices = @transform_2, window_bounds = array<i64: 1, 1024>}, {pipeline_mode = #tpu.pipeline_mode<synchronous>, transform_indices = @transform_3, window_bounds = array<i64: 1024, 256>}, {pipeline_mode = #tpu.pipeline_mode<synchronous>, transform_indices = @transform_4, window_bounds = array<i64: 1, 256>}, {pipeline_mode = #tpu.pipeline_mode<synchronous>, transform_indices = @transform_5, window_bounds = array<i64: 256, 2>}, {pipeline_mode = #tpu.pipeline_mode<synchronous>, transform_indices = @transform_6, window_bounds = array<i64: 1, 2>}, {transform_indices = @transform_7, window_bounds = array<i64: 2, 2>}]} {
    %c0_i32 = arith.constant 0 : i32
    %0 = arith.cmpi eq, %arg1, %c0_i32 : i32
    %1 = arith.extui %0 : i1 to i32
    %c0_i32_0 = arith.constant 0 : i32
    %2 = arith.cmpi ne, %1, %c0_i32_0 : i32
    scf.if %2 {
      %cst_8 = arith.constant 0.000000e+00 : f32
      %11 = vector.broadcast %cst_8 : f32 to vector<2x256xf32>
      %c0_9 = arith.constant 0 : index
      %c0_10 = arith.constant 0 : index
      %12 = vector.load %arg10[%c0_9, %c0_10] : memref<2x256xf32, #tpu.memory_space<vmem>>, vector<2x256xf32>
      tpu.vector_store %arg10[%c0_9, %c0_10], %11 {strides = array<i32>} : memref<2x256xf32, #tpu.memory_space<vmem>>, vector<2x256xf32>,
    } else {
    }
    %c0 = arith.constant 0 : index
    %c0_1 = arith.constant 0 : index
    %3 = vector.load %arg10[%c0, %c0_1] : memref<2x256xf32, #tpu.memory_space<vmem>>, vector<2x256xf32>
    %c0_2 = arith.constant 0 : index
    %c0_3 = arith.constant 0 : index
    %c0_4 = arith.constant 0 : index
    %4 = vector.load %arg2[%c0_2, %c0_3, %c0_4] : memref<2x256x512xf32, #tpu.memory_space<vmem>>, vector<2x256x512xf32>
    %cst = arith.constant dense<0.000000e+00> : vector<2x256xf32>
    %5 = vector.multi_reduction <add>, %4, %cst [2] : vector<2x256x512xf32> to vector<2x256xf32>
    %6 = arith.addf %3, %5 : vector<2x256xf32>
    %c0_5 = arith.constant 0 : index
    %c0_6 = arith.constant 0 : index
    %7 = vector.load %arg10[%c0_5, %c0_6] : memref<2x256xf32, #tpu.memory_space<vmem>>, vector<2x256xf32>
    tpu.vector_store %arg10[%c0_5, %c0_6], %6 {strides = array<i32>} : memref<2x256xf32, #tpu.memory_space<vmem>>, vector<2x256xf32>,
    %c1_i32 = arith.constant 1 : i32
    %8 = arith.cmpi eq, %arg1, %c1_i32 : i32
    %9 = arith.extui %8 : i1 to i32
    %c0_i32_7 = arith.constant 0 : i32
    %10 = arith.cmpi ne, %9, %c0_i32_7 : i32
    scf.if %10 {
      %c0_8 = arith.constant 0 : index
      %c0_9 = arith.constant 0 : index
      %11 = vector.load %arg10[%c0_8, %c0_9] : memref<2x256xf32, #tpu.memory_space<vmem>>, vector<2x256xf32>
      %c0_10 = arith.constant 0 : index
      %c0_11 = arith.constant 0 : index
      %12 = vector.load %arg3[%c0_10, %c0_11] : memref<256x1024xf32, #tpu.memory_space<vmem>>, vector<256x1024xf32>
      %cst_12 = arith.constant dense<0.000000e+00> : vector<2x1024xf32>
      %13 = tpu.matmul %11, %12, %cst_12 {dimension_numbers = #tpu.dot_dimension_numbers<[1], [0], [0], [1], [0, 0, 1, 1], [], []>} : vector<2x256xf32>, vector<256x1024xf32>, vector<2x1024xf32> -> vector<2x1024xf32>
      %c0_13 = arith.constant 0 : index
      %c0_14 = arith.constant 0 : index
      %14 = vector.load %arg4[%c0_13, %c0_14] : memref<1x1024xf32, #tpu.memory_space<vmem>>, vector<1x1024xf32>
      %15 = vector.broadcast %14 : vector<1x1024xf32> to vector<2x1024xf32>
      %16 = arith.addf %13, %15 : vector<2x1024xf32>
      %cst_15 = arith.constant 0.000000e+00 : f32
      %17 = vector.broadcast %cst_15 : f32 to vector<2x1024xf32>
      %18 = arith.maximumf %16, %17 : vector<2x1024xf32>
      %c0_16 = arith.constant 0 : index
      %c0_17 = arith.constant 0 : index
      %19 = vector.load %arg5[%c0_16, %c0_17] : memref<1024x256xf32, #tpu.memory_space<vmem>>, vector<1024x256xf32>
      %cst_18 = arith.constant dense<0.000000e+00> : vector<2x256xf32>
      %20 = tpu.matmul %18, %19, %cst_18 {dimension_numbers = #tpu.dot_dimension_numbers<[1], [0], [0], [1], [0, 0, 1, 1], [], []>} : vector<2x1024xf32>, vector<1024x256xf32>, vector<2x256xf32> -> vector<2x256xf32>
      %c0_19 = arith.constant 0 : index
      %c0_20 = arith.constant 0 : index
      %21 = vector.load %arg6[%c0_19, %c0_20] : memref<1x256xf32, #tpu.memory_space<vmem>>, vector<1x256xf32>
      %22 = vector.broadcast %21 : vector<1x256xf32> to vector<2x256xf32>
      %23 = arith.addf %20, %22 : vector<2x256xf32>
      %cst_21 = arith.constant 0.000000e+00 : f32
      %24 = vector.broadcast %cst_21 : f32 to vector<2x256xf32>
      %25 = arith.maximumf %23, %24 : vector<2x256xf32>
      %c0_22 = arith.constant 0 : index
      %c0_23 = arith.constant 0 : index
      %26 = vector.load %arg7[%c0_22, %c0_23] : memref<256x2xf32, #tpu.memory_space<vmem>>, vector<256x2xf32>
      %cst_24 = arith.constant dense<0.000000e+00> : vector<2x2xf32>
      %27 = tpu.matmul %25, %26, %cst_24 {dimension_numbers = #tpu.dot_dimension_numbers<[1], [0], [0], [1], [0, 0, 1, 1], [], []>} : vector<2x256xf32>, vector<256x2xf32>, vector<2x2xf32> -> vector<2x2xf32>
      %c0_25 = arith.constant 0 : index
      %c0_26 = arith.constant 0 : index
      %28 = vector.load %arg8[%c0_25, %c0_26] : memref<1x2xf32, #tpu.memory_space<vmem>>, vector<1x2xf32>
      %29 = vector.broadcast %28 : vector<1x2xf32> to vector<2x2xf32>
      %30 = arith.addf %27, %29 : vector<2x2xf32>
      %31 = tpu.iota {dimensions = array<i32: 1>} : vector<2x2xi32>
      %c0_i32_27 = arith.constant 0 : i32
      %32 = vector.broadcast %c0_i32_27 : i32 to vector<2x2xi32>
      %33 = arith.cmpi eq, %31, %32 : vector<2x2xi32>
      %34 = arith.negf %30 : vector<2x2xf32>
      %35 = math.exp %34 : vector<2x2xf32>
      %cst_28 = arith.constant 1.000000e+00 : f32
      %36 = vector.broadcast %cst_28 : f32 to vector<2x2xf32>
      %37 = arith.addf %36, %35 : vector<2x2xf32>
      %38 = arith.divf %36, %37 : vector<2x2xf32>
      %cst_29 = arith.constant 1.57079637 : f32
      %39 = vector.broadcast %cst_29 : f32 to vector<2x2xf32>
      %40 = arith.mulf %39, %38 : vector<2x2xf32>
      %41 = arith.select %33, %30, %40 : vector<2x2xi1>, vector<2x2xf32>
      %c0_30 = arith.constant 0 : index
      %c0_31 = arith.constant 0 : index
      %42 = vector.load %arg9[%c0_30, %c0_31] : memref<2x2xf32, #tpu.memory_space<vmem>>, vector<2x2xf32>
      tpu.vector_store %arg9[%c0_30, %c0_31], %41 {strides = array<i32>} : memref<2x2xf32, #tpu.memory_space<vmem>>, vector<2x2xf32>,
    } else {
    }
    return
  }
  func.func @transform_0(%arg0: i32, %arg1: i32) -> (i32, i32, i32) {
    %c0_i32 = arith.constant 0 : i32
    %c0_i32_0 = arith.constant 0 : i32
    return %arg0, %c0_i32, %arg1 : i32, i32, i32
  }
  func.func @transform_1(%arg0: i32, %arg1: i32) -> (i32, i32) {
    %c0_i32 = arith.constant 0 : i32
    %c0_i32_0 = arith.constant 0 : i32
    %c0_i32_1 = arith.constant 0 : i32
    return %c0_i32, %c0_i32_0 : i32, i32
  }
  func.func @transform_2(%arg0: i32, %arg1: i32) -> (i32, i32) {
    %c0_i32 = arith.constant 0 : i32
    %c0_i32_0 = arith.constant 0 : i32
    %c0_i32_1 = arith.constant 0 : i32
    return %c0_i32, %c0_i32_0 : i32, i32
  }
  func.func @transform_3(%arg0: i32, %arg1: i32) -> (i32, i32) {
    %c0_i32 = arith.constant 0 : i32
    %c0_i32_0 = arith.constant 0 : i32
    %c0_i32_1 = arith.constant 0 : i32
    return %c0_i32, %c0_i32_0 : i32, i32
  }
  func.func @transform_4(%arg0: i32, %arg1: i32) -> (i32, i32) {
    %c0_i32 = arith.constant 0 : i32
    %c0_i32_0 = arith.constant 0 : i32
    %c0_i32_1 = arith.constant 0 : i32
    return %c0_i32, %c0_i32_0 : i32, i32
  }
  func.func @transform_5(%arg0: i32, %arg1: i32) -> (i32, i32) {
    %c0_i32 = arith.constant 0 : i32
    %c0_i32_0 = arith.constant 0 : i32
    %c0_i32_1 = arith.constant 0 : i32
    return %c0_i32, %c0_i32_0 : i32, i32
  }
  func.func @transform_6(%arg0: i32, %arg1: i32) -> (i32, i32) {
    %c0_i32 = arith.constant 0 : i32
    %c0_i32_0 = arith.constant 0 : i32
    %c0_i32_1 = arith.constant 0 : i32
    return %c0_i32, %c0_i32_0 : i32, i32
  }
  func.func @transform_7(%arg0: i32, %arg1: i32) -> (i32, i32) {
    %c0_i32 = arith.constant 0 : i32
    %c0_i32_0 = arith.constant 0 : i32
    return %arg0, %c0_i32 : i32, i32
  }
}

</mosaic_0001>

<llo_original>
// kernel: tpu_custom_call.1
$region0: #{tpu_custom_call.1}
  #allocation0 [shape = 'u32[]', space=smem, size = 0x4, offset = 0x4, fixed_abs, tag = 'smem constant byte address 0x4 - core index']
  #allocation1 [shape = 'u32[72,128]{1,0:T(1,128)}', space=vmem, size = 0x9000, scoped, tag = 'internal scratch']
  #allocation2 [shape = 'f32[2,256]{1,0:T(2,128)}', space=vmem, size = 0x800, scoped, tag = 'scratch operand']
  %s0 = inlined_call_operand.hbm [shape: f32[2,256,1024], index: 0, kind: input, shape index: {}]
  %s1 = inlined_call_operand.hbm [shape: f32[256,1024], index: 1, kind: input, shape index: {}]
  %s2 = inlined_call_operand.hbm [shape: f32[1,1024], index: 2, kind: input, shape index: {}]
  %s3 = inlined_call_operand.hbm [shape: f32[1024,256], index: 3, kind: input, shape index: {}]
  %s4 = inlined_call_operand.hbm [shape: f32[1,256], index: 4, kind: input, shape index: {}]
  %s5 = inlined_call_operand.vmem [shape: f32[256,2], index: 5, kind: input, shape index: {}]
  %s6 = inlined_call_operand.hbm [shape: f32[1,2], index: 6, kind: input, shape index: {}]
  %s7 = inlined_call_operand.hbm [shape: f32[2,2], index: 7, kind: output, shape index: {}]
  %s8 = sld [smem:[#allocation0]]
  $region93: #{tpu_custom_call.1} parent=0
    _
  %s10 = ssub.s32 1, %s8
  %s11 = scalar_select 0, %s10, %s8
  $region1: #{tpu_custom_call.1} parent=0
    #allocation3 [shape = 'u8[2097152]{0}', space=vmem, size = 0x200000, scoped, tag = 'input window, operand 0']
    #allocation4 [shape = 's32[2]{0}', space=sflag, size = 0x8, scoped, tag = 'scoped memory for tpu_custom_call.1']
    #allocation5 [shape = 's32[2]{0}', space=sflag, size = 0x8, scoped, tag = 'scoped memory for tpu_custom_call.1']
    #allocation6 [shape = 'u8[1048576]{0}', space=vmem, size = 0x100000, scoped, tag = 'input window, operand 1, single buffered']
    #allocation7 [shape = 's32[1]{0}', space=sflag, size = 0x4, scoped, tag = 'scoped memory for tpu_custom_call.1']
    #allocation8 [shape = 'u8[4096]{0}', space=vmem, size = 0x1000, scoped, tag = 'input window, operand 2, single buffered']
    #allocation9 [shape = 'u8[1048576]{0}', space=vmem, size = 0x100000, scoped, tag = 'input window, operand 3, single buffered']
    #allocation10 [shape = 's32[1]{0}', space=sflag, size = 0x4, scoped, tag = 'scoped memory for tpu_custom_call.1']
    #allocation11 [shape = 'u8[1024]{0}', space=vmem, size = 0x400, scoped, tag = 'input window, operand 4, single buffered']
    #allocation12 [shape = 'u8[512]{0}', space=vmem, size = 0x400, scoped, tag = 'input window, operand 6, single buffered']
    #allocation13 [shape = 's32[1]{0}', space=sflag, size = 0x4, scoped, tag = 'scoped memory for tpu_custom_call.1']
    #allocation14 [shape = 'u8[1024]{0}', space=vmem, size = 0x400, scoped, tag = 'output window, operand 0, single buffered']
    %12 = vsyncpa [#allocation4], 0
    %s13 = scalar_lea.sflag [#allocation4], 1
    %14 = vsyncpa %s13, 0
    %15 = vsyncpa [#allocation7], 0
    %16 = vsyncpa [#allocation10], 0
    %17 = vsyncpa [#allocation13], 0
    %18 = vsyncpa [#allocation5], 0
    loop: start=0, step=1, limit=4
    $region2: #{tpu_custom_call.1} parent=1 // loop_pre_header
      _
    $region3: #{tpu_custom_call.1} parent=1 // loop_header
      %s20 = sphi 0, %s24
      %p21 = scmp.ge.s32.totalorder %s20, 4
      %s27 = sphi 0, %s39
      %s28 = sphi 0, %s35
      %s29 = sphi 0, %s27
      %s30 = sphi 0, %s28
      %s31 = sphi 0, %s29
      %s32 = sphi 0, %s30
      %s44 = sphi 0, %s46
      %s47 = sphi 0, %s44
      %s48 = sphi 0, %s47
      %s64 = sphi 0, %s48
      %s68 = sphi 0, %s68
      %s70 = sphi 0, %s68
      %s71 = sphi 0, %s70
      %s85 = sphi 0, %s71
      %s89 = sphi 0, %s89
      %s91 = sphi 0, %s89
      %s92 = sphi 0, %s91
      %s106 = sphi 0, %s92
      %s110 = sphi 0, %s110
      %s112 = sphi 0, %s110
      %s113 = sphi 0, %s112
      %s127 = sphi 0, %s113
      %s131 = sphi 0, %s131
      %s133 = sphi 0, %s131
      %s134 = sphi 0, %s133
      %s148 = sphi 0, %s134
      %s152 = sphi 0, %s152
      %s154 = sphi 0, %s152
      %s155 = sphi 0, %s154
      %s169 = sphi 0, %s155
      %s173 = sphi 0, %s173
      %s175 = sphi 0, %s173
      %s176 = sphi 0, %s175
      %s190 = sphi 0, %s176
      %s196 = sphi 0, %s198
      %s199 = sphi 0, %s196
      %s200 = sphi 0, %s199
      %s216 = sphi 0, %s200
    $region4: #{tpu_custom_call.1} parent=1 // loop_header_branch
      %23 = sbr.rel (%p21) target = $region8
    $region5: #{tpu_custom_call.1} parent=1 // loop_body
      %s25 = ssub.s32 %s20, 1
      %s26 = ssub.s32 %s20, 2
      %s33 = sadd.s32 1, %s28
      %p34 = scmp.ge.s32.totalorder %s33, 2
      %s35 = scalar_select %p34, 0, %s33
      %s36 = sadd.s32 1, %s27
      %s37 = scalar_select %p34, %s36, %s27
      %p38 = scmp.ge.s32.totalorder %s37, 1
      %s39 = scalar_select %p38, 0, %s37
      %s40 = ssub.s32 %s27, %s39
      %s41 = ssub.s32 %s28, %s35
      %s42 = sor.u32 %s40, %s41
      %p43 = scmp.eq.s32.totalorder %s42, 0
      %s45 = sadd.s32 %s44, 1
      %s46 = scalar_select %p43, %s44, %s45
      %p49 = pneg %p43
      %p50 = scmp.eq.s32.totalorder %s20, 1
      %p51 = por %p49, %p50
      %p52 = scmp.ne.s32.totalorder %s44, %s47
      %p53 = scmp.eq.s32.totalorder %s20, 0
      %p54 = por %p52, %p53
      %p55 = scmp.ne.s32.totalorder %s44, %s47
      %p56 = scmp.eq.s32.totalorder %s25, 1
      %p57 = por %p55, %p56
      %p58 = scmp.ne.s32.totalorder %s47, %s48
      %p59 = scmp.eq.s32.totalorder %s25, 0
      %p60 = por %p58, %p59
      %p61 = scmp.ne.s32.totalorder %s47, %s48
      %p62 = scmp.eq.s32.totalorder %s26, 1
      %p63 = por %p61, %p62
      %p65 = scmp.ne.s32.totalorder %s48, %s64
      %p66 = scmp.eq.s32.totalorder %s26, 0
      %p67 = por %p65, %p66
      %s69 = sadd.s32 %s68, 1
      %p72 = scmp.eq.s32.totalorder %s20, 1
      %p73 = scmp.ne.s32.totalorder %s68, %s70
      %p74 = scmp.eq.s32.totalorder %s20, 0
      %p75 = por %p73, %p74
      %p76 = scmp.ne.s32.totalorder %s68, %s70
      %p77 = scmp.eq.s32.totalorder %s25, 1
      %p78 = por %p76, %p77
      %p79 = scmp.ne.s32.totalorder %s70, %s71
      %p80 = scmp.eq.s32.totalorder %s25, 0
      %p81 = por %p79, %p80
      %p82 = scmp.ne.s32.totalorder %s70, %s71
      %p83 = scmp.eq.s32.totalorder %s26, 1
      %p84 = por %p82, %p83
      %p86 = scmp.ne.s32.totalorder %s71, %s85
      %p87 = scmp.eq.s32.totalorder %s26, 0
      %p88 = por %p86, %p87
      %s90 = sadd.s32 %s89, 1
      %p93 = scmp.eq.s32.totalorder %s20, 1
      %p94 = scmp.ne.s32.totalorder %s89, %s91
      %p95 = scmp.eq.s32.totalorder %s20, 0
      %p96 = por %p94, %p95
      %p97 = scmp.ne.s32.totalorder %s89, %s91
      %p98 = scmp.eq.s32.totalorder %s25, 1
      %p99 = por %p97, %p98
      %p100 = scmp.ne.s32.totalorder %s91, %s92
      %p101 = scmp.eq.s32.totalorder %s25, 0
      %p102 = por %p100, %p101
      %p103 = scmp.ne.s32.totalorder %s91, %s92
      %p104 = scmp.eq.s32.totalorder %s26, 1
      %p105 = por %p103, %p104
      %p107 = scmp.ne.s32.totalorder %s92, %s106
      %p108 = scmp.eq.s32.totalorder %s26, 0
      %p109 = por %p107, %p108
      %s111 = sadd.s32 %s110, 1
      %p114 = scmp.eq.s32.totalorder %s20, 1
      %p115 = scmp.ne.s32.totalorder %s110, %s112
      %p116 = scmp.eq.s32.totalorder %s20, 0
      %p117 = por %p115, %p116
      %p118 = scmp.ne.s32.totalorder %s110, %s112
      %p119 = scmp.eq.s32.totalorder %s25, 1
      %p120 = por %p118, %p119
      %p121 = scmp.ne.s32.totalorder %s112, %s113
      %p122 = scmp.eq.s32.totalorder %s25, 0
      %p123 = por %p121, %p122
      %p124 = scmp.ne.s32.totalorder %s112, %s113
      %p125 = scmp.eq.s32.totalorder %s26, 1
      %p126 = por %p124, %p125
      %p128 = scmp.ne.s32.totalorder %s113, %s127
      %p129 = scmp.eq.s32.totalorder %s26, 0
      %p130 = por %p128, %p129
      %s132 = sadd.s32 %s131, 1
      %p135 = scmp.eq.s32.totalorder %s20, 1
      %p136 = scmp.ne.s32.totalorder %s131, %s133
      %p137 = scmp.eq.s32.totalorder %s20, 0
      %p138 = por %p136, %p137
      %p139 = scmp.ne.s32.totalorder %s131, %s133
      %p140 = scmp.eq.s32.totalorder %s25, 1
      %p141 = por %p139, %p140
      %p142 = scmp.ne.s32.totalorder %s133, %s134
      %p143 = scmp.eq.s32.totalorder %s25, 0
      %p144 = por %p142, %p143
      %p145 = scmp.ne.s32.totalorder %s133, %s134
      %p146 = scmp.eq.s32.totalorder %s26, 1
      %p147 = por %p145, %p146
      %p149 = scmp.ne.s32.totalorder %s134, %s148
      %p150 = scmp.eq.s32.totalorder %s26, 0
      %p151 = por %p149, %p150
      %s153 = sadd.s32 %s152, 1
      %p156 = scmp.eq.s32.totalorder %s20, 1
      %p157 = scmp.ne.s32.totalorder %s152, %s154
      %p158 = scmp.eq.s32.totalorder %s20, 0
      %p159 = por %p157, %p158
      %p160 = scmp.ne.s32.totalorder %s152, %s154
      %p161 = scmp.eq.s32.totalorder %s25, 1
      %p162 = por %p160, %p161
      %p163 = scmp.ne.s32.totalorder %s154, %s155
      %p164 = scmp.eq.s32.totalorder %s25, 0
      %p165 = por %p163, %p164
      %p166 = scmp.ne.s32.totalorder %s154, %s155
      %p167 = scmp.eq.s32.totalorder %s26, 1
      %p168 = por %p166, %p167
      %p170 = scmp.ne.s32.totalorder %s155, %s169
      %p171 = scmp.eq.s32.totalorder %s26, 0
      %p172 = por %p170, %p171
      %s174 = sadd.s32 %s173, 1
      %p177 = scmp.eq.s32.totalorder %s20, 1
      %p178 = scmp.ne.s32.totalorder %s173, %s175
      %p179 = scmp.eq.s32.totalorder %s20, 0
      %p180 = por %p178, %p179
      %p181 = scmp.ne.s32.totalorder %s173, %s175
      %p182 = scmp.eq.s32.totalorder %s25, 1
      %p183 = por %p181, %p182
      %p184 = scmp.ne.s32.totalorder %s175, %s176
      %p185 = scmp.eq.s32.totalorder %s25, 0
      %p186 = por %p184, %p185
      %p187 = scmp.ne.s32.totalorder %s175, %s176
      %p188 = scmp.eq.s32.totalorder %s26, 1
      %p189 = por %p187, %p188
      %p191 = scmp.ne.s32.totalorder %s176, %s190
      %p192 = scmp.eq.s32.totalorder %s26, 0
      %p193 = por %p191, %p192
      %s194 = ssub.s32 %s27, %s39
      %p195 = scmp.eq.s32.totalorder %s194, 0
      %s197 = sadd.s32 %s196, 1
      %s198 = scalar_select %p195, %s196, %s197
      %p201 = pneg %p195
      %p202 = scmp.eq.s32.totalorder %s20, 1
      %p203 = por %p201, %p202
      %p204 = scmp.ne.s32.totalorder %s196, %s199
      %p205 = scmp.eq.s32.totalorder %s20, 0
      %p206 = por %p204, %p205
      %p207 = scmp.ne.s32.totalorder %s196, %s199
      %p208 = scmp.eq.s32.totalorder %s25, 1
      %p209 = por %p207, %p208
      %p210 = scmp.ne.s32.totalorder %s199, %s200
      %p211 = scmp.eq.s32.totalorder %s25, 0
      %p212 = por %p210, %p211
      %p213 = scmp.ne.s32.totalorder %s199, %s200
      %p214 = scmp.eq.s32.totalorder %s26, 1
      %p215 = por %p213, %p214
      %p217 = scmp.ne.s32.totalorder %s200, %s216
      %p218 = scmp.eq.s32.totalorder %s26, 0
      %p219 = por %p217, %p218
      %p220 = scmp.le.s32.totalorder 1, %s20
      %p221 = scmp.lt.s32.totalorder %s20, 3
      %p222 = pnand %p220, %p221
      %p223 = pneg %p222
      // Predicated region
      $region9: #{tpu_custom_call.1} parent=5 // pred_check
        _
      $region10: #{tpu_custom_call.1} parent=5 // pred_check_branch
        %225 = sbr.rel (%p222) target = $region12
      $region11: #{tpu_custom_call.1} parent=5 // pred_region
        %s226 = ssub.s32 %s20, 1
        // Predicated region
        $region13: #{tpu_custom_call.1} parent=11 // pred_check
          %p227 = pneg %p81
        $region14: #{tpu_custom_call.1} parent=11 // pred_check_branch
          %229 = sbr.rel (%p227) target = $region16
        $region15: #{tpu_custom_call.1} parent=11 // pred_region
          %231 = vsyncadd [#allocation7], 0
          %s232 = sshll.u32 %s1, 4
          %s233 = int_to_ptr.hbm [resolvable:$true] %s232
          %s234 = sshll.u32 [#allocation6], 4
          %s235 = int_to_ptr.vmem [resolvable:$true] %s234
          %240 = dma.hbm_to_vmem [thread:$0]  %s233, 32768, %s235, [#allocation7], 1024, 1024, 64
        $region16: #{tpu_custom_call.1} parent=11 // pred_fallthru
          _
        // Predicated region
        $region17: #{tpu_custom_call.1} parent=11 // pred_check
          %p241 = pneg %p102
        $region18: #{tpu_custom_call.1} parent=11 // pred_check_branch
          %243 = sbr.rel (%p241) target = $region20
        $region19: #{tpu_custom_call.1} parent=11 // pred_region
          %245 = vsyncadd [#allocation7], 0
          %s247 = sshll.u32 %s2, 4
          %s248 = int_to_ptr.hbm [resolvable:$true] %s247
          %s249 = sshll.u32 [#allocation8], 4
          %s250 = int_to_ptr.vmem [resolvable:$true] %s249
          %252 = dma.hbm_to_vmem [thread:$0]  %s248, 128, %s250, [#allocation7]
        $region20: #{tpu_custom_call.1} parent=11 // pred_fallthru
          _
        // Predicated region
        $region21: #{tpu_custom_call.1} parent=11 // pred_check
          %p253 = pneg %p123
        $region22: #{tpu_custom_call.1} parent=11 // pred_check_branch
          %255 = sbr.rel (%p253) target = $region24
        $region23: #{tpu_custom_call.1} parent=11 // pred_region
          %257 = vsyncadd [#allocation10], 0
          %s258 = sshll.u32 %s3, 4
          %s259 = int_to_ptr.hbm [resolvable:$true] %s258
          %s260 = sshll.u32 [#allocation9], 4
          %s261 = int_to_ptr.vmem [resolvable:$true] %s260
          %266 = dma.hbm_to_vmem [thread:$0]  %s259, 32768, %s261, [#allocation10], 256, 256, 16
        $region24: #{tpu_custom_call.1} parent=11 // pred_fallthru
          _
        // Predicated region
        $region25: #{tpu_custom_call.1} parent=11 // pred_check
          %p267 = pneg %p144
        $region26: #{tpu_custom_call.1} parent=11 // pred_check_branch
          %269 = sbr.rel (%p267) target = $region28
        $region27: #{tpu_custom_call.1} parent=11 // pred_region
          %271 = vsyncadd [#allocation10], 0
          %s273 = sshll.u32 %s4, 4
          %s274 = int_to_ptr.hbm [resolvable:$true] %s273
          %s275 = sshll.u32 [#allocation11], 4
          %s276 = int_to_ptr.vmem [resolvable:$true] %s275
          %278 = dma.hbm_to_vmem [thread:$0]  %s274, 32, %s276, [#allocation10]
        $region28: #{tpu_custom_call.1} parent=11 // pred_fallthru
          _
        // Predicated region
        $region29: #{tpu_custom_call.1} parent=11 // pred_check
          %p279 = pneg %p165
        $region30: #{tpu_custom_call.1} parent=11 // pred_check_branch
          %281 = sbr.rel (%p279) target = $region32
        $region31: #{tpu_custom_call.1} parent=11 // pred_region
          _
        $region32: #{tpu_custom_call.1} parent=11 // pred_fallthru
          _
        // Predicated region
        $region33: #{tpu_custom_call.1} parent=11 // pred_check
          %p282 = pneg %p186
        $region34: #{tpu_custom_call.1} parent=11 // pred_check_branch
          %284 = sbr.rel (%p282) target = $region36
        $region35: #{tpu_custom_call.1} parent=11 // pred_region
          %286 = vsyncadd [#allocation13], 0
          %s288 = sshll.u32 %s6, 4
          %s289 = int_to_ptr.hbm [resolvable:$true] %s288
          %s290 = sshll.u32 [#allocation12], 4
          %s291 = int_to_ptr.vmem [resolvable:$true] %s290
          %293 = dma.hbm_to_vmem [thread:$0]  %s289, 16, %s291, [#allocation13]
        $region36: #{tpu_custom_call.1} parent=11 // pred_fallthru
          _
      $region12: #{tpu_custom_call.1} parent=5 // pred_fallthru
        _
      %p294 = scmp.lt.s32.totalorder %s20, 2
      // Predicated region
      $region37: #{tpu_custom_call.1} parent=5 // pred_check
        %p295 = pneg %p294
      $region38: #{tpu_custom_call.1} parent=5 // pred_check_branch
        %297 = sbr.rel (%p295) target = $region40
      $region39: #{tpu_custom_call.1} parent=5 // pred_region
        // Predicated region
        $region41: #{tpu_custom_call.1} parent=39 // pred_check
          %p298 = pneg %p54
        $region42: #{tpu_custom_call.1} parent=39 // pred_check_branch
          %300 = sbr.rel (%p298) target = $region44
        $region43: #{tpu_custom_call.1} parent=39 // pred_region
          %s301 = sand.u32 %s44, 1
          %s302 = scalar_lea.sflag [#allocation4], %s301
          %s303 = sand.u32 %s44, 1
          %s304 = smul.addr %s303, 2048
          %s305 = scalar_lea.vmem [#allocation3], %s304
          %s306 = smul.u32 2, %s27
          %s307 = smul.u32 4, %s28
          %309 = vsyncadd %s302, 0
          %s310 = smul.addr %s306, 256
          %s311 = sadd.s32 %s307, %s310
          %s312 = smul.addr %s311, 8
          %s313 = scalar_lea.hbm %s0, %s312
          %s314 = sshll.u32 %s313, 4
          %s315 = int_to_ptr.hbm [resolvable:$true] %s314
          %s316 = sshll.u32 %s305, 4
          %s317 = int_to_ptr.vmem [resolvable:$true] %s316
          %322 = dma.hbm_to_vmem [thread:$0]  %s315, 32768, %s317, %s302, 1024, 512, 32
        $region44: #{tpu_custom_call.1} parent=39 // pred_fallthru
          _
      $region40: #{tpu_custom_call.1} parent=5 // pred_fallthru
        _
      %p323 = scmp.le.s32.totalorder 1, %s20
      %p324 = scmp.lt.s32.totalorder %s20, 3
      %p325 = pnand %p323, %p324
      %p326 = pneg %p325
      // Predicated region
      $region45: #{tpu_custom_call.1} parent=5 // pred_check
        _
      $region46: #{tpu_custom_call.1} parent=5 // pred_check_branch
        %328 = sbr.rel (%p325) target = $region48
      $region47: #{tpu_custom_call.1} parent=5 // pred_region
        %s329 = ssub.s32 %s20, 1
        %s330 = sand.u32 %s47, 1
        %s331 = scalar_lea.sflag [#allocation4], %s330
        %s332 = sand.u32 %s47, 1
        %s333 = smul.addr %s332, 2048
        %s334 = scalar_lea.vmem [#allocation3], %s333
        // Predicated region
        $region49: #{tpu_custom_call.1} parent=47 // pred_check
          %p335 = pneg %p60
        $region50: #{tpu_custom_call.1} parent=47 // pred_check_branch
          %337 = sbr.rel (%p335) target = $region52
        $region51: #{tpu_custom_call.1} parent=47 // pred_region
          %339 = dma.done %s331, 32768
        $region52: #{tpu_custom_call.1} parent=47 // pred_fallthru
          _
        // Predicated region
        $region53: #{tpu_custom_call.1} parent=47 // pred_check
          %p340 = pneg %p81
        $region54: #{tpu_custom_call.1} parent=47 // pred_check_branch
          %342 = sbr.rel (%p340) target = $region56
        $region55: #{tpu_custom_call.1} parent=47 // pred_region
          %344 = dma.done [#allocation7], 32768
        $region56: #{tpu_custom_call.1} parent=47 // pred_fallthru
          _
        // Predicated region
        $region57: #{tpu_custom_call.1} parent=47 // pred_check
          %p345 = pneg %p102
        $region58: #{tpu_custom_call.1} parent=47 // pred_check_branch
          %347 = sbr.rel (%p345) target = $region60
        $region59: #{tpu_custom_call.1} parent=47 // pred_region
          %349 = dma.done [#allocation7], 128
        $region60: #{tpu_custom_call.1} parent=47 // pred_fallthru
          _
        // Predicated region
        $region61: #{tpu_custom_call.1} parent=47 // pred_check
          %p350 = pneg %p123
        $region62: #{tpu_custom_call.1} parent=47 // pred_check_branch
          %352 = sbr.rel (%p350) target = $region64
        $region63: #{tpu_custom_call.1} parent=47 // pred_region
          %354 = dma.done [#allocation10], 32768
        $region64: #{tpu_custom_call.1} parent=47 // pred_fallthru
          _
        // Predicated region
        $region65: #{tpu_custom_call.1} parent=47 // pred_check
          %p355 = pneg %p144
        $region66: #{tpu_custom_call.1} parent=47 // pred_check_branch
          %357 = sbr.rel (%p355) target = $region68
        $region67: #{tpu_custom_call.1} parent=47 // pred_region
          %359 = dma.done [#allocation10], 32
        $region68: #{tpu_custom_call.1} parent=47 // pred_fallthru
          _
        // Predicated region
        $region69: #{tpu_custom_call.1} parent=47 // pred_check
          %p360 = pneg %p186
        $region70: #{tpu_custom_call.1} parent=47 // pred_check_branch
          %362 = sbr.rel (%p360) target = $region72
        $region71: #{tpu_custom_call.1} parent=47 // pred_region
          %364 = dma.done [#allocation13], 16
        $region72: #{tpu_custom_call.1} parent=47 // pred_fallthru
          _
        %s365 = sand.u32 %s47, 1
        %s366 = scalar_lea.sflag [#allocation4], %s365
        %s367 = sand.u32 %s47, 1
        %s368 = smul.addr %s367, 2048
        %s369 = scalar_lea.vmem [#allocation3], %s368
        %p370 = pneg %p60
        %p371 = pneg %p57
        %p372 = pneg %p81
        %p373 = pneg %p78
        %p374 = pneg %p102
        %p375 = pneg %p99
        %p376 = pneg %p123
        %p377 = pneg %p120
        %p378 = pneg %p144
        %p379 = pneg %p141
        %p380 = pneg %p165
        %p381 = pneg %p162
        %p382 = pneg %p186
        %p383 = pneg %p183
        %p384 = pneg %p212
        %p385 = pneg %p209
        %s386 = smul.u32 2, %s29
        %s387 = smul.u32 4, %s30
        %p388 = scmp.eq.s32.totalorder %s30, 0
        // Predicated region
        $region73: #{tpu_custom_call.1} parent=47 // pred_check
          %p389 = pneg %p388
        $region74: #{tpu_custom_call.1} parent=47 // pred_check_branch
          %391 = sbr.rel (%p389) target = $region76
        $region75: #{tpu_custom_call.1} parent=47 // pred_region
          %392 = vst [vmem:[#allocation2] sm:$0xf] 0.0
        $region76: #{tpu_custom_call.1} parent=47 // pred_fallthru
          _
        %v393 = vld [vmem:[#allocation2] sm:$0xf]
        %v394 = vld [vmem:[%s334] sm:$0xff]
        %v395 = vld [vmem:[%s334 + $0x8] sm:$0xff]
        %v396 = vld [vmem:[%s334 + $0x10] sm:$0xff]
        %v397 = vld [vmem:[%s334 + $0x18] sm:$0xff]
        %v398 = vld [vmem:[%s334 + $0x20] sm:$0xff]
        %v399 = vld [vmem:[%s334 + $0x28] sm:$0xff]
        %v400 = vld [vmem:[%s334 + $0x30] sm:$0xff]
        %v401 = vld [vmem:[%s334 + $0x38] sm:$0xff]
        %v402 = vld [vmem:[%s334 + $0x40] sm:$0xff]
        %v403 = vld [vmem:[%s334 + $0x48] sm:$0xff]
        %v404 = vld [vmem:[%s334 + $0x50] sm:$0xff]
        %v405 = vld [vmem:[%s334 + $0x58] sm:$0xff]
        %v406 = vld [vmem:[%s334 + $0x60] sm:$0xff]
        %v407 = vld [vmem:[%s334 + $0x68] sm:$0xff]
        %v408 = vld [vmem:[%s334 + $0x70] sm:$0xff]
        %v409 = vld [vmem:[%s334 + $0x78] sm:$0xff]
        %v410 = vld [vmem:[%s334 + $0x80] sm:$0xff]
        %v411 = vld [vmem:[%s334 + $0x88] sm:$0xff]
        %v412 = vld [vmem:[%s334 + $0x90] sm:$0xff]
        %v413 = vld [vmem:[%s334 + $0x98] sm:$0xff]
        %v414 = vld [vmem:[%s334 + $0xa0] sm:$0xff]
        %v415 = vld [vmem:[%s334 + $0xa8] sm:$0xff]
        %v416 = vld [vmem:[%s334 + $0xb0] sm:$0xff]
        %v417 = vld [vmem:[%s334 + $0xb8] sm:$0xff]
        %v418 = vld [vmem:[%s334 + $0xc0] sm:$0xff]
        %v419 = vld [vmem:[%s334 + $0xc8] sm:$0xff]
        %v420 = vld [vmem:[%s334 + $0xd0] sm:$0xff]
        %v421 = vld [vmem:[%s334 + $0xd8] sm:$0xff]
        %v422 = vld [vmem:[%s334 + $0xe0] sm:$0xff]
        %v423 = vld [vmem:[%s334 + $0xe8] sm:$0xff]
        %v424 = vld [vmem:[%s334 + $0xf0] sm:$0xff]
        %v425 = vld [vmem:[%s334 + $0xf8] sm:$0xff]
        %v426 = vld [vmem:[%s334 + $0x100] sm:$0xff]
        %v427 = vld [vmem:[%s334 + $0x108] sm:$0xff]
        %v428 = vld [vmem:[%s334 + $0x110] sm:$0xff]
        %v429 = vld [vmem:[%s334 + $0x118] sm:$0xff]
        %v430 = vld [vmem:[%s334 + $0x120] sm:$0xff]
        %v431 = vld [vmem:[%s334 + $0x128] sm:$0xff]
        %v432 = vld [vmem:[%s334 + $0x130] sm:$0xff]
        %v433 = vld [vmem:[%s334 + $0x138] sm:$0xff]
        %v434 = vld [vmem:[%s334 + $0x140] sm:$0xff]
        %v435 = vld [vmem:[%s334 + $0x148] sm:$0xff]
        %v436 = vld [vmem:[%s334 + $0x150] sm:$0xff]
        %v437 = vld [vmem:[%s334 + $0x158] sm:$0xff]
        %v438 = vld [vmem:[%s334 + $0x160] sm:$0xff]
        %v439 = vld [vmem:[%s334 + $0x168] sm:$0xff]
        %v440 = vld [vmem:[%s334 + $0x170] sm:$0xff]
        %v441 = vld [vmem:[%s334 + $0x178] sm:$0xff]
        %v442 = vld [vmem:[%s334 + $0x180] sm:$0xff]
        %v443 = vld [vmem:[%s334 + $0x188] sm:$0xff]
        %v444 = vld [vmem:[%s334 + $0x190] sm:$0xff]
        %v445 = vld [vmem:[%s334 + $0x198] sm:$0xff]
        %v446 = vld [vmem:[%s334 + $0x1a0] sm:$0xff]
        %v447 = vld [vmem:[%s334 + $0x1a8] sm:$0xff]
        %v448 = vld [vmem:[%s334 + $0x1b0] sm:$0xff]
        %v449 = vld [vmem:[%s334 + $0x1b8] sm:$0xff]
        %v450 = vld [vmem:[%s334 + $0x1c0] sm:$0xff]
        %v451 = vld [vmem:[%s334 + $0x1c8] sm:$0xff]
        %v452 = vld [vmem:[%s334 + $0x1d0] sm:$0xff]
        %v453 = vld [vmem:[%s334 + $0x1d8] sm:$0xff]
        %v454 = vld [vmem:[%s334 + $0x1e0] sm:$0xff]
        %v455 = vld [vmem:[%s334 + $0x1e8] sm:$0xff]
        %v456 = vld [vmem:[%s334 + $0x1f0] sm:$0xff]
        %v457 = vld [vmem:[%s334 + $0x1f8] sm:$0xff]
        %v458 = vld [vmem:[%s334 + $0x200] sm:$0xff]
        %v459 = vld [vmem:[%s334 + $0x208] sm:$0xff]
        %v460 = vld [vmem:[%s334 + $0x210] sm:$0xff]
        %v461 = vld [vmem:[%s334 + $0x218] sm:$0xff]
        %v462 = vld [vmem:[%s334 + $0x220] sm:$0xff]
        %v463 = vld [vmem:[%s334 + $0x228] sm:$0xff]
        %v464 = vld [vmem:[%s334 + $0x230] sm:$0xff]
        %v465 = vld [vmem:[%s334 + $0x238] sm:$0xff]
        %v466 = vld [vmem:[%s334 + $0x240] sm:$0xff]
        %v467 = vld [vmem:[%s334 + $0x248] sm:$0xff]
        %v468 = vld [vmem:[%s334 + $0x250] sm:$0xff]
        %v469 = vld [vmem:[%s334 + $0x258] sm:$0xff]
        %v470 = vld [vmem:[%s334 + $0x260] sm:$0xff]
        %v471 = vld [vmem:[%s334 + $0x268] sm:$0xff]
        %v472 = vld [vmem:[%s334 + $0x270] sm:$0xff]
        %v473 = vld [vmem:[%s334 + $0x278] sm:$0xff]
        %v474 = vld [vmem:[%s334 + $0x280] sm:$0xff]
        %v475 = vld [vmem:[%s334 + $0x288] sm:$0xff]
        %v476 = vld [vmem:[%s334 + $0x290] sm:$0xff]
        %v477 = vld [vmem:[%s334 + $0x298] sm:$0xff]
        %v478 = vld [vmem:[%s334 + $0x2a0] sm:$0xff]
        %v479 = vld [vmem:[%s334 + $0x2a8] sm:$0xff]
        %v480 = vld [vmem:[%s334 + $0x2b0] sm:$0xff]
        %v481 = vld [vmem:[%s334 + $0x2b8] sm:$0xff]
        %v482 = vld [vmem:[%s334 + $0x2c0] sm:$0xff]
        %v483 = vld [vmem:[%s334 + $0x2c8] sm:$0xff]
        %v484 = vld [vmem:[%s334 + $0x2d0] sm:$0xff]
        %v485 = vld [vmem:[%s334 + $0x2d8] sm:$0xff]
        %v486 = vld [vmem:[%s334 + $0x2e0] sm:$0xff]
        %v487 = vld [vmem:[%s334 + $0x2e8] sm:$0xff]
        %v488 = vld [vmem:[%s334 + $0x2f0] sm:$0xff]
        %v489 = vld [vmem:[%s334 + $0x2f8] sm:$0xff]
        %v490 = vld [vmem:[%s334 + $0x300] sm:$0xff]
        %v491 = vld [vmem:[%s334 + $0x308] sm:$0xff]
        %v492 = vld [vmem:[%s334 + $0x310] sm:$0xff]
        %v493 = vld [vmem:[%s334 + $0x318] sm:$0xff]
        %v494 = vld [vmem:[%s334 + $0x320] sm:$0xff]
        %v495 = vld [vmem:[%s334 + $0x328] sm:$0xff]
        %v496 = vld [vmem:[%s334 + $0x330] sm:$0xff]
        %v497 = vld [vmem:[%s334 + $0x338] sm:$0xff]
        %v498 = vld [vmem:[%s334 + $0x340] sm:$0xff]
        %v499 = vld [vmem:[%s334 + $0x348] sm:$0xff]
        %v500 = vld [vmem:[%s334 + $0x350] sm:$0xff]
        %v501 = vld [vmem:[%s334 + $0x358] sm:$0xff]
        %v502 = vld [vmem:[%s334 + $0x360] sm:$0xff]
        %v503 = vld [vmem:[%s334 + $0x368] sm:$0xff]
        %v504 = vld [vmem:[%s334 + $0x370] sm:$0xff]
        %v505 = vld [vmem:[%s334 + $0x378] sm:$0xff]
        %v506 = vld [vmem:[%s334 + $0x380] sm:$0xff]
        %v507 = vld [vmem:[%s334 + $0x388] sm:$0xff]
        %v508 = vld [vmem:[%s334 + $0x390] sm:$0xff]
        %v509 = vld [vmem:[%s334 + $0x398] sm:$0xff]
        %v510 = vld [vmem:[%s334 + $0x3a0] sm:$0xff]
        %v511 = vld [vmem:[%s334 + $0x3a8] sm:$0xff]
        %v512 = vld [vmem:[%s334 + $0x3b0] sm:$0xff]
        %v513 = vld [vmem:[%s334 + $0x3b8] sm:$0xff]
        %v514 = vld [vmem:[%s334 + $0x3c0] sm:$0xff]
        %v515 = vld [vmem:[%s334 + $0x3c8] sm:$0xff]
        %v516 = vld [vmem:[%s334 + $0x3d0] sm:$0xff]
        %v517 = vld [vmem:[%s334 + $0x3d8] sm:$0xff]
        %v518 = vld [vmem:[%s334 + $0x3e0] sm:$0xff]
        %v519 = vld [vmem:[%s334 + $0x3e8] sm:$0xff]
        %v520 = vld [vmem:[%s334 + $0x3f0] sm:$0xff]
        %v521 = vld [vmem:[%s334 + $0x3f8] sm:$0xff]
        %v522 = vld [vmem:[%s334 + $0x400] sm:$0xff]
        %v523 = vld [vmem:[%s334 + $0x408] sm:$0xff]
        %v524 = vld [vmem:[%s334 + $0x410] sm:$0xff]
        %v525 = vld [vmem:[%s334 + $0x418] sm:$0xff]
        %v526 = vld [vmem:[%s334 + $0x420] sm:$0xff]
        %v527 = vld [vmem:[%s334 + $0x428] sm:$0xff]
        %v528 = vld [vmem:[%s334 + $0x430] sm:$0xff]
        %v529 = vld [vmem:[%s334 + $0x438] sm:$0xff]
        %v530 = vld [vmem:[%s334 + $0x440] sm:$0xff]
        %v531 = vld [vmem:[%s334 + $0x448] sm:$0xff]
        %v532 = vld [vmem:[%s334 + $0x450] sm:$0xff]
        %v533 = vld [vmem:[%s334 + $0x458] sm:$0xff]
        %v534 = vld [vmem:[%s334 + $0x460] sm:$0xff]
        %v535 = vld [vmem:[%s334 + $0x468] sm:$0xff]
        %v536 = vld [vmem:[%s334 + $0x470] sm:$0xff]
        %v537 = vld [vmem:[%s334 + $0x478] sm:$0xff]
        %v538 = vld [vmem:[%s334 + $0x480] sm:$0xff]
        %v539 = vld [vmem:[%s334 + $0x488] sm:$0xff]
        %v540 = vld [vmem:[%s334 + $0x490] sm:$0xff]
        %v541 = vld [vmem:[%s334 + $0x498] sm:$0xff]
        %v542 = vld [vmem:[%s334 + $0x4a0] sm:$0xff]
        %v543 = vld [vmem:[%s334 + $0x4a8] sm:$0xff]
        %v544 = vld [vmem:[%s334 + $0x4b0] sm:$0xff]
        %v545 = vld [vmem:[%s334 + $0x4b8] sm:$0xff]
        %v546 = vld [vmem:[%s334 + $0x4c0] sm:$0xff]
        %v547 = vld [vmem:[%s334 + $0x4c8] sm:$0xff]
        %v548 = vld [vmem:[%s334 + $0x4d0] sm:$0xff]
        %v549 = vld [vmem:[%s334 + $0x4d8] sm:$0xff]
        %v550 = vld [vmem:[%s334 + $0x4e0] sm:$0xff]
        %v551 = vld [vmem:[%s334 + $0x4e8] sm:$0xff]
        %v552 = vld [vmem:[%s334 + $0x4f0] sm:$0xff]
        %v553 = vld [vmem:[%s334 + $0x4f8] sm:$0xff]
        %v554 = vld [vmem:[%s334 + $0x500] sm:$0xff]
        %v555 = vld [vmem:[%s334 + $0x508] sm:$0xff]
        %v556 = vld [vmem:[%s334 + $0x510] sm:$0xff]
        %v557 = vld [vmem:[%s334 + $0x518] sm:$0xff]
        %v558 = vld [vmem:[%s334 + $0x520] sm:$0xff]
        %v559 = vld [vmem:[%s334 + $0x528] sm:$0xff]
        %v560 = vld [vmem:[%s334 + $0x530] sm:$0xff]
        %v561 = vld [vmem:[%s334 + $0x538] sm:$0xff]
        %v562 = vld [vmem:[%s334 + $0x540] sm:$0xff]
        %v563 = vld [vmem:[%s334 + $0x548] sm:$0xff]
        %v564 = vld [vmem:[%s334 + $0x550] sm:$0xff]
        %v565 = vld [vmem:[%s334 + $0x558] sm:$0xff]
        %v566 = vld [vmem:[%s334 + $0x560] sm:$0xff]
        %v567 = vld [vmem:[%s334 + $0x568] sm:$0xff]
        %v568 = vld [vmem:[%s334 + $0x570] sm:$0xff]
        %v569 = vld [vmem:[%s334 + $0x578] sm:$0xff]
        %v570 = vld [vmem:[%s334 + $0x580] sm:$0xff]
        %v571 = vld [vmem:[%s334 + $0x588] sm:$0xff]
        %v572 = vld [vmem:[%s334 + $0x590] sm:$0xff]
        %v573 = vld [vmem:[%s334 + $0x598] sm:$0xff]
        %v574 = vld [vmem:[%s334 + $0x5a0] sm:$0xff]
        %v575 = vld [vmem:[%s334 + $0x5a8] sm:$0xff]
        %v576 = vld [vmem:[%s334 + $0x5b0] sm:$0xff]
        %v577 = vld [vmem:[%s334 + $0x5b8] sm:$0xff]
        %v578 = vld [vmem:[%s334 + $0x5c0] sm:$0xff]
        %v579 = vld [vmem:[%s334 + $0x5c8] sm:$0xff]
        %v580 = vld [vmem:[%s334 + $0x5d0] sm:$0xff]
        %v581 = vld [vmem:[%s334 + $0x5d8] sm:$0xff]
        %v582 = vld [vmem:[%s334 + $0x5e0] sm:$0xff]
        %v583 = vld [vmem:[%s334 + $0x5e8] sm:$0xff]
        %v584 = vld [vmem:[%s334 + $0x5f0] sm:$0xff]
        %v585 = vld [vmem:[%s334 + $0x5f8] sm:$0xff]
        %v586 = vld [vmem:[%s334 + $0x600] sm:$0xff]
        %v587 = vld [vmem:[%s334 + $0x608] sm:$0xff]
        %v588 = vld [vmem:[%s334 + $0x610] sm:$0xff]
        %v589 = vld [vmem:[%s334 + $0x618] sm:$0xff]
        %v590 = vld [vmem:[%s334 + $0x620] sm:$0xff]
        %v591 = vld [vmem:[%s334 + $0x628] sm:$0xff]
        %v592 = vld [vmem:[%s334 + $0x630] sm:$0xff]
        %v593 = vld [vmem:[%s334 + $0x638] sm:$0xff]
        %v594 = vld [vmem:[%s334 + $0x640] sm:$0xff]
        %v595 = vld [vmem:[%s334 + $0x648] sm:$0xff]
        %v596 = vld [vmem:[%s334 + $0x650] sm:$0xff]
        %v597 = vld [vmem:[%s334 + $0x658] sm:$0xff]
        %v598 = vld [vmem:[%s334 + $0x660] sm:$0xff]
        %v599 = vld [vmem:[%s334 + $0x668] sm:$0xff]
        %v600 = vld [vmem:[%s334 + $0x670] sm:$0xff]
        %v601 = vld [vmem:[%s334 + $0x678] sm:$0xff]
        %v602 = vld [vmem:[%s334 + $0x680] sm:$0xff]
        %v603 = vld [vmem:[%s334 + $0x688] sm:$0xff]
        %v604 = vld [vmem:[%s334 + $0x690] sm:$0xff]
        %v605 = vld [vmem:[%s334 + $0x698] sm:$0xff]
        %v606 = vld [vmem:[%s334 + $0x6a0] sm:$0xff]
        %v607 = vld [vmem:[%s334 + $0x6a8] sm:$0xff]
        %v608 = vld [vmem:[%s334 + $0x6b0] sm:$0xff]
        %v609 = vld [vmem:[%s334 + $0x6b8] sm:$0xff]
        %v610 = vld [vmem:[%s334 + $0x6c0] sm:$0xff]
        %v611 = vld [vmem:[%s334 + $0x6c8] sm:$0xff]
        %v612 = vld [vmem:[%s334 + $0x6d0] sm:$0xff]
        %v613 = vld [vmem:[%s334 + $0x6d8] sm:$0xff]
        %v614 = vld [vmem:[%s334 + $0x6e0] sm:$0xff]
        %v615 = vld [vmem:[%s334 + $0x6e8] sm:$0xff]
        %v616 = vld [vmem:[%s334 + $0x6f0] sm:$0xff]
        %v617 = vld [vmem:[%s334 + $0x6f8] sm:$0xff]
        %v618 = vld [vmem:[%s334 + $0x700] sm:$0xff]
        %v619 = vld [vmem:[%s334 + $0x708] sm:$0xff]
        %v620 = vld [vmem:[%s334 + $0x710] sm:$0xff]
        %v621 = vld [vmem:[%s334 + $0x718] sm:$0xff]
        %v622 = vld [vmem:[%s334 + $0x720] sm:$0xff]
        %v623 = vld [vmem:[%s334 + $0x728] sm:$0xff]
        %v624 = vld [vmem:[%s334 + $0x730] sm:$0xff]
        %v625 = vld [vmem:[%s334 + $0x738] sm:$0xff]
        %v626 = vld [vmem:[%s334 + $0x740] sm:$0xff]
        %v627 = vld [vmem:[%s334 + $0x748] sm:$0xff]
        %v628 = vld [vmem:[%s334 + $0x750] sm:$0xff]
        %v629 = vld [vmem:[%s334 + $0x758] sm:$0xff]
        %v630 = vld [vmem:[%s334 + $0x760] sm:$0xff]
        %v631 = vld [vmem:[%s334 + $0x768] sm:$0xff]
        %v632 = vld [vmem:[%s334 + $0x770] sm:$0xff]
        %v633 = vld [vmem:[%s334 + $0x778] sm:$0xff]
        %v634 = vld [vmem:[%s334 + $0x780] sm:$0xff]
        %v635 = vld [vmem:[%s334 + $0x788] sm:$0xff]
        %v636 = vld [vmem:[%s334 + $0x790] sm:$0xff]
        %v637 = vld [vmem:[%s334 + $0x798] sm:$0xff]
        %v638 = vld [vmem:[%s334 + $0x7a0] sm:$0xff]
        %v639 = vld [vmem:[%s334 + $0x7a8] sm:$0xff]
        %v640 = vld [vmem:[%s334 + $0x7b0] sm:$0xff]
        %v641 = vld [vmem:[%s334 + $0x7b8] sm:$0xff]
        %v642 = vld [vmem:[%s334 + $0x7c0] sm:$0xff]
        %v643 = vld [vmem:[%s334 + $0x7c8] sm:$0xff]
        %v644 = vld [vmem:[%s334 + $0x7d0] sm:$0xff]
        %v645 = vld [vmem:[%s334 + $0x7d8] sm:$0xff]
        %v646 = vld [vmem:[%s334 + $0x7e0] sm:$0xff]
        %v647 = vld [vmem:[%s334 + $0x7e8] sm:$0xff]
        %v648 = vld [vmem:[%s334 + $0x7f0] sm:$0xff]
        %v649 = vld [vmem:[%s334 + $0x7f8] sm:$0xff]
        %v650 = vadd.f32 %v394, %v395
        %v651 = vadd.f32 %v650, %v396
        %v652 = vadd.f32 %v651, %v397
        %653 = vadd.xlane.f32.xlu0 %v652
        %v654 = vpop.xlane.xlu0 %653
        %v655 = vadd.f32 %v398, %v399
        %v656 = vadd.f32 %v655, %v400
        %v657 = vadd.f32 %v656, %v401
        %658 = vadd.xlane.f32.xlu0 %v657
        %v659 = vpop.xlane.xlu0 %658
        %v660 = vadd.f32 %v402, %v403
        %v661 = vadd.f32 %v660, %v404
        %v662 = vadd.f32 %v661, %v405
        %663 = vadd.xlane.f32.xlu0 %v662
        %v664 = vpop.xlane.xlu0 %663
        %v665 = vadd.f32 %v406, %v407
        %v666 = vadd.f32 %v665, %v408
        %v667 = vadd.f32 %v666, %v409
        %668 = vadd.xlane.f32.xlu0 %v667
        %v669 = vpop.xlane.xlu0 %668
        %v670 = vadd.f32 %v410, %v411
        %v671 = vadd.f32 %v670, %v412
        %v672 = vadd.f32 %v671, %v413
        %673 = vadd.xlane.f32.xlu0 %v672
        %v674 = vpop.xlane.xlu0 %673
        %v675 = vadd.f32 %v414, %v415
        %v676 = vadd.f32 %v675, %v416
        %v677 = vadd.f32 %v676, %v417
        %678 = vadd.xlane.f32.xlu0 %v677
        %v679 = vpop.xlane.xlu0 %678
        %v680 = vadd.f32 %v418, %v419
        %v681 = vadd.f32 %v680, %v420
        %v682 = vadd.f32 %v681, %v421
        %683 = vadd.xlane.f32.xlu0 %v682
        %v684 = vpop.xlane.xlu0 %683
        %v685 = vadd.f32 %v422, %v423
        %v686 = vadd.f32 %v685, %v424
        %v687 = vadd.f32 %v686, %v425
        %688 = vadd.xlane.f32.xlu0 %v687
        %v689 = vpop.xlane.xlu0 %688
        %v690 = vadd.f32 %v426, %v427
        %v691 = vadd.f32 %v690, %v428
        %v692 = vadd.f32 %v691, %v429
        %693 = vadd.xlane.f32.xlu0 %v692
        %v694 = vpop.xlane.xlu0 %693
        %v695 = vadd.f32 %v430, %v431
        %v696 = vadd.f32 %v695, %v432
        %v697 = vadd.f32 %v696, %v433
        %698 = vadd.xlane.f32.xlu0 %v697
        %v699 = vpop.xlane.xlu0 %698
        %v700 = vadd.f32 %v434, %v435
        %v701 = vadd.f32 %v700, %v436
        %v702 = vadd.f32 %v701, %v437
        %703 = vadd.xlane.f32.xlu0 %v702
        %v704 = vpop.xlane.xlu0 %703
        %v705 = vadd.f32 %v438, %v439
        %v706 = vadd.f32 %v705, %v440
        %v707 = vadd.f32 %v706, %v441
        %708 = vadd.xlane.f32.xlu0 %v707
        %v709 = vpop.xlane.xlu0 %708
        %v710 = vadd.f32 %v442, %v443
        %v711 = vadd.f32 %v710, %v444
        %v712 = vadd.f32 %v711, %v445
        %713 = vadd.xlane.f32.xlu0 %v712
        %v714 = vpop.xlane.xlu0 %713
        %v715 = vadd.f32 %v446, %v447
        %v716 = vadd.f32 %v715, %v448
        %v717 = vadd.f32 %v716, %v449
        %718 = vadd.xlane.f32.xlu0 %v717
        %v719 = vpop.xlane.xlu0 %718
        %v720 = vadd.f32 %v450, %v451
        %v721 = vadd.f32 %v720, %v452
        %v722 = vadd.f32 %v721, %v453
        %723 = vadd.xlane.f32.xlu0 %v722
        %v724 = vpop.xlane.xlu0 %723
        %v725 = vadd.f32 %v454, %v455
        %v726 = vadd.f32 %v725, %v456
        %v727 = vadd.f32 %v726, %v457
        %728 = vadd.xlane.f32.xlu0 %v727
        %v729 = vpop.xlane.xlu0 %728
        %v730 = vadd.f32 %v458, %v459
        %v731 = vadd.f32 %v730, %v460
        %v732 = vadd.f32 %v731, %v461
        %733 = vadd.xlane.f32.xlu0 %v732
        %v734 = vpop.xlane.xlu0 %733
        %v735 = vadd.f32 %v462, %v463
        %v736 = vadd.f32 %v735, %v464
        %v737 = vadd.f32 %v736, %v465
        %738 = vadd.xlane.f32.xlu0 %v737
        %v739 = vpop.xlane.xlu0 %738
        %v740 = vadd.f32 %v466, %v467
        %v741 = vadd.f32 %v740, %v468
        %v742 = vadd.f32 %v741, %v469
        %743 = vadd.xlane.f32.xlu0 %v742
        %v744 = vpop.xlane.xlu0 %743
        %v745 = vadd.f32 %v470, %v471
        %v746 = vadd.f32 %v745, %v472
        %v747 = vadd.f32 %v746, %v473
        %748 = vadd.xlane.f32.xlu0 %v747
        %v749 = vpop.xlane.xlu0 %748
        %v750 = vadd.f32 %v474, %v475
        %v751 = vadd.f32 %v750, %v476
        %v752 = vadd.f32 %v751, %v477
        %753 = vadd.xlane.f32.xlu0 %v752
        %v754 = vpop.xlane.xlu0 %753
        %v755 = vadd.f32 %v478, %v479
        %v756 = vadd.f32 %v755, %v480
        %v757 = vadd.f32 %v756, %v481
        %758 = vadd.xlane.f32.xlu0 %v757
        %v759 = vpop.xlane.xlu0 %758
        %v760 = vadd.f32 %v482, %v483
        %v761 = vadd.f32 %v760, %v484
        %v762 = vadd.f32 %v761, %v485
        %763 = vadd.xlane.f32.xlu0 %v762
        %v764 = vpop.xlane.xlu0 %763
        %v765 = vadd.f32 %v486, %v487
        %v766 = vadd.f32 %v765, %v488
        %v767 = vadd.f32 %v766, %v489
        %768 = vadd.xlane.f32.xlu0 %v767
        %v769 = vpop.xlane.xlu0 %768
        %v770 = vadd.f32 %v490, %v491
        %v771 = vadd.f32 %v770, %v492
        %v772 = vadd.f32 %v771, %v493
        %773 = vadd.xlane.f32.xlu0 %v772
        %v774 = vpop.xlane.xlu0 %773
        %v775 = vadd.f32 %v494, %v495
        %v776 = vadd.f32 %v775, %v496
        %v777 = vadd.f32 %v776, %v497
        %778 = vadd.xlane.f32.xlu0 %v777
        %v779 = vpop.xlane.xlu0 %778
        %v780 = vadd.f32 %v498, %v499
        %v781 = vadd.f32 %v780, %v500
        %v782 = vadd.f32 %v781, %v501
        %783 = vadd.xlane.f32.xlu0 %v782
        %v784 = vpop.xlane.xlu0 %783
        %v785 = vadd.f32 %v502, %v503
        %v786 = vadd.f32 %v785, %v504
        %v787 = vadd.f32 %v786, %v505
        %788 = vadd.xlane.f32.xlu0 %v787
        %v789 = vpop.xlane.xlu0 %788
        %v790 = vadd.f32 %v506, %v507
        %v791 = vadd.f32 %v790, %v508
        %v792 = vadd.f32 %v791, %v509
        %793 = vadd.xlane.f32.xlu0 %v792
        %v794 = vpop.xlane.xlu0 %793
        %v795 = vadd.f32 %v510, %v511
        %v796 = vadd.f32 %v795, %v512
        %v797 = vadd.f32 %v796, %v513
        %798 = vadd.xlane.f32.xlu0 %v797
        %v799 = vpop.xlane.xlu0 %798
        %v800 = vadd.f32 %v514, %v515
        %v801 = vadd.f32 %v800, %v516
        %v802 = vadd.f32 %v801, %v517
        %803 = vadd.xlane.f32.xlu0 %v802
        %v804 = vpop.xlane.xlu0 %803
        %v805 = vadd.f32 %v518, %v519
        %v806 = vadd.f32 %v805, %v520
        %v807 = vadd.f32 %v806, %v521
        %808 = vadd.xlane.f32.xlu0 %v807
        %v809 = vpop.xlane.xlu0 %808
        %v810 = vadd.f32 %v522, %v523
        %v811 = vadd.f32 %v810, %v524
        %v812 = vadd.f32 %v811, %v525
        %813 = vadd.xlane.f32.xlu0 %v812
        %v814 = vpop.xlane.xlu0 %813
        %v815 = vadd.f32 %v526, %v527
        %v816 = vadd.f32 %v815, %v528
        %v817 = vadd.f32 %v816, %v529
        %818 = vadd.xlane.f32.xlu0 %v817
        %v819 = vpop.xlane.xlu0 %818
        %v820 = vadd.f32 %v530, %v531
        %v821 = vadd.f32 %v820, %v532
        %v822 = vadd.f32 %v821, %v533
        %823 = vadd.xlane.f32.xlu0 %v822
        %v824 = vpop.xlane.xlu0 %823
        %v825 = vadd.f32 %v534, %v535
        %v826 = vadd.f32 %v825, %v536
        %v827 = vadd.f32 %v826, %v537
        %828 = vadd.xlane.f32.xlu0 %v827
        %v829 = vpop.xlane.xlu0 %828
        %v830 = vadd.f32 %v538, %v539
        %v831 = vadd.f32 %v830, %v540
        %v832 = vadd.f32 %v831, %v541
        %833 = vadd.xlane.f32.xlu0 %v832
        %v834 = vpop.xlane.xlu0 %833
        %v835 = vadd.f32 %v542, %v543
        %v836 = vadd.f32 %v835, %v544
        %v837 = vadd.f32 %v836, %v545
        %838 = vadd.xlane.f32.xlu0 %v837
        %v839 = vpop.xlane.xlu0 %838
        %v840 = vadd.f32 %v546, %v547
        %v841 = vadd.f32 %v840, %v548
        %v842 = vadd.f32 %v841, %v549
        %843 = vadd.xlane.f32.xlu0 %v842
        %v844 = vpop.xlane.xlu0 %843
        %v845 = vadd.f32 %v550, %v551
        %v846 = vadd.f32 %v845, %v552
        %v847 = vadd.f32 %v846, %v553
        %848 = vadd.xlane.f32.xlu0 %v847
        %v849 = vpop.xlane.xlu0 %848
        %v850 = vadd.f32 %v554, %v555
        %v851 = vadd.f32 %v850, %v556
        %v852 = vadd.f32 %v851, %v557
        %853 = vadd.xlane.f32.xlu0 %v852
        %v854 = vpop.xlane.xlu0 %853
        %v855 = vadd.f32 %v558, %v559
        %v856 = vadd.f32 %v855, %v560
        %v857 = vadd.f32 %v856, %v561
        %858 = vadd.xlane.f32.xlu0 %v857
        %v859 = vpop.xlane.xlu0 %858
        %v860 = vadd.f32 %v562, %v563
        %v861 = vadd.f32 %v860, %v564
        %v862 = vadd.f32 %v861, %v565
        %863 = vadd.xlane.f32.xlu0 %v862
        %v864 = vpop.xlane.xlu0 %863
        %v865 = vadd.f32 %v566, %v567
        %v866 = vadd.f32 %v865, %v568
        %v867 = vadd.f32 %v866, %v569
        %868 = vadd.xlane.f32.xlu0 %v867
        %v869 = vpop.xlane.xlu0 %868
        %v870 = vadd.f32 %v570, %v571
        %v871 = vadd.f32 %v870, %v572
        %v872 = vadd.f32 %v871, %v573
        %873 = vadd.xlane.f32.xlu0 %v872
        %v874 = vpop.xlane.xlu0 %873
        %v875 = vadd.f32 %v574, %v575
        %v876 = vadd.f32 %v875, %v576
        %v877 = vadd.f32 %v876, %v577
        %878 = vadd.xlane.f32.xlu0 %v877
        %v879 = vpop.xlane.xlu0 %878
        %v880 = vadd.f32 %v578, %v579
        %v881 = vadd.f32 %v880, %v580
        %v882 = vadd.f32 %v881, %v581
        %883 = vadd.xlane.f32.xlu0 %v882
        %v884 = vpop.xlane.xlu0 %883
        %v885 = vadd.f32 %v582, %v583
        %v886 = vadd.f32 %v885, %v584
        %v887 = vadd.f32 %v886, %v585
        %888 = vadd.xlane.f32.xlu0 %v887
        %v889 = vpop.xlane.xlu0 %888
        %v890 = vadd.f32 %v586, %v587
        %v891 = vadd.f32 %v890, %v588
        %v892 = vadd.f32 %v891, %v589
        %893 = vadd.xlane.f32.xlu0 %v892
        %v894 = vpop.xlane.xlu0 %893
        %v895 = vadd.f32 %v590, %v591
        %v896 = vadd.f32 %v895, %v592
        %v897 = vadd.f32 %v896, %v593
        %898 = vadd.xlane.f32.xlu0 %v897
        %v899 = vpop.xlane.xlu0 %898
        %v900 = vadd.f32 %v594, %v595
        %v901 = vadd.f32 %v900, %v596
        %v902 = vadd.f32 %v901, %v597
        %903 = vadd.xlane.f32.xlu0 %v902
        %v904 = vpop.xlane.xlu0 %903
        %v905 = vadd.f32 %v598, %v599
        %v906 = vadd.f32 %v905, %v600
        %v907 = vadd.f32 %v906, %v601
        %908 = vadd.xlane.f32.xlu0 %v907
        %v909 = vpop.xlane.xlu0 %908
        %v910 = vadd.f32 %v602, %v603
        %v911 = vadd.f32 %v910, %v604
        %v912 = vadd.f32 %v911, %v605
        %913 = vadd.xlane.f32.xlu0 %v912
        %v914 = vpop.xlane.xlu0 %913
        %v915 = vadd.f32 %v606, %v607
        %v916 = vadd.f32 %v915, %v608
        %v917 = vadd.f32 %v916, %v609
        %918 = vadd.xlane.f32.xlu0 %v917
        %v919 = vpop.xlane.xlu0 %918
        %v920 = vadd.f32 %v610, %v611
        %v921 = vadd.f32 %v920, %v612
        %v922 = vadd.f32 %v921, %v613
        %923 = vadd.xlane.f32.xlu0 %v922
        %v924 = vpop.xlane.xlu0 %923
        %v925 = vadd.f32 %v614, %v615
        %v926 = vadd.f32 %v925, %v616
        %v927 = vadd.f32 %v926, %v617
        %928 = vadd.xlane.f32.xlu0 %v927
        %v929 = vpop.xlane.xlu0 %928
        %v930 = vadd.f32 %v618, %v619
        %v931 = vadd.f32 %v930, %v620
        %v932 = vadd.f32 %v931, %v621
        %933 = vadd.xlane.f32.xlu0 %v932
        %v934 = vpop.xlane.xlu0 %933
        %v935 = vadd.f32 %v622, %v623
        %v936 = vadd.f32 %v935, %v624
        %v937 = vadd.f32 %v936, %v625
        %938 = vadd.xlane.f32.xlu0 %v937
        %v939 = vpop.xlane.xlu0 %938
        %v940 = vadd.f32 %v626, %v627
        %v941 = vadd.f32 %v940, %v628
        %v942 = vadd.f32 %v941, %v629
        %943 = vadd.xlane.f32.xlu0 %v942
        %v944 = vpop.xlane.xlu0 %943
        %v945 = vadd.f32 %v630, %v631
        %v946 = vadd.f32 %v945, %v632
        %v947 = vadd.f32 %v946, %v633
        %948 = vadd.xlane.f32.xlu0 %v947
        %v949 = vpop.xlane.xlu0 %948
        %v950 = vadd.f32 %v634, %v635
        %v951 = vadd.f32 %v950, %v636
        %v952 = vadd.f32 %v951, %v637
        %953 = vadd.xlane.f32.xlu0 %v952
        %v954 = vpop.xlane.xlu0 %953
        %v955 = vadd.f32 %v638, %v639
        %v956 = vadd.f32 %v955, %v640
        %v957 = vadd.f32 %v956, %v641
        %958 = vadd.xlane.f32.xlu0 %v957
        %v959 = vpop.xlane.xlu0 %958
        %v960 = vadd.f32 %v642, %v643
        %v961 = vadd.f32 %v960, %v644
        %v962 = vadd.f32 %v961, %v645
        %963 = vadd.xlane.f32.xlu0 %v962
        %v964 = vpop.xlane.xlu0 %963
        %v965 = vadd.f32 %v646, %v647
        %v966 = vadd.f32 %v965, %v648
        %v967 = vadd.f32 %v966, %v649
        %968 = vadd.xlane.f32.xlu0 %v967
        %v969 = vpop.xlane.xlu0 %968
        %v1035 = vunpack.c.l.s4 269488144
        %v1036 = vunpack.c.0.s8 %v1035
        %v1037 = vperm.slane %v654, %v1036
        %v1039 = vunpack.c.l.s4 842150450
        %v1040 = vunpack.c.0.s8 %v1039
        %v1041 = vperm.slane %v654, %v1040
        %v1043 = vunpack.c.l.s4 1414812756
        %v1044 = vunpack.c.0.s8 %v1043
        %v1045 = vperm.slane %v654, %v1044
        %v1047 = vunpack.c.l.s4 1987475062
        %v1048 = vunpack.c.0.s8 %v1047
        %v1049 = vperm.slane %v654, %v1048
        %v1051 = vunpack.c.l.s4 269488144
        %v1052 = vunpack.c.0.s8 %v1051
        %v1053 = vperm.slane %v659, %v1052
        %v1055 = vunpack.c.l.s4 842150450
        %v1056 = vunpack.c.0.s8 %v1055
        %v1057 = vperm.slane %v659, %v1056
        %v1059 = vunpack.c.l.s4 1414812756
        %v1060 = vunpack.c.0.s8 %v1059
        %v1061 = vperm.slane %v659, %v1060
        %v1063 = vunpack.c.l.s4 1987475062
        %v1064 = vunpack.c.0.s8 %v1063
        %v1065 = vperm.slane %v659, %v1064
        %v1067 = vunpack.c.l.s4 269488144
        %v1068 = vunpack.c.0.s8 %v1067
        %v1069 = vperm.slane %v664, %v1068
        %v1071 = vunpack.c.l.s4 842150450
        %v1072 = vunpack.c.0.s8 %v1071
        %v1073 = vperm.slane %v664, %v1072
        %v1075 = vunpack.c.l.s4 1414812756
        %v1076 = vunpack.c.0.s8 %v1075
        %v1077 = vperm.slane %v664, %v1076
        %v1079 = vunpack.c.l.s4 1987475062
        %v1080 = vunpack.c.0.s8 %v1079
        %v1081 = vperm.slane %v664, %v1080
        %v1083 = vunpack.c.l.s4 269488144
        %v1084 = vunpack.c.0.s8 %v1083
        %v1085 = vperm.slane %v669, %v1084
        %v1087 = vunpack.c.l.s4 842150450
        %v1088 = vunpack.c.0.s8 %v1087
        %v1089 = vperm.slane %v669, %v1088
        %v1091 = vunpack.c.l.s4 1414812756
        %v1092 = vunpack.c.0.s8 %v1091
        %v1093 = vperm.slane %v669, %v1092
        %v1095 = vunpack.c.l.s4 1987475062
        %v1096 = vunpack.c.0.s8 %v1095
        %v1097 = vperm.slane %v669, %v1096
        %v1099 = vunpack.c.l.s4 269488144
        %v1100 = vunpack.c.0.s8 %v1099
        %v1101 = vperm.slane %v674, %v1100
        %v1103 = vunpack.c.l.s4 842150450
        %v1104 = vunpack.c.0.s8 %v1103
        %v1105 = vperm.slane %v674, %v1104
        %v1107 = vunpack.c.l.s4 1414812756
        %v1108 = vunpack.c.0.s8 %v1107
        %v1109 = vperm.slane %v674, %v1108
        %v1111 = vunpack.c.l.s4 1987475062
        %v1112 = vunpack.c.0.s8 %v1111
        %v1113 = vperm.slane %v674, %v1112
        %v1115 = vunpack.c.l.s4 269488144
        %v1116 = vunpack.c.0.s8 %v1115
        %v1117 = vperm.slane %v679, %v1116
        %v1119 = vunpack.c.l.s4 842150450
        %v1120 = vunpack.c.0.s8 %v1119
        %v1121 = vperm.slane %v679, %v1120
        %v1123 = vunpack.c.l.s4 1414812756
        %v1124 = vunpack.c.0.s8 %v1123
        %v1125 = vperm.slane %v679, %v1124
        %v1127 = vunpack.c.l.s4 1987475062
        %v1128 = vunpack.c.0.s8 %v1127
        %v1129 = vperm.slane %v679, %v1128
        %v1131 = vunpack.c.l.s4 269488144
        %v1132 = vunpack.c.0.s8 %v1131
        %v1133 = vperm.slane %v684, %v1132
        %v1135 = vunpack.c.l.s4 842150450
        %v1136 = vunpack.c.0.s8 %v1135
        %v1137 = vperm.slane %v684, %v1136
        %v1139 = vunpack.c.l.s4 1414812756
        %v1140 = vunpack.c.0.s8 %v1139
        %v1141 = vperm.slane %v684, %v1140
        %v1143 = vunpack.c.l.s4 1987475062
        %v1144 = vunpack.c.0.s8 %v1143
        %v1145 = vperm.slane %v684, %v1144
        %v1147 = vunpack.c.l.s4 269488144
        %v1148 = vunpack.c.0.s8 %v1147
        %v1149 = vperm.slane %v689, %v1148
        %v1151 = vunpack.c.l.s4 842150450
        %v1152 = vunpack.c.0.s8 %v1151
        %v1153 = vperm.slane %v689, %v1152
        %v1155 = vunpack.c.l.s4 1414812756
        %v1156 = vunpack.c.0.s8 %v1155
        %v1157 = vperm.slane %v689, %v1156
        %v1159 = vunpack.c.l.s4 1987475062
        %v1160 = vunpack.c.0.s8 %v1159
        %v1161 = vperm.slane %v689, %v1160
        %v1163 = vunpack.c.l.s4 269488144
        %v1164 = vunpack.c.0.s8 %v1163
        %v1165 = vperm.slane %v694, %v1164
        %v1167 = vunpack.c.l.s4 842150450
        %v1168 = vunpack.c.0.s8 %v1167
        %v1169 = vperm.slane %v694, %v1168
        %v1171 = vunpack.c.l.s4 1414812756
        %v1172 = vunpack.c.0.s8 %v1171
        %v1173 = vperm.slane %v694, %v1172
        %v1175 = vunpack.c.l.s4 1987475062
        %v1176 = vunpack.c.0.s8 %v1175
        %v1177 = vperm.slane %v694, %v1176
        %v1179 = vunpack.c.l.s4 269488144
        %v1180 = vunpack.c.0.s8 %v1179
        %v1181 = vperm.slane %v699, %v1180
        %v1183 = vunpack.c.l.s4 842150450
        %v1184 = vunpack.c.0.s8 %v1183
        %v1185 = vperm.slane %v699, %v1184
        %v1187 = vunpack.c.l.s4 1414812756
        %v1188 = vunpack.c.0.s8 %v1187
        %v1189 = vperm.slane %v699, %v1188
        %v1191 = vunpack.c.l.s4 1987475062
        %v1192 = vunpack.c.0.s8 %v1191
        %v1193 = vperm.slane %v699, %v1192
        %v1195 = vunpack.c.l.s4 269488144
        %v1196 = vunpack.c.0.s8 %v1195
        %v1197 = vperm.slane %v704, %v1196
        %v1199 = vunpack.c.l.s4 842150450
        %v1200 = vunpack.c.0.s8 %v1199
        %v1201 = vperm.slane %v704, %v1200
        %v1203 = vunpack.c.l.s4 1414812756
        %v1204 = vunpack.c.0.s8 %v1203
        %v1205 = vperm.slane %v704, %v1204
        %v1207 = vunpack.c.l.s4 1987475062
        %v1208 = vunpack.c.0.s8 %v1207
        %v1209 = vperm.slane %v704, %v1208
        %v1211 = vunpack.c.l.s4 269488144
        %v1212 = vunpack.c.0.s8 %v1211
        %v1213 = vperm.slane %v709, %v1212
        %v1215 = vunpack.c.l.s4 842150450
        %v1216 = vunpack.c.0.s8 %v1215
        %v1217 = vperm.slane %v709, %v1216
        %v1219 = vunpack.c.l.s4 1414812756
        %v1220 = vunpack.c.0.s8 %v1219
        %v1221 = vperm.slane %v709, %v1220
        %v1223 = vunpack.c.l.s4 1987475062
        %v1224 = vunpack.c.0.s8 %v1223
        %v1225 = vperm.slane %v709, %v1224
        %v1227 = vunpack.c.l.s4 269488144
        %v1228 = vunpack.c.0.s8 %v1227
        %v1229 = vperm.slane %v714, %v1228
        %v1231 = vunpack.c.l.s4 842150450
        %v1232 = vunpack.c.0.s8 %v1231
        %v1233 = vperm.slane %v714, %v1232
        %v1235 = vunpack.c.l.s4 1414812756
        %v1236 = vunpack.c.0.s8 %v1235
        %v1237 = vperm.slane %v714, %v1236
        %v1239 = vunpack.c.l.s4 1987475062
        %v1240 = vunpack.c.0.s8 %v1239
        %v1241 = vperm.slane %v714, %v1240
        %v1243 = vunpack.c.l.s4 269488144
        %v1244 = vunpack.c.0.s8 %v1243
        %v1245 = vperm.slane %v719, %v1244
        %v1247 = vunpack.c.l.s4 842150450
        %v1248 = vunpack.c.0.s8 %v1247
        %v1249 = vperm.slane %v719, %v1248
        %v1251 = vunpack.c.l.s4 1414812756
        %v1252 = vunpack.c.0.s8 %v1251
        %v1253 = vperm.slane %v719, %v1252
        %v1255 = vunpack.c.l.s4 1987475062
        %v1256 = vunpack.c.0.s8 %v1255
        %v1257 = vperm.slane %v719, %v1256
        %v1259 = vunpack.c.l.s4 269488144
        %v1260 = vunpack.c.0.s8 %v1259
        %v1261 = vperm.slane %v724, %v1260
        %v1263 = vunpack.c.l.s4 842150450
        %v1264 = vunpack.c.0.s8 %v1263
        %v1265 = vperm.slane %v724, %v1264
        %v1267 = vunpack.c.l.s4 1414812756
        %v1268 = vunpack.c.0.s8 %v1267
        %v1269 = vperm.slane %v724, %v1268
        %v1271 = vunpack.c.l.s4 1987475062
        %v1272 = vunpack.c.0.s8 %v1271
        %v1273 = vperm.slane %v724, %v1272
        %v1275 = vunpack.c.l.s4 269488144
        %v1276 = vunpack.c.0.s8 %v1275
        %v1277 = vperm.slane %v729, %v1276
        %v1279 = vunpack.c.l.s4 842150450
        %v1280 = vunpack.c.0.s8 %v1279
        %v1281 = vperm.slane %v729, %v1280
        %v1283 = vunpack.c.l.s4 1414812756
        %v1284 = vunpack.c.0.s8 %v1283
        %v1285 = vperm.slane %v729, %v1284
        %v1287 = vunpack.c.l.s4 1987475062
        %v1288 = vunpack.c.0.s8 %v1287
        %v1289 = vperm.slane %v729, %v1288
        %v1291 = vunpack.c.l.s4 269488144
        %v1292 = vunpack.c.0.s8 %v1291
        %v1293 = vperm.slane %v734, %v1292
        %v1295 = vunpack.c.l.s4 842150450
        %v1296 = vunpack.c.0.s8 %v1295
        %v1297 = vperm.slane %v734, %v1296
        %v1299 = vunpack.c.l.s4 1414812756
        %v1300 = vunpack.c.0.s8 %v1299
        %v1301 = vperm.slane %v734, %v1300
        %v1303 = vunpack.c.l.s4 1987475062
        %v1304 = vunpack.c.0.s8 %v1303
        %v1305 = vperm.slane %v734, %v1304
        %v1307 = vunpack.c.l.s4 269488144
        %v1308 = vunpack.c.0.s8 %v1307
        %v1309 = vperm.slane %v739, %v1308
        %v1311 = vunpack.c.l.s4 842150450
        %v1312 = vunpack.c.0.s8 %v1311
        %v1313 = vperm.slane %v739, %v1312
        %v1315 = vunpack.c.l.s4 1414812756
        %v1316 = vunpack.c.0.s8 %v1315
        %v1317 = vperm.slane %v739, %v1316
        %v1319 = vunpack.c.l.s4 1987475062
        %v1320 = vunpack.c.0.s8 %v1319
        %v1321 = vperm.slane %v739, %v1320
        %v1323 = vunpack.c.l.s4 269488144
        %v1324 = vunpack.c.0.s8 %v1323
        %v1325 = vperm.slane %v744, %v1324
        %v1327 = vunpack.c.l.s4 842150450
        %v1328 = vunpack.c.0.s8 %v1327
        %v1329 = vperm.slane %v744, %v1328
        %v1331 = vunpack.c.l.s4 1414812756
        %v1332 = vunpack.c.0.s8 %v1331
        %v1333 = vperm.slane %v744, %v1332
        %v1335 = vunpack.c.l.s4 1987475062
        %v1336 = vunpack.c.0.s8 %v1335
        %v1337 = vperm.slane %v744, %v1336
        %v1339 = vunpack.c.l.s4 269488144
        %v1340 = vunpack.c.0.s8 %v1339
        %v1341 = vperm.slane %v749, %v1340
        %v1343 = vunpack.c.l.s4 842150450
        %v1344 = vunpack.c.0.s8 %v1343
        %v1345 = vperm.slane %v749, %v1344
        %v1347 = vunpack.c.l.s4 1414812756
        %v1348 = vunpack.c.0.s8 %v1347
        %v1349 = vperm.slane %v749, %v1348
        %v1351 = vunpack.c.l.s4 1987475062
        %v1352 = vunpack.c.0.s8 %v1351
        %v1353 = vperm.slane %v749, %v1352
        %v1355 = vunpack.c.l.s4 269488144
        %v1356 = vunpack.c.0.s8 %v1355
        %v1357 = vperm.slane %v754, %v1356
        %v1359 = vunpack.c.l.s4 842150450
        %v1360 = vunpack.c.0.s8 %v1359
        %v1361 = vperm.slane %v754, %v1360
        %v1363 = vunpack.c.l.s4 1414812756
        %v1364 = vunpack.c.0.s8 %v1363
        %v1365 = vperm.slane %v754, %v1364
        %v1367 = vunpack.c.l.s4 1987475062
        %v1368 = vunpack.c.0.s8 %v1367
        %v1369 = vperm.slane %v754, %v1368
        %v1371 = vunpack.c.l.s4 269488144
        %v1372 = vunpack.c.0.s8 %v1371
        %v1373 = vperm.slane %v759, %v1372
        %v1375 = vunpack.c.l.s4 842150450
        %v1376 = vunpack.c.0.s8 %v1375
        %v1377 = vperm.slane %v759, %v1376
        %v1379 = vunpack.c.l.s4 1414812756
        %v1380 = vunpack.c.0.s8 %v1379
        %v1381 = vperm.slane %v759, %v1380
        %v1383 = vunpack.c.l.s4 1987475062
        %v1384 = vunpack.c.0.s8 %v1383
        %v1385 = vperm.slane %v759, %v1384
        %v1387 = vunpack.c.l.s4 269488144
        %v1388 = vunpack.c.0.s8 %v1387
        %v1389 = vperm.slane %v764, %v1388
        %v1391 = vunpack.c.l.s4 842150450
        %v1392 = vunpack.c.0.s8 %v1391
        %v1393 = vperm.slane %v764, %v1392
        %v1395 = vunpack.c.l.s4 1414812756
        %v1396 = vunpack.c.0.s8 %v1395
        %v1397 = vperm.slane %v764, %v1396
        %v1399 = vunpack.c.l.s4 1987475062
        %v1400 = vunpack.c.0.s8 %v1399
        %v1401 = vperm.slane %v764, %v1400
        %v1403 = vunpack.c.l.s4 269488144
        %v1404 = vunpack.c.0.s8 %v1403
        %v1405 = vperm.slane %v769, %v1404
        %v1407 = vunpack.c.l.s4 842150450
        %v1408 = vunpack.c.0.s8 %v1407
        %v1409 = vperm.slane %v769, %v1408
        %v1411 = vunpack.c.l.s4 1414812756
        %v1412 = vunpack.c.0.s8 %v1411
        %v1413 = vperm.slane %v769, %v1412
        %v1415 = vunpack.c.l.s4 1987475062
        %v1416 = vunpack.c.0.s8 %v1415
        %v1417 = vperm.slane %v769, %v1416
        %v1419 = vunpack.c.l.s4 269488144
        %v1420 = vunpack.c.0.s8 %v1419
        %v1421 = vperm.slane %v774, %v1420
        %v1423 = vunpack.c.l.s4 842150450
        %v1424 = vunpack.c.0.s8 %v1423
        %v1425 = vperm.slane %v774, %v1424
        %v1427 = vunpack.c.l.s4 1414812756
        %v1428 = vunpack.c.0.s8 %v1427
        %v1429 = vperm.slane %v774, %v1428
        %v1431 = vunpack.c.l.s4 1987475062
        %v1432 = vunpack.c.0.s8 %v1431
        %v1433 = vperm.slane %v774, %v1432
        %v1435 = vunpack.c.l.s4 269488144
        %v1436 = vunpack.c.0.s8 %v1435
        %v1437 = vperm.slane %v779, %v1436
        %v1439 = vunpack.c.l.s4 842150450
        %v1440 = vunpack.c.0.s8 %v1439
        %v1441 = vperm.slane %v779, %v1440
        %v1443 = vunpack.c.l.s4 1414812756
        %v1444 = vunpack.c.0.s8 %v1443
        %v1445 = vperm.slane %v779, %v1444
        %v1447 = vunpack.c.l.s4 1987475062
        %v1448 = vunpack.c.0.s8 %v1447
        %v1449 = vperm.slane %v779, %v1448
        %v1451 = vunpack.c.l.s4 269488144
        %v1452 = vunpack.c.0.s8 %v1451
        %v1453 = vperm.slane %v784, %v1452
        %v1455 = vunpack.c.l.s4 842150450
        %v1456 = vunpack.c.0.s8 %v1455
        %v1457 = vperm.slane %v784, %v1456
        %v1459 = vunpack.c.l.s4 1414812756
        %v1460 = vunpack.c.0.s8 %v1459
        %v1461 = vperm.slane %v784, %v1460
        %v1463 = vunpack.c.l.s4 1987475062
        %v1464 = vunpack.c.0.s8 %v1463
        %v1465 = vperm.slane %v784, %v1464
        %v1467 = vunpack.c.l.s4 269488144
        %v1468 = vunpack.c.0.s8 %v1467
        %v1469 = vperm.slane %v789, %v1468
        %v1471 = vunpack.c.l.s4 842150450
        %v1472 = vunpack.c.0.s8 %v1471
        %v1473 = vperm.slane %v789, %v1472
        %v1475 = vunpack.c.l.s4 1414812756
        %v1476 = vunpack.c.0.s8 %v1475
        %v1477 = vperm.slane %v789, %v1476
        %v1479 = vunpack.c.l.s4 1987475062
        %v1480 = vunpack.c.0.s8 %v1479
        %v1481 = vperm.slane %v789, %v1480
        %v1483 = vunpack.c.l.s4 269488144
        %v1484 = vunpack.c.0.s8 %v1483
        %v1485 = vperm.slane %v794, %v1484
        %v1487 = vunpack.c.l.s4 842150450
        %v1488 = vunpack.c.0.s8 %v1487
        %v1489 = vperm.slane %v794, %v1488
        %v1491 = vunpack.c.l.s4 1414812756
        %v1492 = vunpack.c.0.s8 %v1491
        %v1493 = vperm.slane %v794, %v1492
        %v1495 = vunpack.c.l.s4 1987475062
        %v1496 = vunpack.c.0.s8 %v1495
        %v1497 = vperm.slane %v794, %v1496
        %v1499 = vunpack.c.l.s4 269488144
        %v1500 = vunpack.c.0.s8 %v1499
        %v1501 = vperm.slane %v799, %v1500
        %v1503 = vunpack.c.l.s4 842150450
        %v1504 = vunpack.c.0.s8 %v1503
        %v1505 = vperm.slane %v799, %v1504
        %v1507 = vunpack.c.l.s4 1414812756
        %v1508 = vunpack.c.0.s8 %v1507
        %v1509 = vperm.slane %v799, %v1508
        %v1511 = vunpack.c.l.s4 1987475062
        %v1512 = vunpack.c.0.s8 %v1511
        %v1513 = vperm.slane %v799, %v1512
        %v1515 = vunpack.c.l.s4 269488144
        %v1516 = vunpack.c.0.s8 %v1515
        %v1517 = vperm.slane %v804, %v1516
        %v1519 = vunpack.c.l.s4 842150450
        %v1520 = vunpack.c.0.s8 %v1519
        %v1521 = vperm.slane %v804, %v1520
        %v1523 = vunpack.c.l.s4 1414812756
        %v1524 = vunpack.c.0.s8 %v1523
        %v1525 = vperm.slane %v804, %v1524
        %v1527 = vunpack.c.l.s4 1987475062
        %v1528 = vunpack.c.0.s8 %v1527
        %v1529 = vperm.slane %v804, %v1528
        %v1531 = vunpack.c.l.s4 269488144
        %v1532 = vunpack.c.0.s8 %v1531
        %v1533 = vperm.slane %v809, %v1532
        %v1535 = vunpack.c.l.s4 842150450
        %v1536 = vunpack.c.0.s8 %v1535
        %v1537 = vperm.slane %v809, %v1536
        %v1539 = vunpack.c.l.s4 1414812756
        %v1540 = vunpack.c.0.s8 %v1539
        %v1541 = vperm.slane %v809, %v1540
        %v1543 = vunpack.c.l.s4 1987475062
        %v1544 = vunpack.c.0.s8 %v1543
        %v1545 = vperm.slane %v809, %v1544
        %v1547 = vunpack.c.l.s4 269488144
        %v1548 = vunpack.c.0.s8 %v1547
        %v1549 = vperm.slane %v814, %v1548
        %v1551 = vunpack.c.l.s4 842150450
        %v1552 = vunpack.c.0.s8 %v1551
        %v1553 = vperm.slane %v814, %v1552
        %v1555 = vunpack.c.l.s4 1414812756
        %v1556 = vunpack.c.0.s8 %v1555
        %v1557 = vperm.slane %v814, %v1556
        %v1559 = vunpack.c.l.s4 1987475062
        %v1560 = vunpack.c.0.s8 %v1559
        %v1561 = vperm.slane %v814, %v1560
        %v1563 = vunpack.c.l.s4 269488144
        %v1564 = vunpack.c.0.s8 %v1563
        %v1565 = vperm.slane %v819, %v1564
        %v1567 = vunpack.c.l.s4 842150450
        %v1568 = vunpack.c.0.s8 %v1567
        %v1569 = vperm.slane %v819, %v1568
        %v1571 = vunpack.c.l.s4 1414812756
        %v1572 = vunpack.c.0.s8 %v1571
        %v1573 = vperm.slane %v819, %v1572
        %v1575 = vunpack.c.l.s4 1987475062
        %v1576 = vunpack.c.0.s8 %v1575
        %v1577 = vperm.slane %v819, %v1576
        %v1579 = vunpack.c.l.s4 269488144
        %v1580 = vunpack.c.0.s8 %v1579
        %v1581 = vperm.slane %v824, %v1580
        %v1583 = vunpack.c.l.s4 842150450
        %v1584 = vunpack.c.0.s8 %v1583
        %v1585 = vperm.slane %v824, %v1584
        %v1587 = vunpack.c.l.s4 1414812756
        %v1588 = vunpack.c.0.s8 %v1587
        %v1589 = vperm.slane %v824, %v1588
        %v1591 = vunpack.c.l.s4 1987475062
        %v1592 = vunpack.c.0.s8 %v1591
        %v1593 = vperm.slane %v824, %v1592
        %v1595 = vunpack.c.l.s4 269488144
        %v1596 = vunpack.c.0.s8 %v1595
        %v1597 = vperm.slane %v829, %v1596
        %v1599 = vunpack.c.l.s4 842150450
        %v1600 = vunpack.c.0.s8 %v1599
        %v1601 = vperm.slane %v829, %v1600
        %v1603 = vunpack.c.l.s4 1414812756
        %v1604 = vunpack.c.0.s8 %v1603
        %v1605 = vperm.slane %v829, %v1604
        %v1607 = vunpack.c.l.s4 1987475062
        %v1608 = vunpack.c.0.s8 %v1607
        %v1609 = vperm.slane %v829, %v1608
        %v1611 = vunpack.c.l.s4 269488144
        %v1612 = vunpack.c.0.s8 %v1611
        %v1613 = vperm.slane %v834, %v1612
        %v1615 = vunpack.c.l.s4 842150450
        %v1616 = vunpack.c.0.s8 %v1615
        %v1617 = vperm.slane %v834, %v1616
        %v1619 = vunpack.c.l.s4 1414812756
        %v1620 = vunpack.c.0.s8 %v1619
        %v1621 = vperm.slane %v834, %v1620
        %v1623 = vunpack.c.l.s4 1987475062
        %v1624 = vunpack.c.0.s8 %v1623
        %v1625 = vperm.slane %v834, %v1624
        %v1627 = vunpack.c.l.s4 269488144
        %v1628 = vunpack.c.0.s8 %v1627
        %v1629 = vperm.slane %v839, %v1628
        %v1631 = vunpack.c.l.s4 842150450
        %v1632 = vunpack.c.0.s8 %v1631
        %v1633 = vperm.slane %v839, %v1632
        %v1635 = vunpack.c.l.s4 1414812756
        %v1636 = vunpack.c.0.s8 %v1635
        %v1637 = vperm.slane %v839, %v1636
        %v1639 = vunpack.c.l.s4 1987475062
        %v1640 = vunpack.c.0.s8 %v1639
        %v1641 = vperm.slane %v839, %v1640
        %v1643 = vunpack.c.l.s4 269488144
        %v1644 = vunpack.c.0.s8 %v1643
        %v1645 = vperm.slane %v844, %v1644
        %v1647 = vunpack.c.l.s4 842150450
        %v1648 = vunpack.c.0.s8 %v1647
        %v1649 = vperm.slane %v844, %v1648
        %v1651 = vunpack.c.l.s4 1414812756
        %v1652 = vunpack.c.0.s8 %v1651
        %v1653 = vperm.slane %v844, %v1652
        %v1655 = vunpack.c.l.s4 1987475062
        %v1656 = vunpack.c.0.s8 %v1655
        %v1657 = vperm.slane %v844, %v1656
        %v1659 = vunpack.c.l.s4 269488144
        %v1660 = vunpack.c.0.s8 %v1659
        %v1661 = vperm.slane %v849, %v1660
        %v1663 = vunpack.c.l.s4 842150450
        %v1664 = vunpack.c.0.s8 %v1663
        %v1665 = vperm.slane %v849, %v1664
        %v1667 = vunpack.c.l.s4 1414812756
        %v1668 = vunpack.c.0.s8 %v1667
        %v1669 = vperm.slane %v849, %v1668
        %v1671 = vunpack.c.l.s4 1987475062
        %v1672 = vunpack.c.0.s8 %v1671
        %v1673 = vperm.slane %v849, %v1672
        %v1675 = vunpack.c.l.s4 269488144
        %v1676 = vunpack.c.0.s8 %v1675
        %v1677 = vperm.slane %v854, %v1676
        %v1679 = vunpack.c.l.s4 842150450
        %v1680 = vunpack.c.0.s8 %v1679
        %v1681 = vperm.slane %v854, %v1680
        %v1683 = vunpack.c.l.s4 1414812756
        %v1684 = vunpack.c.0.s8 %v1683
        %v1685 = vperm.slane %v854, %v1684
        %v1687 = vunpack.c.l.s4 1987475062
        %v1688 = vunpack.c.0.s8 %v1687
        %v1689 = vperm.slane %v854, %v1688
        %v1691 = vunpack.c.l.s4 269488144
        %v1692 = vunpack.c.0.s8 %v1691
        %v1693 = vperm.slane %v859, %v1692
        %v1695 = vunpack.c.l.s4 842150450
        %v1696 = vunpack.c.0.s8 %v1695
        %v1697 = vperm.slane %v859, %v1696
        %v1699 = vunpack.c.l.s4 1414812756
        %v1700 = vunpack.c.0.s8 %v1699
        %v1701 = vperm.slane %v859, %v1700
        %v1703 = vunpack.c.l.s4 1987475062
        %v1704 = vunpack.c.0.s8 %v1703
        %v1705 = vperm.slane %v859, %v1704
        %v1707 = vunpack.c.l.s4 269488144
        %v1708 = vunpack.c.0.s8 %v1707
        %v1709 = vperm.slane %v864, %v1708
        %v1711 = vunpack.c.l.s4 842150450
        %v1712 = vunpack.c.0.s8 %v1711
        %v1713 = vperm.slane %v864, %v1712
        %v1715 = vunpack.c.l.s4 1414812756
        %v1716 = vunpack.c.0.s8 %v1715
        %v1717 = vperm.slane %v864, %v1716
        %v1719 = vunpack.c.l.s4 1987475062
        %v1720 = vunpack.c.0.s8 %v1719
        %v1721 = vperm.slane %v864, %v1720
        %v1723 = vunpack.c.l.s4 269488144
        %v1724 = vunpack.c.0.s8 %v1723
        %v1725 = vperm.slane %v869, %v1724
        %v1727 = vunpack.c.l.s4 842150450
        %v1728 = vunpack.c.0.s8 %v1727
        %v1729 = vperm.slane %v869, %v1728
        %v1731 = vunpack.c.l.s4 1414812756
        %v1732 = vunpack.c.0.s8 %v1731
        %v1733 = vperm.slane %v869, %v1732
        %v1735 = vunpack.c.l.s4 1987475062
        %v1736 = vunpack.c.0.s8 %v1735
        %v1737 = vperm.slane %v869, %v1736
        %v1739 = vunpack.c.l.s4 269488144
        %v1740 = vunpack.c.0.s8 %v1739
        %v1741 = vperm.slane %v874, %v1740
        %v1743 = vunpack.c.l.s4 842150450
        %v1744 = vunpack.c.0.s8 %v1743
        %v1745 = vperm.slane %v874, %v1744
        %v1747 = vunpack.c.l.s4 1414812756
        %v1748 = vunpack.c.0.s8 %v1747
        %v1749 = vperm.slane %v874, %v1748
        %v1751 = vunpack.c.l.s4 1987475062
        %v1752 = vunpack.c.0.s8 %v1751
        %v1753 = vperm.slane %v874, %v1752
        %v1755 = vunpack.c.l.s4 269488144
        %v1756 = vunpack.c.0.s8 %v1755
        %v1757 = vperm.slane %v879, %v1756
        %v1759 = vunpack.c.l.s4 842150450
        %v1760 = vunpack.c.0.s8 %v1759
        %v1761 = vperm.slane %v879, %v1760
        %v1763 = vunpack.c.l.s4 1414812756
        %v1764 = vunpack.c.0.s8 %v1763
        %v1765 = vperm.slane %v879, %v1764
        %v1767 = vunpack.c.l.s4 1987475062
        %v1768 = vunpack.c.0.s8 %v1767
        %v1769 = vperm.slane %v879, %v1768
        %v1771 = vunpack.c.l.s4 269488144
        %v1772 = vunpack.c.0.s8 %v1771
        %v1773 = vperm.slane %v884, %v1772
        %v1775 = vunpack.c.l.s4 842150450
        %v1776 = vunpack.c.0.s8 %v1775
        %v1777 = vperm.slane %v884, %v1776
        %v1779 = vunpack.c.l.s4 1414812756
        %v1780 = vunpack.c.0.s8 %v1779
        %v1781 = vperm.slane %v884, %v1780
        %v1783 = vunpack.c.l.s4 1987475062
        %v1784 = vunpack.c.0.s8 %v1783
        %v1785 = vperm.slane %v884, %v1784
        %v1787 = vunpack.c.l.s4 269488144
        %v1788 = vunpack.c.0.s8 %v1787
        %v1789 = vperm.slane %v889, %v1788
        %v1791 = vunpack.c.l.s4 842150450
        %v1792 = vunpack.c.0.s8 %v1791
        %v1793 = vperm.slane %v889, %v1792
        %v1795 = vunpack.c.l.s4 1414812756
        %v1796 = vunpack.c.0.s8 %v1795
        %v1797 = vperm.slane %v889, %v1796
        %v1799 = vunpack.c.l.s4 1987475062
        %v1800 = vunpack.c.0.s8 %v1799
        %v1801 = vperm.slane %v889, %v1800
        %v1803 = vunpack.c.l.s4 269488144
        %v1804 = vunpack.c.0.s8 %v1803
        %v1805 = vperm.slane %v894, %v1804
        %v1807 = vunpack.c.l.s4 842150450
        %v1808 = vunpack.c.0.s8 %v1807
        %v1809 = vperm.slane %v894, %v1808
        %v1811 = vunpack.c.l.s4 1414812756
        %v1812 = vunpack.c.0.s8 %v1811
        %v1813 = vperm.slane %v894, %v1812
        %v1815 = vunpack.c.l.s4 1987475062
        %v1816 = vunpack.c.0.s8 %v1815
        %v1817 = vperm.slane %v894, %v1816
        %v1819 = vunpack.c.l.s4 269488144
        %v1820 = vunpack.c.0.s8 %v1819
        %v1821 = vperm.slane %v899, %v1820
        %v1823 = vunpack.c.l.s4 842150450
        %v1824 = vunpack.c.0.s8 %v1823
        %v1825 = vperm.slane %v899, %v1824
        %v1827 = vunpack.c.l.s4 1414812756
        %v1828 = vunpack.c.0.s8 %v1827
        %v1829 = vperm.slane %v899, %v1828
        %v1831 = vunpack.c.l.s4 1987475062
        %v1832 = vunpack.c.0.s8 %v1831
        %v1833 = vperm.slane %v899, %v1832
        %v1835 = vunpack.c.l.s4 269488144
        %v1836 = vunpack.c.0.s8 %v1835
        %v1837 = vperm.slane %v904, %v1836
        %v1839 = vunpack.c.l.s4 842150450
        %v1840 = vunpack.c.0.s8 %v1839
        %v1841 = vperm.slane %v904, %v1840
        %v1843 = vunpack.c.l.s4 1414812756
        %v1844 = vunpack.c.0.s8 %v1843
        %v1845 = vperm.slane %v904, %v1844
        %v1847 = vunpack.c.l.s4 1987475062
        %v1848 = vunpack.c.0.s8 %v1847
        %v1849 = vperm.slane %v904, %v1848
        %v1851 = vunpack.c.l.s4 269488144
        %v1852 = vunpack.c.0.s8 %v1851
        %v1853 = vperm.slane %v909, %v1852
        %v1855 = vunpack.c.l.s4 842150450
        %v1856 = vunpack.c.0.s8 %v1855
        %v1857 = vperm.slane %v909, %v1856
        %v1859 = vunpack.c.l.s4 1414812756
        %v1860 = vunpack.c.0.s8 %v1859
        %v1861 = vperm.slane %v909, %v1860
        %v1863 = vunpack.c.l.s4 1987475062
        %v1864 = vunpack.c.0.s8 %v1863
        %v1865 = vperm.slane %v909, %v1864
        %v1867 = vunpack.c.l.s4 269488144
        %v1868 = vunpack.c.0.s8 %v1867
        %v1869 = vperm.slane %v914, %v1868
        %v1871 = vunpack.c.l.s4 842150450
        %v1872 = vunpack.c.0.s8 %v1871
        %v1873 = vperm.slane %v914, %v1872
        %v1875 = vunpack.c.l.s4 1414812756
        %v1876 = vunpack.c.0.s8 %v1875
        %v1877 = vperm.slane %v914, %v1876
        %v1879 = vunpack.c.l.s4 1987475062
        %v1880 = vunpack.c.0.s8 %v1879
        %v1881 = vperm.slane %v914, %v1880
        %v1883 = vunpack.c.l.s4 269488144
        %v1884 = vunpack.c.0.s8 %v1883
        %v1885 = vperm.slane %v919, %v1884
        %v1887 = vunpack.c.l.s4 842150450
        %v1888 = vunpack.c.0.s8 %v1887
        %v1889 = vperm.slane %v919, %v1888
        %v1891 = vunpack.c.l.s4 1414812756
        %v1892 = vunpack.c.0.s8 %v1891
        %v1893 = vperm.slane %v919, %v1892
        %v1895 = vunpack.c.l.s4 1987475062
        %v1896 = vunpack.c.0.s8 %v1895
        %v1897 = vperm.slane %v919, %v1896
        %v1899 = vunpack.c.l.s4 269488144
        %v1900 = vunpack.c.0.s8 %v1899
        %v1901 = vperm.slane %v924, %v1900
        %v1903 = vunpack.c.l.s4 842150450
        %v1904 = vunpack.c.0.s8 %v1903
        %v1905 = vperm.slane %v924, %v1904
        %v1907 = vunpack.c.l.s4 1414812756
        %v1908 = vunpack.c.0.s8 %v1907
        %v1909 = vperm.slane %v924, %v1908
        %v1911 = vunpack.c.l.s4 1987475062
        %v1912 = vunpack.c.0.s8 %v1911
        %v1913 = vperm.slane %v924, %v1912
        %v1915 = vunpack.c.l.s4 269488144
        %v1916 = vunpack.c.0.s8 %v1915
        %v1917 = vperm.slane %v929, %v1916
        %v1919 = vunpack.c.l.s4 842150450
        %v1920 = vunpack.c.0.s8 %v1919
        %v1921 = vperm.slane %v929, %v1920
        %v1923 = vunpack.c.l.s4 1414812756
        %v1924 = vunpack.c.0.s8 %v1923
        %v1925 = vperm.slane %v929, %v1924
        %v1927 = vunpack.c.l.s4 1987475062
        %v1928 = vunpack.c.0.s8 %v1927
        %v1929 = vperm.slane %v929, %v1928
        %v1931 = vunpack.c.l.s4 269488144
        %v1932 = vunpack.c.0.s8 %v1931
        %v1933 = vperm.slane %v934, %v1932
        %v1935 = vunpack.c.l.s4 842150450
        %v1936 = vunpack.c.0.s8 %v1935
        %v1937 = vperm.slane %v934, %v1936
        %v1939 = vunpack.c.l.s4 1414812756
        %v1940 = vunpack.c.0.s8 %v1939
        %v1941 = vperm.slane %v934, %v1940
        %v1943 = vunpack.c.l.s4 1987475062
        %v1944 = vunpack.c.0.s8 %v1943
        %v1945 = vperm.slane %v934, %v1944
        %v1947 = vunpack.c.l.s4 269488144
        %v1948 = vunpack.c.0.s8 %v1947
        %v1949 = vperm.slane %v939, %v1948
        %v1951 = vunpack.c.l.s4 842150450
        %v1952 = vunpack.c.0.s8 %v1951
        %v1953 = vperm.slane %v939, %v1952
        %v1955 = vunpack.c.l.s4 1414812756
        %v1956 = vunpack.c.0.s8 %v1955
        %v1957 = vperm.slane %v939, %v1956
        %v1959 = vunpack.c.l.s4 1987475062
        %v1960 = vunpack.c.0.s8 %v1959
        %v1961 = vperm.slane %v939, %v1960
        %v1963 = vunpack.c.l.s4 269488144
        %v1964 = vunpack.c.0.s8 %v1963
        %v1965 = vperm.slane %v944, %v1964
        %v1967 = vunpack.c.l.s4 842150450
        %v1968 = vunpack.c.0.s8 %v1967
        %v1969 = vperm.slane %v944, %v1968
        %v1971 = vunpack.c.l.s4 1414812756
        %v1972 = vunpack.c.0.s8 %v1971
        %v1973 = vperm.slane %v944, %v1972
        %v1975 = vunpack.c.l.s4 1987475062
        %v1976 = vunpack.c.0.s8 %v1975
        %v1977 = vperm.slane %v944, %v1976
        %v1979 = vunpack.c.l.s4 269488144
        %v1980 = vunpack.c.0.s8 %v1979
        %v1981 = vperm.slane %v949, %v1980
        %v1983 = vunpack.c.l.s4 842150450
        %v1984 = vunpack.c.0.s8 %v1983
        %v1985 = vperm.slane %v949, %v1984
        %v1987 = vunpack.c.l.s4 1414812756
        %v1988 = vunpack.c.0.s8 %v1987
        %v1989 = vperm.slane %v949, %v1988
        %v1991 = vunpack.c.l.s4 1987475062
        %v1992 = vunpack.c.0.s8 %v1991
        %v1993 = vperm.slane %v949, %v1992
        %v1995 = vunpack.c.l.s4 269488144
        %v1996 = vunpack.c.0.s8 %v1995
        %v1997 = vperm.slane %v954, %v1996
        %v1999 = vunpack.c.l.s4 842150450
        %v2000 = vunpack.c.0.s8 %v1999
        %v2001 = vperm.slane %v954, %v2000
        %v2003 = vunpack.c.l.s4 1414812756
        %v2004 = vunpack.c.0.s8 %v2003
        %v2005 = vperm.slane %v954, %v2004
        %v2007 = vunpack.c.l.s4 1987475062
        %v2008 = vunpack.c.0.s8 %v2007
        %v2009 = vperm.slane %v954, %v2008
        %v2011 = vunpack.c.l.s4 269488144
        %v2012 = vunpack.c.0.s8 %v2011
        %v2013 = vperm.slane %v959, %v2012
        %v2015 = vunpack.c.l.s4 842150450
        %v2016 = vunpack.c.0.s8 %v2015
        %v2017 = vperm.slane %v959, %v2016
        %v2019 = vunpack.c.l.s4 1414812756
        %v2020 = vunpack.c.0.s8 %v2019
        %v2021 = vperm.slane %v959, %v2020
        %v2023 = vunpack.c.l.s4 1987475062
        %v2024 = vunpack.c.0.s8 %v2023
        %v2025 = vperm.slane %v959, %v2024
        %v2027 = vunpack.c.l.s4 269488144
        %v2028 = vunpack.c.0.s8 %v2027
        %v2029 = vperm.slane %v964, %v2028
        %v2031 = vunpack.c.l.s4 842150450
        %v2032 = vunpack.c.0.s8 %v2031
        %v2033 = vperm.slane %v964, %v2032
        %v2035 = vunpack.c.l.s4 1414812756
        %v2036 = vunpack.c.0.s8 %v2035
        %v2037 = vperm.slane %v964, %v2036
        %v2039 = vunpack.c.l.s4 1987475062
        %v2040 = vunpack.c.0.s8 %v2039
        %v2041 = vperm.slane %v964, %v2040
        %v2043 = vunpack.c.l.s4 269488144
        %v2044 = vunpack.c.0.s8 %v2043
        %v2045 = vperm.slane %v969, %v2044
        %v2047 = vunpack.c.l.s4 842150450
        %v2048 = vunpack.c.0.s8 %v2047
        %v2049 = vperm.slane %v969, %v2048
        %v2051 = vunpack.c.l.s4 1414812756
        %v2052 = vunpack.c.0.s8 %v2051
        %v2053 = vperm.slane %v969, %v2052
        %v2055 = vunpack.c.l.s4 1987475062
        %v2056 = vunpack.c.0.s8 %v2055
        %v2057 = vperm.slane %v969, %v2056
        %2058 = vst [vmem:[#allocation1] ss:$4 sm:$0xff] %v1037
        %s2059 = scalar_lea.vmem [#allocation1], 1
        %2060 = vst [vmem:[%s2059] ss:$4 sm:$0xff] %v1041
        %s2061 = scalar_lea.vmem [#allocation1], 2
        %2062 = vst [vmem:[%s2061] ss:$4 sm:$0xff] %v1045
        %s2063 = scalar_lea.vmem [#allocation1], 3
        %2064 = vst [vmem:[%s2063] ss:$4 sm:$0xff] %v1049
        %s2065 = scalar_lea.vmem [#allocation1], 32
        %2066 = vst [vmem:[%s2065] ss:$4 sm:$0xff] %v1053
        %s2067 = scalar_lea.vmem [#allocation1], 33
        %2068 = vst [vmem:[%s2067] ss:$4 sm:$0xff] %v1057
        %s2069 = scalar_lea.vmem [#allocation1], 34
        %2070 = vst [vmem:[%s2069] ss:$4 sm:$0xff] %v1061
        %s2071 = scalar_lea.vmem [#allocation1], 35
        %2072 = vst [vmem:[%s2071] ss:$4 sm:$0xff] %v1065
        %v2073 = vld.sshfl [vmem:[#allocation1] sm:$0xff pattern:$0x73625140]
        %v2074 = vld.sshfl [vmem:[#allocation1 + $0x20] sm:$0xff pattern:$0x73625140]
        %2075 = vst [vmem:[#allocation1] ss:$4 sm:$0xff] %v1069
        %2076 = vst [vmem:[%s2059] ss:$4 sm:$0xff] %v1073
        %2077 = vst [vmem:[%s2061] ss:$4 sm:$0xff] %v1077
        %2078 = vst [vmem:[%s2063] ss:$4 sm:$0xff] %v1081
        %2079 = vst [vmem:[%s2065] ss:$4 sm:$0xff] %v1085
        %2080 = vst [vmem:[%s2067] ss:$4 sm:$0xff] %v1089
        %2081 = vst [vmem:[%s2069] ss:$4 sm:$0xff] %v1093
        %2082 = vst [vmem:[%s2071] ss:$4 sm:$0xff] %v1097
        %v2083 = vld.sshfl [vmem:[#allocation1] sm:$0xff pattern:$0x73625140]
        %v2084 = vld.sshfl [vmem:[#allocation1 + $0x20] sm:$0xff pattern:$0x73625140]
        %2085 = vst [vmem:[#allocation1] ss:$4 sm:$0xff] %v1101
        %2086 = vst [vmem:[%s2059] ss:$4 sm:$0xff] %v1105
        %2087 = vst [vmem:[%s2061] ss:$4 sm:$0xff] %v1109
        %2088 = vst [vmem:[%s2063] ss:$4 sm:$0xff] %v1113
        %2089 = vst [vmem:[%s2065] ss:$4 sm:$0xff] %v1117
        %2090 = vst [vmem:[%s2067] ss:$4 sm:$0xff] %v1121
        %2091 = vst [vmem:[%s2069] ss:$4 sm:$0xff] %v1125
        %2092 = vst [vmem:[%s2071] ss:$4 sm:$0xff] %v1129
        %v2093 = vld.sshfl [vmem:[#allocation1] sm:$0xff pattern:$0x73625140]
        %v2094 = vld.sshfl [vmem:[#allocation1 + $0x20] sm:$0xff pattern:$0x73625140]
        %2095 = vst [vmem:[#allocation1] ss:$4 sm:$0xff] %v1133
        %2096 = vst [vmem:[%s2059] ss:$4 sm:$0xff] %v1137
        %2097 = vst [vmem:[%s2061] ss:$4 sm:$0xff] %v1141
        %2098 = vst [vmem:[%s2063] ss:$4 sm:$0xff] %v1145
        %2099 = vst [vmem:[%s2065] ss:$4 sm:$0xff] %v1149
        %2100 = vst [vmem:[%s2067] ss:$4 sm:$0xff] %v1153
        %2101 = vst [vmem:[%s2069] ss:$4 sm:$0xff] %v1157
        %2102 = vst [vmem:[%s2071] ss:$4 sm:$0xff] %v1161
        %v2103 = vld.sshfl [vmem:[#allocation1] sm:$0xff pattern:$0x73625140]
        %v2104 = vld.sshfl [vmem:[#allocation1 + $0x20] sm:$0xff pattern:$0x73625140]
        %2105 = vst [vmem:[#allocation1] ss:$4 sm:$0xff] %v1165
        %2106 = vst [vmem:[%s2059] ss:$4 sm:$0xff] %v1169
        %2107 = vst [vmem:[%s2061] ss:$4 sm:$0xff] %v1173
        %2108 = vst [vmem:[%s2063] ss:$4 sm:$0xff] %v1177
        %2109 = vst [vmem:[%s2065] ss:$4 sm:$0xff] %v1181
        %2110 = vst [vmem:[%s2067] ss:$4 sm:$0xff] %v1185
        %2111 = vst [vmem:[%s2069] ss:$4 sm:$0xff] %v1189
        %2112 = vst [vmem:[%s2071] ss:$4 sm:$0xff] %v1193
        %v2113 = vld.sshfl [vmem:[#allocation1] sm:$0xff pattern:$0x73625140]
        %v2114 = vld.sshfl [vmem:[#allocation1 + $0x20] sm:$0xff pattern:$0x73625140]
        %2115 = vst [vmem:[#allocation1] ss:$4 sm:$0xff] %v1197
        %2116 = vst [vmem:[%s2059] ss:$4 sm:$0xff] %v1201
        %2117 = vst [vmem:[%s2061] ss:$4 sm:$0xff] %v1205
        %2118 = vst [vmem:[%s2063] ss:$4 sm:$0xff] %v1209
        %2119 = vst [vmem:[%s2065] ss:$4 sm:$0xff] %v1213
        %2120 = vst [vmem:[%s2067] ss:$4 sm:$0xff] %v1217
        %2121 = vst [vmem:[%s2069] ss:$4 sm:$0xff] %v1221
        %2122 = vst [vmem:[%s2071] ss:$4 sm:$0xff] %v1225
        %v2123 = vld.sshfl [vmem:[#allocation1] sm:$0xff pattern:$0x73625140]
        %v2124 = vld.sshfl [vmem:[#allocation1 + $0x20] sm:$0xff pattern:$0x73625140]
        %2125 = vst [vmem:[#allocation1] ss:$4 sm:$0xff] %v1229
        %2126 = vst [vmem:[%s2059] ss:$4 sm:$0xff] %v1233
        %2127 = vst [vmem:[%s2061] ss:$4 sm:$0xff] %v1237
        %2128 = vst [vmem:[%s2063] ss:$4 sm:$0xff] %v1241
        %2129 = vst [vmem:[%s2065] ss:$4 sm:$0xff] %v1245
        %2130 = vst [vmem:[%s2067] ss:$4 sm:$0xff] %v1249
        %2131 = vst [vmem:[%s2069] ss:$4 sm:$0xff] %v1253
        %2132 = vst [vmem:[%s2071] ss:$4 sm:$0xff] %v1257
        %v2133 = vld.sshfl [vmem:[#allocation1] sm:$0xff pattern:$0x73625140]
        %v2134 = vld.sshfl [vmem:[#allocation1 + $0x20] sm:$0xff pattern:$0x73625140]
        %2135 = vst [vmem:[#allocation1] ss:$4 sm:$0xff] %v1261
        %2136 = vst [vmem:[%s2059] ss:$4 sm:$0xff] %v1265
        %2137 = vst [vmem:[%s2061] ss:$4 sm:$0xff] %v1269
        %2138 = vst [vmem:[%s2063] ss:$4 sm:$0xff] %v1273
        %2139 = vst [vmem:[%s2065] ss:$4 sm:$0xff] %v1277
        %2140 = vst [vmem:[%s2067] ss:$4 sm:$0xff] %v1281
        %2141 = vst [vmem:[%s2069] ss:$4 sm:$0xff] %v1285
        %2142 = vst [vmem:[%s2071] ss:$4 sm:$0xff] %v1289
        %v2143 = vld.sshfl [vmem:[#allocation1] sm:$0xff pattern:$0x73625140]
        %v2144 = vld.sshfl [vmem:[#allocation1 + $0x20] sm:$0xff pattern:$0x73625140]
        %2145 = vst [vmem:[#allocation1] ss:$4 sm:$0xff] %v1293
        %2146 = vst [vmem:[%s2059] ss:$4 sm:$0xff] %v1297
        %2147 = vst [vmem:[%s2061] ss:$4 sm:$0xff] %v1301
        %2148 = vst [vmem:[%s2063] ss:$4 sm:$0xff] %v1305
        %2149 = vst [vmem:[%s2065] ss:$4 sm:$0xff] %v1309
        %2150 = vst [vmem:[%s2067] ss:$4 sm:$0xff] %v1313
        %2151 = vst [vmem:[%s2069] ss:$4 sm:$0xff] %v1317
        %2152 = vst [vmem:[%s2071] ss:$4 sm:$0xff] %v1321
        %v2153 = vld.sshfl [vmem:[#allocation1] sm:$0xff pattern:$0x73625140]
        %v2154 = vld.sshfl [vmem:[#allocation1 + $0x20] sm:$0xff pattern:$0x73625140]
        %2155 = vst [vmem:[#allocation1] ss:$4 sm:$0xff] %v1325
        %2156 = vst [vmem:[%s2059] ss:$4 sm:$0xff] %v1329
        %2157 = vst [vmem:[%s2061] ss:$4 sm:$0xff] %v1333
        %2158 = vst [vmem:[%s2063] ss:$4 sm:$0xff] %v1337
        %2159 = vst [vmem:[%s2065] ss:$4 sm:$0xff] %v1341
        %2160 = vst [vmem:[%s2067] ss:$4 sm:$0xff] %v1345
        %2161 = vst [vmem:[%s2069] ss:$4 sm:$0xff] %v1349
        %2162 = vst [vmem:[%s2071] ss:$4 sm:$0xff] %v1353
        %v2163 = vld.sshfl [vmem:[#allocation1] sm:$0xff pattern:$0x73625140]
        %v2164 = vld.sshfl [vmem:[#allocation1 + $0x20] sm:$0xff pattern:$0x73625140]
        %2165 = vst [vmem:[#allocation1] ss:$4 sm:$0xff] %v1357
        %2166 = vst [vmem:[%s2059] ss:$4 sm:$0xff] %v1361
        %2167 = vst [vmem:[%s2061] ss:$4 sm:$0xff] %v1365
        %2168 = vst [vmem:[%s2063] ss:$4 sm:$0xff] %v1369
        %2169 = vst [vmem:[%s2065] ss:$4 sm:$0xff] %v1373
        %2170 = vst [vmem:[%s2067] ss:$4 sm:$0xff] %v1377
        %2171 = vst [vmem:[%s2069] ss:$4 sm:$0xff] %v1381
        %2172 = vst [vmem:[%s2071] ss:$4 sm:$0xff] %v1385
        %v2173 = vld.sshfl [vmem:[#allocation1] sm:$0xff pattern:$0x73625140]
        %v2174 = vld.sshfl [vmem:[#allocation1 + $0x20] sm:$0xff pattern:$0x73625140]
        %2175 = vst [vmem:[#allocation1] ss:$4 sm:$0xff] %v1389
        %2176 = vst [vmem:[%s2059] ss:$4 sm:$0xff] %v1393
        %2177 = vst [vmem:[%s2061] ss:$4 sm:$0xff] %v1397
        %2178 = vst [vmem:[%s2063] ss:$4 sm:$0xff] %v1401
        %2179 = vst [vmem:[%s2065] ss:$4 sm:$0xff] %v1405
        %2180 = vst [vmem:[%s2067] ss:$4 sm:$0xff] %v1409
        %2181 = vst [vmem:[%s2069] ss:$4 sm:$0xff] %v1413
        %2182 = vst [vmem:[%s2071] ss:$4 sm:$0xff] %v1417
        %v2183 = vld.sshfl [vmem:[#allocation1] sm:$0xff pattern:$0x73625140]
        %v2184 = vld.sshfl [vmem:[#allocation1 + $0x20] sm:$0xff pattern:$0x73625140]
        %2185 = vst [vmem:[#allocation1] ss:$4 sm:$0xff] %v1421
        %2186 = vst [vmem:[%s2059] ss:$4 sm:$0xff] %v1425
        %2187 = vst [vmem:[%s2061] ss:$4 sm:$0xff] %v1429
        %2188 = vst [vmem:[%s2063] ss:$4 sm:$0xff] %v1433
        %2189 = vst [vmem:[%s2065] ss:$4 sm:$0xff] %v1437
        %2190 = vst [vmem:[%s2067] ss:$4 sm:$0xff] %v1441
        %2191 = vst [vmem:[%s2069] ss:$4 sm:$0xff] %v1445
        %2192 = vst [vmem:[%s2071] ss:$4 sm:$0xff] %v1449
        %v2193 = vld.sshfl [vmem:[#allocation1] sm:$0xff pattern:$0x73625140]
        %v2194 = vld.sshfl [vmem:[#allocation1 + $0x20] sm:$0xff pattern:$0x73625140]
        %2195 = vst [vmem:[#allocation1] ss:$4 sm:$0xff] %v1453
        %2196 = vst [vmem:[%s2059] ss:$4 sm:$0xff] %v1457
        %2197 = vst [vmem:[%s2061] ss:$4 sm:$0xff] %v1461
        %2198 = vst [vmem:[%s2063] ss:$4 sm:$0xff] %v1465
        %2199 = vst [vmem:[%s2065] ss:$4 sm:$0xff] %v1469
        %2200 = vst [vmem:[%s2067] ss:$4 sm:$0xff] %v1473
        %2201 = vst [vmem:[%s2069] ss:$4 sm:$0xff] %v1477
        %2202 = vst [vmem:[%s2071] ss:$4 sm:$0xff] %v1481
        %v2203 = vld.sshfl [vmem:[#allocation1] sm:$0xff pattern:$0x73625140]
        %v2204 = vld.sshfl [vmem:[#allocation1 + $0x20] sm:$0xff pattern:$0x73625140]
        %2205 = vst [vmem:[#allocation1] ss:$4 sm:$0xff] %v1485
        %2206 = vst [vmem:[%s2059] ss:$4 sm:$0xff] %v1489
        %2207 = vst [vmem:[%s2061] ss:$4 sm:$0xff] %v1493
        %2208 = vst [vmem:[%s2063] ss:$4 sm:$0xff] %v1497
        %2209 = vst [vmem:[%s2065] ss:$4 sm:$0xff] %v1501
        %2210 = vst [vmem:[%s2067] ss:$4 sm:$0xff] %v1505
        %2211 = vst [vmem:[%s2069] ss:$4 sm:$0xff] %v1509
        %2212 = vst [vmem:[%s2071] ss:$4 sm:$0xff] %v1513
        %v2213 = vld.sshfl [vmem:[#allocation1] sm:$0xff pattern:$0x73625140]
        %v2214 = vld.sshfl [vmem:[#allocation1 + $0x20] sm:$0xff pattern:$0x73625140]
        %2215 = vst [vmem:[#allocation1] ss:$4 sm:$0xff] %v1517
        %2216 = vst [vmem:[%s2059] ss:$4 sm:$0xff] %v1521
        %2217 = vst [vmem:[%s2061] ss:$4 sm:$0xff] %v1525
        %2218 = vst [vmem:[%s2063] ss:$4 sm:$0xff] %v1529
        %2219 = vst [vmem:[%s2065] ss:$4 sm:$0xff] %v1533
        %2220 = vst [vmem:[%s2067] ss:$4 sm:$0xff] %v1537
        %2221 = vst [vmem:[%s2069] ss:$4 sm:$0xff] %v1541
        %2222 = vst [vmem:[%s2071] ss:$4 sm:$0xff] %v1545
        %v2223 = vld.sshfl [vmem:[#allocation1] sm:$0xff pattern:$0x73625140]
        %v2224 = vld.sshfl [vmem:[#allocation1 + $0x20] sm:$0xff pattern:$0x73625140]
        %2225 = vst [vmem:[#allocation1] ss:$4 sm:$0xff] %v1549
        %2226 = vst [vmem:[%s2059] ss:$4 sm:$0xff] %v1553
        %2227 = vst [vmem:[%s2061] ss:$4 sm:$0xff] %v1557
        %2228 = vst [vmem:[%s2063] ss:$4 sm:$0xff] %v1561
        %2229 = vst [vmem:[%s2065] ss:$4 sm:$0xff] %v1565
        %2230 = vst [vmem:[%s2067] ss:$4 sm:$0xff] %v1569
        %2231 = vst [vmem:[%s2069] ss:$4 sm:$0xff] %v1573
        %2232 = vst [vmem:[%s2071] ss:$4 sm:$0xff] %v1577
        %v2233 = vld.sshfl [vmem:[#allocation1] sm:$0xff pattern:$0x73625140]
        %v2234 = vld.sshfl [vmem:[#allocation1 + $0x20] sm:$0xff pattern:$0x73625140]
        %2235 = vst [vmem:[#allocation1] ss:$4 sm:$0xff] %v1581
        %2236 = vst [vmem:[%s2059] ss:$4 sm:$0xff] %v1585
        %2237 = vst [vmem:[%s2061] ss:$4 sm:$0xff] %v1589
        %2238 = vst [vmem:[%s2063] ss:$4 sm:$0xff] %v1593
        %2239 = vst [vmem:[%s2065] ss:$4 sm:$0xff] %v1597
        %2240 = vst [vmem:[%s2067] ss:$4 sm:$0xff] %v1601
        %2241 = vst [vmem:[%s2069] ss:$4 sm:$0xff] %v1605
        %2242 = vst [vmem:[%s2071] ss:$4 sm:$0xff] %v1609
        %v2243 = vld.sshfl [vmem:[#allocation1] sm:$0xff pattern:$0x73625140]
        %v2244 = vld.sshfl [vmem:[#allocation1 + $0x20] sm:$0xff pattern:$0x73625140]
        %2245 = vst [vmem:[#allocation1] ss:$4 sm:$0xff] %v1613
        %2246 = vst [vmem:[%s2059] ss:$4 sm:$0xff] %v1617
        %2247 = vst [vmem:[%s2061] ss:$4 sm:$0xff] %v1621
        %2248 = vst [vmem:[%s2063] ss:$4 sm:$0xff] %v1625
        %2249 = vst [vmem:[%s2065] ss:$4 sm:$0xff] %v1629
        %2250 = vst [vmem:[%s2067] ss:$4 sm:$0xff] %v1633
        %2251 = vst [vmem:[%s2069] ss:$4 sm:$0xff] %v1637
        %2252 = vst [vmem:[%s2071] ss:$4 sm:$0xff] %v1641
        %v2253 = vld.sshfl [vmem:[#allocation1] sm:$0xff pattern:$0x73625140]
        %v2254 = vld.sshfl [vmem:[#allocation1 + $0x20] sm:$0xff pattern:$0x73625140]
        %2255 = vst [vmem:[#allocation1] ss:$4 sm:$0xff] %v1645
        %2256 = vst [vmem:[%s2059] ss:$4 sm:$0xff] %v1649
        %2257 = vst [vmem:[%s2061] ss:$4 sm:$0xff] %v1653
        %2258 = vst [vmem:[%s2063] ss:$4 sm:$0xff] %v1657
        %2259 = vst [vmem:[%s2065] ss:$4 sm:$0xff] %v1661
        %2260 = vst [vmem:[%s2067] ss:$4 sm:$0xff] %v1665
        %2261 = vst [vmem:[%s2069] ss:$4 sm:$0xff] %v1669
        %2262 = vst [vmem:[%s2071] ss:$4 sm:$0xff] %v1673
        %v2263 = vld.sshfl [vmem:[#allocation1] sm:$0xff pattern:$0x73625140]
        %v2264 = vld.sshfl [vmem:[#allocation1 + $0x20] sm:$0xff pattern:$0x73625140]
        %2265 = vst [vmem:[#allocation1] ss:$4 sm:$0xff] %v1677
        %2266 = vst [vmem:[%s2059] ss:$4 sm:$0xff] %v1681
        %2267 = vst [vmem:[%s2061] ss:$4 sm:$0xff] %v1685
        %2268 = vst [vmem:[%s2063] ss:$4 sm:$0xff] %v1689
        %2269 = vst [vmem:[%s2065] ss:$4 sm:$0xff] %v1693
        %2270 = vst [vmem:[%s2067] ss:$4 sm:$0xff] %v1697
        %2271 = vst [vmem:[%s2069] ss:$4 sm:$0xff] %v1701
        %2272 = vst [vmem:[%s2071] ss:$4 sm:$0xff] %v1705
        %v2273 = vld.sshfl [vmem:[#allocation1] sm:$0xff pattern:$0x73625140]
        %v2274 = vld.sshfl [vmem:[#allocation1 + $0x20] sm:$0xff pattern:$0x73625140]
        %2275 = vst [vmem:[#allocation1] ss:$4 sm:$0xff] %v1709
        %2276 = vst [vmem:[%s2059] ss:$4 sm:$0xff] %v1713
        %2277 = vst [vmem:[%s2061] ss:$4 sm:$0xff] %v1717
        %2278 = vst [vmem:[%s2063] ss:$4 sm:$0xff] %v1721
        %2279 = vst [vmem:[%s2065] ss:$4 sm:$0xff] %v1725
        %2280 = vst [vmem:[%s2067] ss:$4 sm:$0xff] %v1729
        %2281 = vst [vmem:[%s2069] ss:$4 sm:$0xff] %v1733
        %2282 = vst [vmem:[%s2071] ss:$4 sm:$0xff] %v1737
        %v2283 = vld.sshfl [vmem:[#allocation1] sm:$0xff pattern:$0x73625140]
        %v2284 = vld.sshfl [vmem:[#allocation1 + $0x20] sm:$0xff pattern:$0x73625140]
        %2285 = vst [vmem:[#allocation1] ss:$4 sm:$0xff] %v1741
        %2286 = vst [vmem:[%s2059] ss:$4 sm:$0xff] %v1745
        %2287 = vst [vmem:[%s2061] ss:$4 sm:$0xff] %v1749
        %2288 = vst [vmem:[%s2063] ss:$4 sm:$0xff] %v1753
        %2289 = vst [vmem:[%s2065] ss:$4 sm:$0xff] %v1757
        %2290 = vst [vmem:[%s2067] ss:$4 sm:$0xff] %v1761
        %2291 = vst [vmem:[%s2069] ss:$4 sm:$0xff] %v1765
        %2292 = vst [vmem:[%s2071] ss:$4 sm:$0xff] %v1769
        %v2293 = vld.sshfl [vmem:[#allocation1] sm:$0xff pattern:$0x73625140]
        %v2294 = vld.sshfl [vmem:[#allocation1 + $0x20] sm:$0xff pattern:$0x73625140]
        %2295 = vst [vmem:[#allocation1] ss:$4 sm:$0xff] %v1773
        %2296 = vst [vmem:[%s2059] ss:$4 sm:$0xff] %v1777
        %2297 = vst [vmem:[%s2061] ss:$4 sm:$0xff] %v1781
        %2298 = vst [vmem:[%s2063] ss:$4 sm:$0xff] %v1785
        %2299 = vst [vmem:[%s2065] ss:$4 sm:$0xff] %v1789
        %2300 = vst [vmem:[%s2067] ss:$4 sm:$0xff] %v1793
        %2301 = vst [vmem:[%s2069] ss:$4 sm:$0xff] %v1797
        %2302 = vst [vmem:[%s2071] ss:$4 sm:$0xff] %v1801
        %v2303 = vld.sshfl [vmem:[#allocation1] sm:$0xff pattern:$0x73625140]
        %v2304 = vld.sshfl [vmem:[#allocation1 + $0x20] sm:$0xff pattern:$0x73625140]
        %2305 = vst [vmem:[#allocation1] ss:$4 sm:$0xff] %v1805
        %2306 = vst [vmem:[%s2059] ss:$4 sm:$0xff] %v1809
        %2307 = vst [vmem:[%s2061] ss:$4 sm:$0xff] %v1813
        %2308 = vst [vmem:[%s2063] ss:$4 sm:$0xff] %v1817
        %2309 = vst [vmem:[%s2065] ss:$4 sm:$0xff] %v1821
        %2310 = vst [vmem:[%s2067] ss:$4 sm:$0xff] %v1825
        %2311 = vst [vmem:[%s2069] ss:$4 sm:$0xff] %v1829
        %2312 = vst [vmem:[%s2071] ss:$4 sm:$0xff] %v1833
        %v2313 = vld.sshfl [vmem:[#allocation1] sm:$0xff pattern:$0x73625140]
        %v2314 = vld.sshfl [vmem:[#allocation1 + $0x20] sm:$0xff pattern:$0x73625140]
        %2315 = vst [vmem:[#allocation1] ss:$4 sm:$0xff] %v1837
        %2316 = vst [vmem:[%s2059] ss:$4 sm:$0xff] %v1841
        %2317 = vst [vmem:[%s2061] ss:$4 sm:$0xff] %v1845
        %2318 = vst [vmem:[%s2063] ss:$4 sm:$0xff] %v1849
        %2319 = vst [vmem:[%s2065] ss:$4 sm:$0xff] %v1853
        %2320 = vst [vmem:[%s2067] ss:$4 sm:$0xff] %v1857
        %2321 = vst [vmem:[%s2069] ss:$4 sm:$0xff] %v1861
        %2322 = vst [vmem:[%s2071] ss:$4 sm:$0xff] %v1865
        %v2323 = vld.sshfl [vmem:[#allocation1] sm:$0xff pattern:$0x73625140]
        %v2324 = vld.sshfl [vmem:[#allocation1 + $0x20] sm:$0xff pattern:$0x73625140]
        %2325 = vst [vmem:[#allocation1] ss:$4 sm:$0xff] %v1869
        %2326 = vst [vmem:[%s2059] ss:$4 sm:$0xff] %v1873
        %2327 = vst [vmem:[%s2061] ss:$4 sm:$0xff] %v1877
        %2328 = vst [vmem:[%s2063] ss:$4 sm:$0xff] %v1881
        %2329 = vst [vmem:[%s2065] ss:$4 sm:$0xff] %v1885
        %2330 = vst [vmem:[%s2067] ss:$4 sm:$0xff] %v1889
        %2331 = vst [vmem:[%s2069] ss:$4 sm:$0xff] %v1893
        %2332 = vst [vmem:[%s2071] ss:$4 sm:$0xff] %v1897
        %v2333 = vld.sshfl [vmem:[#allocation1] sm:$0xff pattern:$0x73625140]
        %v2334 = vld.sshfl [vmem:[#allocation1 + $0x20] sm:$0xff pattern:$0x73625140]
        %2335 = vst [vmem:[#allocation1] ss:$4 sm:$0xff] %v1901
        %2336 = vst [vmem:[%s2059] ss:$4 sm:$0xff] %v1905
        %2337 = vst [vmem:[%s2061] ss:$4 sm:$0xff] %v1909
        %2338 = vst [vmem:[%s2063] ss:$4 sm:$0xff] %v1913
        %2339 = vst [vmem:[%s2065] ss:$4 sm:$0xff] %v1917
        %2340 = vst [vmem:[%s2067] ss:$4 sm:$0xff] %v1921
        %2341 = vst [vmem:[%s2069] ss:$4 sm:$0xff] %v1925
        %2342 = vst [vmem:[%s2071] ss:$4 sm:$0xff] %v1929
        %v2343 = vld.sshfl [vmem:[#allocation1] sm:$0xff pattern:$0x73625140]
        %v2344 = vld.sshfl [vmem:[#allocation1 + $0x20] sm:$0xff pattern:$0x73625140]
        %2345 = vst [vmem:[#allocation1] ss:$4 sm:$0xff] %v1933
        %2346 = vst [vmem:[%s2059] ss:$4 sm:$0xff] %v1937
        %2347 = vst [vmem:[%s2061] ss:$4 sm:$0xff] %v1941
        %2348 = vst [vmem:[%s2063] ss:$4 sm:$0xff] %v1945
        %2349 = vst [vmem:[%s2065] ss:$4 sm:$0xff] %v1949
        %2350 = vst [vmem:[%s2067] ss:$4 sm:$0xff] %v1953
        %2351 = vst [vmem:[%s2069] ss:$4 sm:$0xff] %v1957
        %2352 = vst [vmem:[%s2071] ss:$4 sm:$0xff] %v1961
        %v2353 = vld.sshfl [vmem:[#allocation1] sm:$0xff pattern:$0x73625140]
        %v2354 = vld.sshfl [vmem:[#allocation1 + $0x20] sm:$0xff pattern:$0x73625140]
        %2355 = vst [vmem:[#allocation1] ss:$4 sm:$0xff] %v1965
        %2356 = vst [vmem:[%s2059] ss:$4 sm:$0xff] %v1969
        %2357 = vst [vmem:[%s2061] ss:$4 sm:$0xff] %v1973
        %2358 = vst [vmem:[%s2063] ss:$4 sm:$0xff] %v1977
        %2359 = vst [vmem:[%s2065] ss:$4 sm:$0xff] %v1981
        %2360 = vst [vmem:[%s2067] ss:$4 sm:$0xff] %v1985
        %2361 = vst [vmem:[%s2069] ss:$4 sm:$0xff] %v1989
        %2362 = vst [vmem:[%s2071] ss:$4 sm:$0xff] %v1993
        %v2363 = vld.sshfl [vmem:[#allocation1] sm:$0xff pattern:$0x73625140]
        %v2364 = vld.sshfl [vmem:[#allocation1 + $0x20] sm:$0xff pattern:$0x73625140]
        %2365 = vst [vmem:[#allocation1] ss:$4 sm:$0xff] %v1997
        %2366 = vst [vmem:[%s2059] ss:$4 sm:$0xff] %v2001
        %2367 = vst [vmem:[%s2061] ss:$4 sm:$0xff] %v2005
        %2368 = vst [vmem:[%s2063] ss:$4 sm:$0xff] %v2009
        %2369 = vst [vmem:[%s2065] ss:$4 sm:$0xff] %v2013
        %2370 = vst [vmem:[%s2067] ss:$4 sm:$0xff] %v2017
        %2371 = vst [vmem:[%s2069] ss:$4 sm:$0xff] %v2021
        %2372 = vst [vmem:[%s2071] ss:$4 sm:$0xff] %v2025
        %v2373 = vld.sshfl [vmem:[#allocation1] sm:$0xff pattern:$0x73625140]
        %v2374 = vld.sshfl [vmem:[#allocation1 + $0x20] sm:$0xff pattern:$0x73625140]
        %2375 = vst [vmem:[#allocation1] ss:$4 sm:$0xff] %v2029
        %2376 = vst [vmem:[%s2059] ss:$4 sm:$0xff] %v2033
        %2377 = vst [vmem:[%s2061] ss:$4 sm:$0xff] %v2037
        %2378 = vst [vmem:[%s2063] ss:$4 sm:$0xff] %v2041
        %2379 = vst [vmem:[%s2065] ss:$4 sm:$0xff] %v2045
        %2380 = vst [vmem:[%s2067] ss:$4 sm:$0xff] %v2049
        %2381 = vst [vmem:[%s2069] ss:$4 sm:$0xff] %v2053
        %2382 = vst [vmem:[%s2071] ss:$4 sm:$0xff] %v2057
        %v2383 = vld.sshfl [vmem:[#allocation1] sm:$0xff pattern:$0x73625140]
        %v2384 = vld.sshfl [vmem:[#allocation1 + $0x20] sm:$0xff pattern:$0x73625140]
        %2385 = vset.pattern.permute.xlu0 0
        %2386 = vperm.xlu0 %2385, %v2073
        %v2387 = vpop.permute.xlu0 %2386
        %2388 = vset.pattern.permute.xlu0 0
        %2389 = vperm.xlu0 %2388, %v2074
        %v2390 = vpop.permute.xlu0 %2389
        %2391 = vset.pattern.permute.xlu0 0
        %2392 = vperm.xlu0 %2391, %v2083
        %v2393 = vpop.permute.xlu0 %2392
        %2394 = vset.pattern.permute.xlu0 0
        %2395 = vperm.xlu0 %2394, %v2084
        %v2396 = vpop.permute.xlu0 %2395
        %2397 = vset.pattern.permute.xlu0 0
        %2398 = vperm.xlu0 %2397, %v2093
        %v2399 = vpop.permute.xlu0 %2398
        %2400 = vset.pattern.permute.xlu0 0
        %2401 = vperm.xlu0 %2400, %v2094
        %v2402 = vpop.permute.xlu0 %2401
        %2403 = vset.pattern.permute.xlu0 0
        %2404 = vperm.xlu0 %2403, %v2103
        %v2405 = vpop.permute.xlu0 %2404
        %2406 = vset.pattern.permute.xlu0 0
        %2407 = vperm.xlu0 %2406, %v2104
        %v2408 = vpop.permute.xlu0 %2407
        %2409 = vset.pattern.permute.xlu0 0
        %2410 = vperm.xlu0 %2409, %v2113
        %v2411 = vpop.permute.xlu0 %2410
        %2412 = vset.pattern.permute.xlu0 0
        %2413 = vperm.xlu0 %2412, %v2114
        %v2414 = vpop.permute.xlu0 %2413
        %2415 = vset.pattern.permute.xlu0 0
        %2416 = vperm.xlu0 %2415, %v2123
        %v2417 = vpop.permute.xlu0 %2416
        %2418 = vset.pattern.permute.xlu0 0
        %2419 = vperm.xlu0 %2418, %v2124
        %v2420 = vpop.permute.xlu0 %2419
        %2421 = vset.pattern.permute.xlu0 0
        %2422 = vperm.xlu0 %2421, %v2133
        %v2423 = vpop.permute.xlu0 %2422
        %2424 = vset.pattern.permute.xlu0 0
        %2425 = vperm.xlu0 %2424, %v2134
        %v2426 = vpop.permute.xlu0 %2425
        %2427 = vset.pattern.permute.xlu0 0
        %2428 = vperm.xlu0 %2427, %v2143
        %v2429 = vpop.permute.xlu0 %2428
        %2430 = vset.pattern.permute.xlu0 0
        %2431 = vperm.xlu0 %2430, %v2144
        %v2432 = vpop.permute.xlu0 %2431
        %2433 = vset.pattern.permute.xlu0 0
        %2434 = vperm.xlu0 %2433, %v2153
        %v2435 = vpop.permute.xlu0 %2434
        %2436 = vset.pattern.permute.xlu0 0
        %2437 = vperm.xlu0 %2436, %v2154
        %v2438 = vpop.permute.xlu0 %2437
        %2439 = vset.pattern.permute.xlu0 0
        %2440 = vperm.xlu0 %2439, %v2163
        %v2441 = vpop.permute.xlu0 %2440
        %2442 = vset.pattern.permute.xlu0 0
        %2443 = vperm.xlu0 %2442, %v2164
        %v2444 = vpop.permute.xlu0 %2443
        %2445 = vset.pattern.permute.xlu0 0
        %2446 = vperm.xlu0 %2445, %v2173
        %v2447 = vpop.permute.xlu0 %2446
        %2448 = vset.pattern.permute.xlu0 0
        %2449 = vperm.xlu0 %2448, %v2174
        %v2450 = vpop.permute.xlu0 %2449
        %2451 = vset.pattern.permute.xlu0 0
        %2452 = vperm.xlu0 %2451, %v2183
        %v2453 = vpop.permute.xlu0 %2452
        %2454 = vset.pattern.permute.xlu0 0
        %2455 = vperm.xlu0 %2454, %v2184
        %v2456 = vpop.permute.xlu0 %2455
        %2457 = vset.pattern.permute.xlu0 0
        %2458 = vperm.xlu0 %2457, %v2193
        %v2459 = vpop.permute.xlu0 %2458
        %2460 = vset.pattern.permute.xlu0 0
        %2461 = vperm.xlu0 %2460, %v2194
        %v2462 = vpop.permute.xlu0 %2461
        %2463 = vset.pattern.permute.xlu0 0
        %2464 = vperm.xlu0 %2463, %v2203
        %v2465 = vpop.permute.xlu0 %2464
        %2466 = vset.pattern.permute.xlu0 0
        %2467 = vperm.xlu0 %2466, %v2204
        %v2468 = vpop.permute.xlu0 %2467
        %2469 = vset.pattern.permute.xlu0 0
        %2470 = vperm.xlu0 %2469, %v2213
        %v2471 = vpop.permute.xlu0 %2470
        %2472 = vset.pattern.permute.xlu0 0
        %2473 = vperm.xlu0 %2472, %v2214
        %v2474 = vpop.permute.xlu0 %2473
        %2475 = vset.pattern.permute.xlu0 0
        %2476 = vperm.xlu0 %2475, %v2223
        %v2477 = vpop.permute.xlu0 %2476
        %2478 = vset.pattern.permute.xlu0 0
        %2479 = vperm.xlu0 %2478, %v2224
        %v2480 = vpop.permute.xlu0 %2479
        %2481 = vset.pattern.permute.xlu0 0
        %2482 = vperm.xlu0 %2481, %v2233
        %v2483 = vpop.permute.xlu0 %2482
        %2484 = vset.pattern.permute.xlu0 0
        %2485 = vperm.xlu0 %2484, %v2234
        %v2486 = vpop.permute.xlu0 %2485
        %2487 = vset.pattern.permute.xlu0 0
        %2488 = vperm.xlu0 %2487, %v2243
        %v2489 = vpop.permute.xlu0 %2488
        %2490 = vset.pattern.permute.xlu0 0
        %2491 = vperm.xlu0 %2490, %v2244
        %v2492 = vpop.permute.xlu0 %2491
        %2493 = vset.pattern.permute.xlu0 0
        %2494 = vperm.xlu0 %2493, %v2253
        %v2495 = vpop.permute.xlu0 %2494
        %2496 = vset.pattern.permute.xlu0 0
        %2497 = vperm.xlu0 %2496, %v2254
        %v2498 = vpop.permute.xlu0 %2497
        %2499 = vset.pattern.permute.xlu0 0
        %2500 = vperm.xlu0 %2499, %v2263
        %v2501 = vpop.permute.xlu0 %2500
        %2502 = vset.pattern.permute.xlu0 0
        %2503 = vperm.xlu0 %2502, %v2264
        %v2504 = vpop.permute.xlu0 %2503
        %2505 = vset.pattern.permute.xlu0 0
        %2506 = vperm.xlu0 %2505, %v2273
        %v2507 = vpop.permute.xlu0 %2506
        %2508 = vset.pattern.permute.xlu0 0
        %2509 = vperm.xlu0 %2508, %v2274
        %v2510 = vpop.permute.xlu0 %2509
        %2511 = vset.pattern.permute.xlu0 0
        %2512 = vperm.xlu0 %2511, %v2283
        %v2513 = vpop.permute.xlu0 %2512
        %2514 = vset.pattern.permute.xlu0 0
        %2515 = vperm.xlu0 %2514, %v2284
        %v2516 = vpop.permute.xlu0 %2515
        %2517 = vset.pattern.permute.xlu0 0
        %2518 = vperm.xlu0 %2517, %v2293
        %v2519 = vpop.permute.xlu0 %2518
        %2520 = vset.pattern.permute.xlu0 0
        %2521 = vperm.xlu0 %2520, %v2294
        %v2522 = vpop.permute.xlu0 %2521
        %2523 = vset.pattern.permute.xlu0 0
        %2524 = vperm.xlu0 %2523, %v2303
        %v2525 = vpop.permute.xlu0 %2524
        %2526 = vset.pattern.permute.xlu0 0
        %2527 = vperm.xlu0 %2526, %v2304
        %v2528 = vpop.permute.xlu0 %2527
        %2529 = vset.pattern.permute.xlu0 0
        %2530 = vperm.xlu0 %2529, %v2313
        %v2531 = vpop.permute.xlu0 %2530
        %2532 = vset.pattern.permute.xlu0 0
        %2533 = vperm.xlu0 %2532, %v2314
        %v2534 = vpop.permute.xlu0 %2533
        %2535 = vset.pattern.permute.xlu0 0
        %2536 = vperm.xlu0 %2535, %v2323
        %v2537 = vpop.permute.xlu0 %2536
        %2538 = vset.pattern.permute.xlu0 0
        %2539 = vperm.xlu0 %2538, %v2324
        %v2540 = vpop.permute.xlu0 %2539
        %2541 = vset.pattern.permute.xlu0 0
        %2542 = vperm.xlu0 %2541, %v2333
        %v2543 = vpop.permute.xlu0 %2542
        %2544 = vset.pattern.permute.xlu0 0
        %2545 = vperm.xlu0 %2544, %v2334
        %v2546 = vpop.permute.xlu0 %2545
        %2547 = vset.pattern.permute.xlu0 0
        %2548 = vperm.xlu0 %2547, %v2343
        %v2549 = vpop.permute.xlu0 %2548
        %2550 = vset.pattern.permute.xlu0 0
        %2551 = vperm.xlu0 %2550, %v2344
        %v2552 = vpop.permute.xlu0 %2551
        %2553 = vset.pattern.permute.xlu0 0
        %2554 = vperm.xlu0 %2553, %v2353
        %v2555 = vpop.permute.xlu0 %2554
        %2556 = vset.pattern.permute.xlu0 0
        %2557 = vperm.xlu0 %2556, %v2354
        %v2558 = vpop.permute.xlu0 %2557
        %2559 = vset.pattern.permute.xlu0 0
        %2560 = vperm.xlu0 %2559, %v2363
        %v2561 = vpop.permute.xlu0 %2560
        %2562 = vset.pattern.permute.xlu0 0
        %2563 = vperm.xlu0 %2562, %v2364
        %v2564 = vpop.permute.xlu0 %2563
        %2565 = vset.pattern.permute.xlu0 0
        %2566 = vperm.xlu0 %2565, %v2373
        %v2567 = vpop.permute.xlu0 %2566
        %2568 = vset.pattern.permute.xlu0 0
        %2569 = vperm.xlu0 %2568, %v2374
        %v2570 = vpop.permute.xlu0 %2569
        %2571 = vset.pattern.permute.xlu0 0
        %2572 = vperm.xlu0 %2571, %v2383
        %v2573 = vpop.permute.xlu0 %2572
        %2574 = vset.pattern.permute.xlu0 0
        %2575 = vperm.xlu0 %2574, %v2384
        %v2576 = vpop.permute.xlu0 %2575
        %v2577 = vlaneseq
        %v2578 = vand.u32 %v2577, 127
        %v2579 = vperm.slane %v2387, %v2578
        %v2580 = vadd.s32 %v2578, 4294967288
        %v2581 = vperm.slane %v2390, %v2580
        %vm2582 = vcmask 130112
        %v2583 = vsel %vm2582, %v2581, %v2579
        %v2584 = vadd.s32 %v2578, 4294967280
        %v2585 = vperm.slane %v2393, %v2584
        %vm2586 = vcmask 195712
        %v2587 = vsel %vm2586, %v2585, %v2583
        %v2588 = vadd.s32 %v2578, 4294967272
        %v2589 = vperm.slane %v2396, %v2588
        %vm2590 = vcmask 261312
        %v2591 = vsel %vm2590, %v2589, %v2587
        %v2592 = vadd.s32 %v2578, 4294967264
        %v2593 = vperm.slane %v2399, %v2592
        %vm2594 = vcmask 326912
        %v2595 = vsel %vm2594, %v2593, %v2591
        %v2596 = vadd.s32 %v2578, 4294967256
        %v2597 = vperm.slane %v2402, %v2596
        %vm2598 = vcmask 392512
        %v2599 = vsel %vm2598, %v2597, %v2595
        %v2600 = vadd.s32 %v2578, 4294967248
        %v2601 = vperm.slane %v2405, %v2600
        %vm2602 = vcmask 458112
        %v2603 = vsel %vm2602, %v2601, %v2599
        %v2604 = vadd.s32 %v2578, 4294967240
        %v2605 = vperm.slane %v2408, %v2604
        %vm2606 = vcmask 523712
        %v2607 = vsel %vm2606, %v2605, %v2603
        %v2608 = vadd.s32 %v2578, 4294967232
        %v2609 = vperm.slane %v2411, %v2608
        %vm2610 = vcmask 589312
        %v2611 = vsel %vm2610, %v2609, %v2607
        %v2612 = vadd.s32 %v2578, 4294967224
        %v2613 = vperm.slane %v2414, %v2612
        %vm2614 = vcmask 654912
        %v2615 = vsel %vm2614, %v2613, %v2611
        %v2616 = vadd.s32 %v2578, 4294967216
        %v2617 = vperm.slane %v2417, %v2616
        %vm2618 = vcmask 720512
        %v2619 = vsel %vm2618, %v2617, %v2615
        %v2620 = vadd.s32 %v2578, 4294967208
        %v2621 = vperm.slane %v2420, %v2620
        %vm2622 = vcmask 786112
        %v2623 = vsel %vm2622, %v2621, %v2619
        %v2624 = vadd.s32 %v2578, 4294967200
        %v2625 = vperm.slane %v2423, %v2624
        %vm2626 = vcmask 851712
        %v2627 = vsel %vm2626, %v2625, %v2623
        %v2628 = vadd.s32 %v2578, 4294967192
        %v2629 = vperm.slane %v2426, %v2628
        %vm2630 = vcmask 917312
        %v2631 = vsel %vm2630, %v2629, %v2627
        %v2632 = vadd.s32 %v2578, 4294967184
        %v2633 = vperm.slane %v2429, %v2632
        %vm2634 = vcmask 982912
        %v2635 = vsel %vm2634, %v2633, %v2631
        %v2636 = vadd.s32 %v2578, 4294967176
        %v2637 = vperm.slane %v2432, %v2636
        %vm2638 = vcmask 1048512
        %v2639 = vsel %vm2638, %v2637, %v2635
        %v2640 = vperm.slane %v2435, %v2578
        %v2641 = vperm.slane %v2438, %v2580
        %v2642 = vsel %vm2582, %v2641, %v2640
        %v2643 = vperm.slane %v2441, %v2584
        %v2644 = vsel %vm2586, %v2643, %v2642
        %v2645 = vperm.slane %v2444, %v2588
        %v2646 = vsel %vm2590, %v2645, %v2644
        %v2647 = vperm.slane %v2447, %v2592
        %v2648 = vsel %vm2594, %v2647, %v2646
        %v2649 = vperm.slane %v2450, %v2596
        %v2650 = vsel %vm2598, %v2649, %v2648
        %v2651 = vperm.slane %v2453, %v2600
        %v2652 = vsel %vm2602, %v2651, %v2650
        %v2653 = vperm.slane %v2456, %v2604
        %v2654 = vsel %vm2606, %v2653, %v2652
        %v2655 = vperm.slane %v2459, %v2608
        %v2656 = vsel %vm2610, %v2655, %v2654
        %v2657 = vperm.slane %v2462, %v2612
        %v2658 = vsel %vm2614, %v2657, %v2656
        %v2659 = vperm.slane %v2465, %v2616
        %v2660 = vsel %vm2618, %v2659, %v2658
        %v2661 = vperm.slane %v2468, %v2620
        %v2662 = vsel %vm2622, %v2661, %v2660
        %v2663 = vperm.slane %v2471, %v2624
        %v2664 = vsel %vm2626, %v2663, %v2662
        %v2665 = vperm.slane %v2474, %v2628
        %v2666 = vsel %vm2630, %v2665, %v2664
        %v2667 = vperm.slane %v2477, %v2632
        %v2668 = vsel %vm2634, %v2667, %v2666
        %v2669 = vperm.slane %v2480, %v2636
        %v2670 = vsel %vm2638, %v2669, %v2668
        %v2671 = vperm.slane %v2483, %v2578
        %v2672 = vperm.slane %v2486, %v2580
        %v2673 = vsel %vm2582, %v2672, %v2671
        %v2674 = vperm.slane %v2489, %v2584
        %v2675 = vsel %vm2586, %v2674, %v2673
        %v2676 = vperm.slane %v2492, %v2588
        %v2677 = vsel %vm2590, %v2676, %v2675
        %v2678 = vperm.slane %v2495, %v2592
        %v2679 = vsel %vm2594, %v2678, %v2677
        %v2680 = vperm.slane %v2498, %v2596
        %v2681 = vsel %vm2598, %v2680, %v2679
        %v2682 = vperm.slane %v2501, %v2600
        %v2683 = vsel %vm2602, %v2682, %v2681
        %v2684 = vperm.slane %v2504, %v2604
        %v2685 = vsel %vm2606, %v2684, %v2683
        %v2686 = vperm.slane %v2507, %v2608
        %v2687 = vsel %vm2610, %v2686, %v2685
        %v2688 = vperm.slane %v2510, %v2612
        %v2689 = vsel %vm2614, %v2688, %v2687
        %v2690 = vperm.slane %v2513, %v2616
        %v2691 = vsel %vm2618, %v2690, %v2689
        %v2692 = vperm.slane %v2516, %v2620
        %v2693 = vsel %vm2622, %v2692, %v2691
        %v2694 = vperm.slane %v2519, %v2624
        %v2695 = vsel %vm2626, %v2694, %v2693
        %v2696 = vperm.slane %v2522, %v2628
        %v2697 = vsel %vm2630, %v2696, %v2695
        %v2698 = vperm.slane %v2525, %v2632
        %v2699 = vsel %vm2634, %v2698, %v2697
        %v2700 = vperm.slane %v2528, %v2636
        %v2701 = vsel %vm2638, %v2700, %v2699
        %v2702 = vperm.slane %v2531, %v2578
        %v2703 = vperm.slane %v2534, %v2580
        %v2704 = vsel %vm2582, %v2703, %v2702
        %v2705 = vperm.slane %v2537, %v2584
        %v2706 = vsel %vm2586, %v2705, %v2704
        %v2707 = vperm.slane %v2540, %v2588
        %v2708 = vsel %vm2590, %v2707, %v2706
        %v2709 = vperm.slane %v2543, %v2592
        %v2710 = vsel %vm2594, %v2709, %v2708
        %v2711 = vperm.slane %v2546, %v2596
        %v2712 = vsel %vm2598, %v2711, %v2710
        %v2713 = vperm.slane %v2549, %v2600
        %v2714 = vsel %vm2602, %v2713, %v2712
        %v2715 = vperm.slane %v2552, %v2604
        %v2716 = vsel %vm2606, %v2715, %v2714
        %v2717 = vperm.slane %v2555, %v2608
        %v2718 = vsel %vm2610, %v2717, %v2716
        %v2719 = vperm.slane %v2558, %v2612
        %v2720 = vsel %vm2614, %v2719, %v2718
        %v2721 = vperm.slane %v2561, %v2616
        %v2722 = vsel %vm2618, %v2721, %v2720
        %v2723 = vperm.slane %v2564, %v2620
        %v2724 = vsel %vm2622, %v2723, %v2722
        %v2725 = vperm.slane %v2567, %v2624
        %v2726 = vsel %vm2626, %v2725, %v2724
        %v2727 = vperm.slane %v2570, %v2628
        %v2728 = vsel %vm2630, %v2727, %v2726
        %v2729 = vperm.slane %v2573, %v2632
        %v2730 = vsel %vm2634, %v2729, %v2728
        %v2731 = vperm.slane %v2576, %v2636
        %v2732 = vsel %vm2638, %v2731, %v2730
        %vm2733 = vcmask 1041409
        %v2734 = vsel %vm2733, %v2701, %v2639
        %v2735 = vsel %vm2733, %v2732, %v2670
        %v2736 = vrot.slane %v2735, 6
        %vm2737 = vcmask 1041408
        %v2738 = vsel %vm2737, %v2734, %v2736
        %v2740 = vadd.f32 %v393, %v2738
        %2741 = vst [vmem:[#allocation2] sm:$0xf] %v2740
        %p2742 = scmp.eq.s32.totalorder %s30, 1
        // Predicated region
        $region77: #{tpu_custom_call.1} parent=47 // pred_check
          %p2743 = pneg %p2742
        $region78: #{tpu_custom_call.1} parent=47 // pred_check_branch
          %2745 = sbr.rel (%p2743) target = $region80
        $region79: #{tpu_custom_call.1} parent=47 // pred_region
          %v2746 = vld [vmem:[#allocation2] sm:$0xf]
          %v2747 = vld [vmem:[#allocation6] sm:$0xff]
          %v2748 = vld [vmem:[#allocation6 + $0x8] sm:$0xff]
          %v2749 = vld [vmem:[#allocation6 + $0x10] sm:$0xff]
          %v2750 = vld [vmem:[#allocation6 + $0x18] sm:$0xff]
          %v2751 = vld [vmem:[#allocation6 + $0x20] sm:$0xff]
          %v2752 = vld [vmem:[#allocation6 + $0x28] sm:$0xff]
          %v2753 = vld [vmem:[#allocation6 + $0x30] sm:$0xff]
          %v2754 = vld [vmem:[#allocation6 + $0x38] sm:$0xff]
          %v2755 = vld [vmem:[#allocation6 + $0x40] sm:$0xff]
          %v2756 = vld [vmem:[#allocation6 + $0x48] sm:$0xff]
          %v2757 = vld [vmem:[#allocation6 + $0x50] sm:$0xff]
          %v2758 = vld [vmem:[#allocation6 + $0x58] sm:$0xff]
          %v2759 = vld [vmem:[#allocation6 + $0x60] sm:$0xff]
          %v2760 = vld [vmem:[#allocation6 + $0x68] sm:$0xff]
          %v2761 = vld [vmem:[#allocation6 + $0x70] sm:$0xff]
          %v2762 = vld [vmem:[#allocation6 + $0x78] sm:$0xff]
          %v2763 = vld [vmem:[#allocation6 + $0x80] sm:$0xff]
          %v2764 = vld [vmem:[#allocation6 + $0x88] sm:$0xff]
          %v2765 = vld [vmem:[#allocation6 + $0x90] sm:$0xff]
          %v2766 = vld [vmem:[#allocation6 + $0x98] sm:$0xff]
          %v2767 = vld [vmem:[#allocation6 + $0xa0] sm:$0xff]
          %v2768 = vld [vmem:[#allocation6 + $0xa8] sm:$0xff]
          %v2769 = vld [vmem:[#allocation6 + $0xb0] sm:$0xff]
          %v2770 = vld [vmem:[#allocation6 + $0xb8] sm:$0xff]
          %v2771 = vld [vmem:[#allocation6 + $0xc0] sm:$0xff]
          %v2772 = vld [vmem:[#allocation6 + $0xc8] sm:$0xff]
          %v2773 = vld [vmem:[#allocation6 + $0xd0] sm:$0xff]
          %v2774 = vld [vmem:[#allocation6 + $0xd8] sm:$0xff]
          %v2775 = vld [vmem:[#allocation6 + $0xe0] sm:$0xff]
          %v2776 = vld [vmem:[#allocation6 + $0xe8] sm:$0xff]
          %v2777 = vld [vmem:[#allocation6 + $0xf0] sm:$0xff]
          %v2778 = vld [vmem:[#allocation6 + $0xf8] sm:$0xff]
          %v2779 = vld [vmem:[#allocation6 + $0x100] sm:$0xff]
          %v2780 = vld [vmem:[#allocation6 + $0x108] sm:$0xff]
          %v2781 = vld [vmem:[#allocation6 + $0x110] sm:$0xff]
          %v2782 = vld [vmem:[#allocation6 + $0x118] sm:$0xff]
          %v2783 = vld [vmem:[#allocation6 + $0x120] sm:$0xff]
          %v2784 = vld [vmem:[#allocation6 + $0x128] sm:$0xff]
          %v2785 = vld [vmem:[#allocation6 + $0x130] sm:$0xff]
          %v2786 = vld [vmem:[#allocation6 + $0x138] sm:$0xff]
          %v2787 = vld [vmem:[#allocation6 + $0x140] sm:$0xff]
          %v2788 = vld [vmem:[#allocation6 + $0x148] sm:$0xff]
          %v2789 = vld [vmem:[#allocation6 + $0x150] sm:$0xff]
          %v2790 = vld [vmem:[#allocation6 + $0x158] sm:$0xff]
          %v2791 = vld [vmem:[#allocation6 + $0x160] sm:$0xff]
          %v2792 = vld [vmem:[#allocation6 + $0x168] sm:$0xff]
          %v2793 = vld [vmem:[#allocation6 + $0x170] sm:$0xff]
          %v2794 = vld [vmem:[#allocation6 + $0x178] sm:$0xff]
          %v2795 = vld [vmem:[#allocation6 + $0x180] sm:$0xff]
          %v2796 = vld [vmem:[#allocation6 + $0x188] sm:$0xff]
          %v2797 = vld [vmem:[#allocation6 + $0x190] sm:$0xff]
          %v2798 = vld [vmem:[#allocation6 + $0x198] sm:$0xff]
          %v2799 = vld [vmem:[#allocation6 + $0x1a0] sm:$0xff]
          %v2800 = vld [vmem:[#allocation6 + $0x1a8] sm:$0xff]
          %v2801 = vld [vmem:[#allocation6 + $0x1b0] sm:$0xff]
          %v2802 = vld [vmem:[#allocation6 + $0x1b8] sm:$0xff]
          %v2803 = vld [vmem:[#allocation6 + $0x1c0] sm:$0xff]
          %v2804 = vld [vmem:[#allocation6 + $0x1c8] sm:$0xff]
          %v2805 = vld [vmem:[#allocation6 + $0x1d0] sm:$0xff]
          %v2806 = vld [vmem:[#allocation6 + $0x1d8] sm:$0xff]
          %v2807 = vld [vmem:[#allocation6 + $0x1e0] sm:$0xff]
          %v2808 = vld [vmem:[#allocation6 + $0x1e8] sm:$0xff]
          %v2809 = vld [vmem:[#allocation6 + $0x1f0] sm:$0xff]
          %v2810 = vld [vmem:[#allocation6 + $0x1f8] sm:$0xff]
          %v2811 = vld [vmem:[#allocation6 + $0x200] sm:$0xff]
          %v2812 = vld [vmem:[#allocation6 + $0x208] sm:$0xff]
          %v2813 = vld [vmem:[#allocation6 + $0x210] sm:$0xff]
          %v2814 = vld [vmem:[#allocation6 + $0x218] sm:$0xff]
          %v2815 = vld [vmem:[#allocation6 + $0x220] sm:$0xff]
          %v2816 = vld [vmem:[#allocation6 + $0x228] sm:$0xff]
          %v2817 = vld [vmem:[#allocation6 + $0x230] sm:$0xff]
          %v2818 = vld [vmem:[#allocation6 + $0x238] sm:$0xff]
          %v2819 = vld [vmem:[#allocation6 + $0x240] sm:$0xff]
          %v2820 = vld [vmem:[#allocation6 + $0x248] sm:$0xff]
          %v2821 = vld [vmem:[#allocation6 + $0x250] sm:$0xff]
          %v2822 = vld [vmem:[#allocation6 + $0x258] sm:$0xff]
          %v2823 = vld [vmem:[#allocation6 + $0x260] sm:$0xff]
          %v2824 = vld [vmem:[#allocation6 + $0x268] sm:$0xff]
          %v2825 = vld [vmem:[#allocation6 + $0x270] sm:$0xff]
          %v2826 = vld [vmem:[#allocation6 + $0x278] sm:$0xff]
          %v2827 = vld [vmem:[#allocation6 + $0x280] sm:$0xff]
          %v2828 = vld [vmem:[#allocation6 + $0x288] sm:$0xff]
          %v2829 = vld [vmem:[#allocation6 + $0x290] sm:$0xff]
          %v2830 = vld [vmem:[#allocation6 + $0x298] sm:$0xff]
          %v2831 = vld [vmem:[#allocation6 + $0x2a0] sm:$0xff]
          %v2832 = vld [vmem:[#allocation6 + $0x2a8] sm:$0xff]
          %v2833 = vld [vmem:[#allocation6 + $0x2b0] sm:$0xff]
          %v2834 = vld [vmem:[#allocation6 + $0x2b8] sm:$0xff]
          %v2835 = vld [vmem:[#allocation6 + $0x2c0] sm:$0xff]
          %v2836 = vld [vmem:[#allocation6 + $0x2c8] sm:$0xff]
          %v2837 = vld [vmem:[#allocation6 + $0x2d0] sm:$0xff]
          %v2838 = vld [vmem:[#allocation6 + $0x2d8] sm:$0xff]
          %v2839 = vld [vmem:[#allocation6 + $0x2e0] sm:$0xff]
          %v2840 = vld [vmem:[#allocation6 + $0x2e8] sm:$0xff]
          %v2841 = vld [vmem:[#allocation6 + $0x2f0] sm:$0xff]
          %v2842 = vld [vmem:[#allocation6 + $0x2f8] sm:$0xff]
          %v2843 = vld [vmem:[#allocation6 + $0x300] sm:$0xff]
          %v2844 = vld [vmem:[#allocation6 + $0x308] sm:$0xff]
          %v2845 = vld [vmem:[#allocation6 + $0x310] sm:$0xff]
          %v2846 = vld [vmem:[#allocation6 + $0x318] sm:$0xff]
          %v2847 = vld [vmem:[#allocation6 + $0x320] sm:$0xff]
          %v2848 = vld [vmem:[#allocation6 + $0x328] sm:$0xff]
          %v2849 = vld [vmem:[#allocation6 + $0x330] sm:$0xff]
          %v2850 = vld [vmem:[#allocation6 + $0x338] sm:$0xff]
          %v2851 = vld [vmem:[#allocation6 + $0x340] sm:$0xff]
          %v2852 = vld [vmem:[#allocation6 + $0x348] sm:$0xff]
          %v2853 = vld [vmem:[#allocation6 + $0x350] sm:$0xff]
          %v2854 = vld [vmem:[#allocation6 + $0x358] sm:$0xff]
          %v2855 = vld [vmem:[#allocation6 + $0x360] sm:$0xff]
          %v2856 = vld [vmem:[#allocation6 + $0x368] sm:$0xff]
          %v2857 = vld [vmem:[#allocation6 + $0x370] sm:$0xff]
          %v2858 = vld [vmem:[#allocation6 + $0x378] sm:$0xff]
          %v2859 = vld [vmem:[#allocation6 + $0x380] sm:$0xff]
          %v2860 = vld [vmem:[#allocation6 + $0x388] sm:$0xff]
          %v2861 = vld [vmem:[#allocation6 + $0x390] sm:$0xff]
          %v2862 = vld [vmem:[#allocation6 + $0x398] sm:$0xff]
          %v2863 = vld [vmem:[#allocation6 + $0x3a0] sm:$0xff]
          %v2864 = vld [vmem:[#allocation6 + $0x3a8] sm:$0xff]
          %v2865 = vld [vmem:[#allocation6 + $0x3b0] sm:$0xff]
          %v2866 = vld [vmem:[#allocation6 + $0x3b8] sm:$0xff]
          %v2867 = vld [vmem:[#allocation6 + $0x3c0] sm:$0xff]
          %v2868 = vld [vmem:[#allocation6 + $0x3c8] sm:$0xff]
          %v2869 = vld [vmem:[#allocation6 + $0x3d0] sm:$0xff]
          %v2870 = vld [vmem:[#allocation6 + $0x3d8] sm:$0xff]
          %v2871 = vld [vmem:[#allocation6 + $0x3e0] sm:$0xff]
          %v2872 = vld [vmem:[#allocation6 + $0x3e8] sm:$0xff]
          %v2873 = vld [vmem:[#allocation6 + $0x3f0] sm:$0xff]
          %v2874 = vld [vmem:[#allocation6 + $0x3f8] sm:$0xff]
          %v2875 = vld [vmem:[#allocation6 + $0x400] sm:$0xff]
          %v2876 = vld [vmem:[#allocation6 + $0x408] sm:$0xff]
          %v2877 = vld [vmem:[#allocation6 + $0x410] sm:$0xff]
          %v2878 = vld [vmem:[#allocation6 + $0x418] sm:$0xff]
          %v2879 = vld [vmem:[#allocation6 + $0x420] sm:$0xff]
          %v2880 = vld [vmem:[#allocation6 + $0x428] sm:$0xff]
          %v2881 = vld [vmem:[#allocation6 + $0x430] sm:$0xff]
          %v2882 = vld [vmem:[#allocation6 + $0x438] sm:$0xff]
          %v2883 = vld [vmem:[#allocation6 + $0x440] sm:$0xff]
          %v2884 = vld [vmem:[#allocation6 + $0x448] sm:$0xff]
          %v2885 = vld [vmem:[#allocation6 + $0x450] sm:$0xff]
          %v2886 = vld [vmem:[#allocation6 + $0x458] sm:$0xff]
          %v2887 = vld [vmem:[#allocation6 + $0x460] sm:$0xff]
          %v2888 = vld [vmem:[#allocation6 + $0x468] sm:$0xff]
          %v2889 = vld [vmem:[#allocation6 + $0x470] sm:$0xff]
          %v2890 = vld [vmem:[#allocation6 + $0x478] sm:$0xff]
          %v2891 = vld [vmem:[#allocation6 + $0x480] sm:$0xff]
          %v2892 = vld [vmem:[#allocation6 + $0x488] sm:$0xff]
          %v2893 = vld [vmem:[#allocation6 + $0x490] sm:$0xff]
          %v2894 = vld [vmem:[#allocation6 + $0x498] sm:$0xff]
          %v2895 = vld [vmem:[#allocation6 + $0x4a0] sm:$0xff]
          %v2896 = vld [vmem:[#allocation6 + $0x4a8] sm:$0xff]
          %v2897 = vld [vmem:[#allocation6 + $0x4b0] sm:$0xff]
          %v2898 = vld [vmem:[#allocation6 + $0x4b8] sm:$0xff]
          %v2899 = vld [vmem:[#allocation6 + $0x4c0] sm:$0xff]
          %v2900 = vld [vmem:[#allocation6 + $0x4c8] sm:$0xff]
          %v2901 = vld [vmem:[#allocation6 + $0x4d0] sm:$0xff]
          %v2902 = vld [vmem:[#allocation6 + $0x4d8] sm:$0xff]
          %v2903 = vld [vmem:[#allocation6 + $0x4e0] sm:$0xff]
          %v2904 = vld [vmem:[#allocation6 + $0x4e8] sm:$0xff]
          %v2905 = vld [vmem:[#allocation6 + $0x4f0] sm:$0xff]
          %v2906 = vld [vmem:[#allocation6 + $0x4f8] sm:$0xff]
          %v2907 = vld [vmem:[#allocation6 + $0x500] sm:$0xff]
          %v2908 = vld [vmem:[#allocation6 + $0x508] sm:$0xff]
          %v2909 = vld [vmem:[#allocation6 + $0x510] sm:$0xff]
          %v2910 = vld [vmem:[#allocation6 + $0x518] sm:$0xff]
          %v2911 = vld [vmem:[#allocation6 + $0x520] sm:$0xff]
          %v2912 = vld [vmem:[#allocation6 + $0x528] sm:$0xff]
          %v2913 = vld [vmem:[#allocation6 + $0x530] sm:$0xff]
          %v2914 = vld [vmem:[#allocation6 + $0x538] sm:$0xff]
          %v2915 = vld [vmem:[#allocation6 + $0x540] sm:$0xff]
          %v2916 = vld [vmem:[#allocation6 + $0x548] sm:$0xff]
          %v2917 = vld [vmem:[#allocation6 + $0x550] sm:$0xff]
          %v2918 = vld [vmem:[#allocation6 + $0x558] sm:$0xff]
          %v2919 = vld [vmem:[#allocation6 + $0x560] sm:$0xff]
          %v2920 = vld [vmem:[#allocation6 + $0x568] sm:$0xff]
          %v2921 = vld [vmem:[#allocation6 + $0x570] sm:$0xff]
          %v2922 = vld [vmem:[#allocation6 + $0x578] sm:$0xff]
          %v2923 = vld [vmem:[#allocation6 + $0x580] sm:$0xff]
          %v2924 = vld [vmem:[#allocation6 + $0x588] sm:$0xff]
          %v2925 = vld [vmem:[#allocation6 + $0x590] sm:$0xff]
          %v2926 = vld [vmem:[#allocation6 + $0x598] sm:$0xff]
          %v2927 = vld [vmem:[#allocation6 + $0x5a0] sm:$0xff]
          %v2928 = vld [vmem:[#allocation6 + $0x5a8] sm:$0xff]
          %v2929 = vld [vmem:[#allocation6 + $0x5b0] sm:$0xff]
          %v2930 = vld [vmem:[#allocation6 + $0x5b8] sm:$0xff]
          %v2931 = vld [vmem:[#allocation6 + $0x5c0] sm:$0xff]
          %v2932 = vld [vmem:[#allocation6 + $0x5c8] sm:$0xff]
          %v2933 = vld [vmem:[#allocation6 + $0x5d0] sm:$0xff]
          %v2934 = vld [vmem:[#allocation6 + $0x5d8] sm:$0xff]
          %v2935 = vld [vmem:[#allocation6 + $0x5e0] sm:$0xff]
          %v2936 = vld [vmem:[#allocation6 + $0x5e8] sm:$0xff]
          %v2937 = vld [vmem:[#allocation6 + $0x5f0] sm:$0xff]
          %v2938 = vld [vmem:[#allocation6 + $0x5f8] sm:$0xff]
          %v2939 = vld [vmem:[#allocation6 + $0x600] sm:$0xff]
          %v2940 = vld [vmem:[#allocation6 + $0x608] sm:$0xff]
          %v2941 = vld [vmem:[#allocation6 + $0x610] sm:$0xff]
          %v2942 = vld [vmem:[#allocation6 + $0x618] sm:$0xff]
          %v2943 = vld [vmem:[#allocation6 + $0x620] sm:$0xff]
          %v2944 = vld [vmem:[#allocation6 + $0x628] sm:$0xff]
          %v2945 = vld [vmem:[#allocation6 + $0x630] sm:$0xff]
          %v2946 = vld [vmem:[#allocation6 + $0x638] sm:$0xff]
          %v2947 = vld [vmem:[#allocation6 + $0x640] sm:$0xff]
          %v2948 = vld [vmem:[#allocation6 + $0x648] sm:$0xff]
          %v2949 = vld [vmem:[#allocation6 + $0x650] sm:$0xff]
          %v2950 = vld [vmem:[#allocation6 + $0x658] sm:$0xff]
          %v2951 = vld [vmem:[#allocation6 + $0x660] sm:$0xff]
          %v2952 = vld [vmem:[#allocation6 + $0x668] sm:$0xff]
          %v2953 = vld [vmem:[#allocation6 + $0x670] sm:$0xff]
          %v2954 = vld [vmem:[#allocation6 + $0x678] sm:$0xff]
          %v2955 = vld [vmem:[#allocation6 + $0x680] sm:$0xff]
          %v2956 = vld [vmem:[#allocation6 + $0x688] sm:$0xff]
          %v2957 = vld [vmem:[#allocation6 + $0x690] sm:$0xff]
          %v2958 = vld [vmem:[#allocation6 + $0x698] sm:$0xff]
          %v2959 = vld [vmem:[#allocation6 + $0x6a0] sm:$0xff]
          %v2960 = vld [vmem:[#allocation6 + $0x6a8] sm:$0xff]
          %v2961 = vld [vmem:[#allocation6 + $0x6b0] sm:$0xff]
          %v2962 = vld [vmem:[#allocation6 + $0x6b8] sm:$0xff]
          %v2963 = vld [vmem:[#allocation6 + $0x6c0] sm:$0xff]
          %v2964 = vld [vmem:[#allocation6 + $0x6c8] sm:$0xff]
          %v2965 = vld [vmem:[#allocation6 + $0x6d0] sm:$0xff]
          %v2966 = vld [vmem:[#allocation6 + $0x6d8] sm:$0xff]
          %v2967 = vld [vmem:[#allocation6 + $0x6e0] sm:$0xff]
          %v2968 = vld [vmem:[#allocation6 + $0x6e8] sm:$0xff]
          %v2969 = vld [vmem:[#allocation6 + $0x6f0] sm:$0xff]
          %v2970 = vld [vmem:[#allocation6 + $0x6f8] sm:$0xff]
          %v2971 = vld [vmem:[#allocation6 + $0x700] sm:$0xff]
          %v2972 = vld [vmem:[#allocation6 + $0x708] sm:$0xff]
          %v2973 = vld [vmem:[#allocation6 + $0x710] sm:$0xff]
          %v2974 = vld [vmem:[#allocation6 + $0x718] sm:$0xff]
          %v2975 = vld [vmem:[#allocation6 + $0x720] sm:$0xff]
          %v2976 = vld [vmem:[#allocation6 + $0x728] sm:$0xff]
          %v2977 = vld [vmem:[#allocation6 + $0x730] sm:$0xff]
          %v2978 = vld [vmem:[#allocation6 + $0x738] sm:$0xff]
          %v2979 = vld [vmem:[#allocation6 + $0x740] sm:$0xff]
          %v2980 = vld [vmem:[#allocation6 + $0x748] sm:$0xff]
          %v2981 = vld [vmem:[#allocation6 + $0x750] sm:$0xff]
          %v2982 = vld [vmem:[#allocation6 + $0x758] sm:$0xff]
          %v2983 = vld [vmem:[#allocation6 + $0x760] sm:$0xff]
          %v2984 = vld [vmem:[#allocation6 + $0x768] sm:$0xff]
          %v2985 = vld [vmem:[#allocation6 + $0x770] sm:$0xff]
          %v2986 = vld [vmem:[#allocation6 + $0x778] sm:$0xff]
          %v2987 = vld [vmem:[#allocation6 + $0x780] sm:$0xff]
          %v2988 = vld [vmem:[#allocation6 + $0x788] sm:$0xff]
          %v2989 = vld [vmem:[#allocation6 + $0x790] sm:$0xff]
          %v2990 = vld [vmem:[#allocation6 + $0x798] sm:$0xff]
          %v2991 = vld [vmem:[#allocation6 + $0x7a0] sm:$0xff]
          %v2992 = vld [vmem:[#allocation6 + $0x7a8] sm:$0xff]
          %v2993 = vld [vmem:[#allocation6 + $0x7b0] sm:$0xff]
          %v2994 = vld [vmem:[#allocation6 + $0x7b8] sm:$0xff]
          %v2995 = vld [vmem:[#allocation6 + $0x7c0] sm:$0xff]
          %v2996 = vld [vmem:[#allocation6 + $0x7c8] sm:$0xff]
          %v2997 = vld [vmem:[#allocation6 + $0x7d0] sm:$0xff]
          %v2998 = vld [vmem:[#allocation6 + $0x7d8] sm:$0xff]
          %v2999 = vld [vmem:[#allocation6 + $0x7e0] sm:$0xff]
          %v3000 = vld [vmem:[#allocation6 + $0x7e8] sm:$0xff]
          %v3001 = vld [vmem:[#allocation6 + $0x7f0] sm:$0xff]
          %v3002 = vld [vmem:[#allocation6 + $0x7f8] sm:$0xff]
          %v3003 = vld [vmem:[#allocation8] sm:$0xff]
          %v3005 = vperm.slane %v3003, 0
          %v3006 = vperm.slane %v3003, 1
          %v3007 = vperm.slane %v3003, 2
          %v3008 = vperm.slane %v3003, 3
          %v3009 = vperm.slane %v3003, 4
          %v3010 = vperm.slane %v3003, 5
          %v3011 = vperm.slane %v3003, 6
          %v3012 = vperm.slane %v3003, 7
          %3022 = vst [vmem:[#allocation1] ss:$4 sm:$0xff] %v2746
          %v3023 = vld.sshfl [vmem:[#allocation1] sm:$0xff pattern:$0x73625140]
          %v3024 = vld.sshfl [vmem:[#allocation1 + $0x8] sm:$0xff pattern:$0x73625140]
          %3027 = vmatpush.msra.mxu0 %v2867
          %3028 = vmatpush.msra.mxu0 %v2859
          %3029 = vmatpush.msra.mxu0 %v2851
          %3030 = vmatpush.msra.mxu0 %v2843
          %3031 = vmatpush.msra.mxu0 %v2835
          %3032 = vmatpush.msra.mxu0 %v2827
          %3033 = vmatpush.msra.mxu0 %v2819
          %3034 = vmatpush.msra.mxu0 %v2811
          %3035 = vmatpush.msra.mxu0 %v2803
          %3036 = vmatpush.msra.mxu0 %v2795
          %3037 = vmatpush.msra.mxu0 %v2787
          %3038 = vmatpush.msra.mxu0 %v2779
          %3039 = vmatpush.msra.mxu0 %v2771
          %3040 = vmatpush.msra.mxu0 %v2763
          %3041 = vmatpush.msra.mxu0 %v2755
          %3042 = vmatpush.msra.mxu0 %v2747
          %3043 = vmatmul.f32.gmra.mxu0 %v3023
          %v3044 = vpop.f32.mrf.mxu0
          %v3045 = vadd.f32 %v3005, %v3044
          %3046 = vdwg.mxu0
          %3047 = vmatpush.msra.mxu0 %v2995
          %3048 = vmatpush.msra.mxu0 %v2987
          %3049 = vmatpush.msra.mxu0 %v2979
          %3050 = vmatpush.msra.mxu0 %v2971
          %3051 = vmatpush.msra.mxu0 %v2963
          %3052 = vmatpush.msra.mxu0 %v2955
          %3053 = vmatpush.msra.mxu0 %v2947
          %3054 = vmatpush.msra.mxu0 %v2939
          %3055 = vmatpush.msra.mxu0 %v2931
          %3056 = vmatpush.msra.mxu0 %v2923
          %3057 = vmatpush.msra.mxu0 %v2915
          %3058 = vmatpush.msra.mxu0 %v2907
          %3059 = vmatpush.msra.mxu0 %v2899
          %3060 = vmatpush.msra.mxu0 %v2891
          %3061 = vmatpush.msra.mxu0 %v2883
          %3062 = vmatpush.msra.mxu0 %v2875
          %3063 = vmatmul.f32.gmra.mxu0 %v3024
          %v3064 = vpop.f32.mrf.mxu0
          %v3065 = vadd.f32 %v3045, %v3064
          %3066 = vdwg.mxu0
          %3067 = vmatpush.msra.mxu0 %v2868
          %3068 = vmatpush.msra.mxu0 %v2860
          %3069 = vmatpush.msra.mxu0 %v2852
          %3070 = vmatpush.msra.mxu0 %v2844
          %3071 = vmatpush.msra.mxu0 %v2836
          %3072 = vmatpush.msra.mxu0 %v2828
          %3073 = vmatpush.msra.mxu0 %v2820
          %3074 = vmatpush.msra.mxu0 %v2812
          %3075 = vmatpush.msra.mxu0 %v2804
          %3076 = vmatpush.msra.mxu0 %v2796
          %3077 = vmatpush.msra.mxu0 %v2788
          %3078 = vmatpush.msra.mxu0 %v2780
          %3079 = vmatpush.msra.mxu0 %v2772
          %3080 = vmatpush.msra.mxu0 %v2764
          %3081 = vmatpush.msra.mxu0 %v2756
          %3082 = vmatpush.msra.mxu0 %v2748
          %3083 = vmatmul.f32.gmra.mxu0 %v3023
          %v3084 = vpop.f32.mrf.mxu0
          %v3085 = vadd.f32 %v3006, %v3084
          %3086 = vdwg.mxu0
          %3087 = vmatpush.msra.mxu0 %v2996
          %3088 = vmatpush.msra.mxu0 %v2988
          %3089 = vmatpush.msra.mxu0 %v2980
          %3090 = vmatpush.msra.mxu0 %v2972
          %3091 = vmatpush.msra.mxu0 %v2964
          %3092 = vmatpush.msra.mxu0 %v2956
          %3093 = vmatpush.msra.mxu0 %v2948
          %3094 = vmatpush.msra.mxu0 %v2940
          %3095 = vmatpush.msra.mxu0 %v2932
          %3096 = vmatpush.msra.mxu0 %v2924
          %3097 = vmatpush.msra.mxu0 %v2916
          %3098 = vmatpush.msra.mxu0 %v2908
          %3099 = vmatpush.msra.mxu0 %v2900
          %3100 = vmatpush.msra.mxu0 %v2892
          %3101 = vmatpush.msra.mxu0 %v2884
          %3102 = vmatpush.msra.mxu0 %v2876
          %3103 = vmatmul.f32.gmra.mxu0 %v3024
          %v3104 = vpop.f32.mrf.mxu0
          %v3105 = vadd.f32 %v3085, %v3104
          %3106 = vdwg.mxu0
          %3107 = vmatpush.msra.mxu0 %v2869
          %3108 = vmatpush.msra.mxu0 %v2861
          %3109 = vmatpush.msra.mxu0 %v2853
          %3110 = vmatpush.msra.mxu0 %v2845
          %3111 = vmatpush.msra.mxu0 %v2837
          %3112 = vmatpush.msra.mxu0 %v2829
          %3113 = vmatpush.msra.mxu0 %v2821
          %3114 = vmatpush.msra.mxu0 %v2813
          %3115 = vmatpush.msra.mxu0 %v2805
          %3116 = vmatpush.msra.mxu0 %v2797
          %3117 = vmatpush.msra.mxu0 %v2789
          %3118 = vmatpush.msra.mxu0 %v2781
          %3119 = vmatpush.msra.mxu0 %v2773
          %3120 = vmatpush.msra.mxu0 %v2765
          %3121 = vmatpush.msra.mxu0 %v2757
          %3122 = vmatpush.msra.mxu0 %v2749
          %3123 = vmatmul.f32.gmra.mxu0 %v3023
          %v3124 = vpop.f32.mrf.mxu0
          %v3125 = vadd.f32 %v3007, %v3124
          %3126 = vdwg.mxu0
          %3127 = vmatpush.msra.mxu0 %v2997
          %3128 = vmatpush.msra.mxu0 %v2989
          %3129 = vmatpush.msra.mxu0 %v2981
          %3130 = vmatpush.msra.mxu0 %v2973
          %3131 = vmatpush.msra.mxu0 %v2965
          %3132 = vmatpush.msra.mxu0 %v2957
          %3133 = vmatpush.msra.mxu0 %v2949
          %3134 = vmatpush.msra.mxu0 %v2941
          %3135 = vmatpush.msra.mxu0 %v2933
          %3136 = vmatpush.msra.mxu0 %v2925
          %3137 = vmatpush.msra.mxu0 %v2917
          %3138 = vmatpush.msra.mxu0 %v2909
          %3139 = vmatpush.msra.mxu0 %v2901
          %3140 = vmatpush.msra.mxu0 %v2893
          %3141 = vmatpush.msra.mxu0 %v2885
          %3142 = vmatpush.msra.mxu0 %v2877
          %3143 = vmatmul.f32.gmra.mxu0 %v3024
          %v3144 = vpop.f32.mrf.mxu0
          %v3145 = vadd.f32 %v3125, %v3144
          %3146 = vdwg.mxu0
          %3147 = vmatpush.msra.mxu0 %v2870
          %3148 = vmatpush.msra.mxu0 %v2862
          %3149 = vmatpush.msra.mxu0 %v2854
          %3150 = vmatpush.msra.mxu0 %v2846
          %3151 = vmatpush.msra.mxu0 %v2838
          %3152 = vmatpush.msra.mxu0 %v2830
          %3153 = vmatpush.msra.mxu0 %v2822
          %3154 = vmatpush.msra.mxu0 %v2814
          %3155 = vmatpush.msra.mxu0 %v2806
          %3156 = vmatpush.msra.mxu0 %v2798
          %3157 = vmatpush.msra.mxu0 %v2790
          %3158 = vmatpush.msra.mxu0 %v2782
          %3159 = vmatpush.msra.mxu0 %v2774
          %3160 = vmatpush.msra.mxu0 %v2766
          %3161 = vmatpush.msra.mxu0 %v2758
          %3162 = vmatpush.msra.mxu0 %v2750
          %3163 = vmatmul.f32.gmra.mxu0 %v3023
          %v3164 = vpop.f32.mrf.mxu0
          %v3165 = vadd.f32 %v3008, %v3164
          %3166 = vdwg.mxu0
          %3167 = vmatpush.msra.mxu0 %v2998
          %3168 = vmatpush.msra.mxu0 %v2990
          %3169 = vmatpush.msra.mxu0 %v2982
          %3170 = vmatpush.msra.mxu0 %v2974
          %3171 = vmatpush.msra.mxu0 %v2966
          %3172 = vmatpush.msra.mxu0 %v2958
          %3173 = vmatpush.msra.mxu0 %v2950
          %3174 = vmatpush.msra.mxu0 %v2942
          %3175 = vmatpush.msra.mxu0 %v2934
          %3176 = vmatpush.msra.mxu0 %v2926
          %3177 = vmatpush.msra.mxu0 %v2918
          %3178 = vmatpush.msra.mxu0 %v2910
          %3179 = vmatpush.msra.mxu0 %v2902
          %3180 = vmatpush.msra.mxu0 %v2894
          %3181 = vmatpush.msra.mxu0 %v2886
          %3182 = vmatpush.msra.mxu0 %v2878
          %3183 = vmatmul.f32.gmra.mxu0 %v3024
          %v3184 = vpop.f32.mrf.mxu0
          %v3185 = vadd.f32 %v3165, %v3184
          %3186 = vdwg.mxu0
          %3187 = vmatpush.msra.mxu0 %v2871
          %3188 = vmatpush.msra.mxu0 %v2863
          %3189 = vmatpush.msra.mxu0 %v2855
          %3190 = vmatpush.msra.mxu0 %v2847
          %3191 = vmatpush.msra.mxu0 %v2839
          %3192 = vmatpush.msra.mxu0 %v2831
          %3193 = vmatpush.msra.mxu0 %v2823
          %3194 = vmatpush.msra.mxu0 %v2815
          %3195 = vmatpush.msra.mxu0 %v2807
          %3196 = vmatpush.msra.mxu0 %v2799
          %3197 = vmatpush.msra.mxu0 %v2791
          %3198 = vmatpush.msra.mxu0 %v2783
          %3199 = vmatpush.msra.mxu0 %v2775
          %3200 = vmatpush.msra.mxu0 %v2767
          %3201 = vmatpush.msra.mxu0 %v2759
          %3202 = vmatpush.msra.mxu0 %v2751
          %3203 = vmatmul.f32.gmra.mxu0 %v3023
          %v3204 = vpop.f32.mrf.mxu0
          %v3205 = vadd.f32 %v3009, %v3204
          %3206 = vdwg.mxu0
          %3207 = vmatpush.msra.mxu0 %v2999
          %3208 = vmatpush.msra.mxu0 %v2991
          %3209 = vmatpush.msra.mxu0 %v2983
          %3210 = vmatpush.msra.mxu0 %v2975
          %3211 = vmatpush.msra.mxu0 %v2967
          %3212 = vmatpush.msra.mxu0 %v2959
          %3213 = vmatpush.msra.mxu0 %v2951
          %3214 = vmatpush.msra.mxu0 %v2943
          %3215 = vmatpush.msra.mxu0 %v2935
          %3216 = vmatpush.msra.mxu0 %v2927
          %3217 = vmatpush.msra.mxu0 %v2919
          %3218 = vmatpush.msra.mxu0 %v2911
          %3219 = vmatpush.msra.mxu0 %v2903
          %3220 = vmatpush.msra.mxu0 %v2895
          %3221 = vmatpush.msra.mxu0 %v2887
          %3222 = vmatpush.msra.mxu0 %v2879
          %3223 = vmatmul.f32.gmra.mxu0 %v3024
          %v3224 = vpop.f32.mrf.mxu0
          %v3225 = vadd.f32 %v3205, %v3224
          %3226 = vdwg.mxu0
          %3227 = vmatpush.msra.mxu0 %v2872
          %3228 = vmatpush.msra.mxu0 %v2864
          %3229 = vmatpush.msra.mxu0 %v2856
          %3230 = vmatpush.msra.mxu0 %v2848
          %3231 = vmatpush.msra.mxu0 %v2840
          %3232 = vmatpush.msra.mxu0 %v2832
          %3233 = vmatpush.msra.mxu0 %v2824
          %3234 = vmatpush.msra.mxu0 %v2816
          %3235 = vmatpush.msra.mxu0 %v2808
          %3236 = vmatpush.msra.mxu0 %v2800
          %3237 = vmatpush.msra.mxu0 %v2792
          %3238 = vmatpush.msra.mxu0 %v2784
          %3239 = vmatpush.msra.mxu0 %v2776
          %3240 = vmatpush.msra.mxu0 %v2768
          %3241 = vmatpush.msra.mxu0 %v2760
          %3242 = vmatpush.msra.mxu0 %v2752
          %3243 = vmatmul.f32.gmra.mxu0 %v3023
          %v3244 = vpop.f32.mrf.mxu0
          %v3245 = vadd.f32 %v3010, %v3244
          %3246 = vdwg.mxu0
          %3247 = vmatpush.msra.mxu0 %v3000
          %3248 = vmatpush.msra.mxu0 %v2992
          %3249 = vmatpush.msra.mxu0 %v2984
          %3250 = vmatpush.msra.mxu0 %v2976
          %3251 = vmatpush.msra.mxu0 %v2968
          %3252 = vmatpush.msra.mxu0 %v2960
          %3253 = vmatpush.msra.mxu0 %v2952
          %3254 = vmatpush.msra.mxu0 %v2944
          %3255 = vmatpush.msra.mxu0 %v2936
          %3256 = vmatpush.msra.mxu0 %v2928
          %3257 = vmatpush.msra.mxu0 %v2920
          %3258 = vmatpush.msra.mxu0 %v2912
          %3259 = vmatpush.msra.mxu0 %v2904
          %3260 = vmatpush.msra.mxu0 %v2896
          %3261 = vmatpush.msra.mxu0 %v2888
          %3262 = vmatpush.msra.mxu0 %v2880
          %3263 = vmatmul.f32.gmra.mxu0 %v3024
          %v3264 = vpop.f32.mrf.mxu0
          %v3265 = vadd.f32 %v3245, %v3264
          %3266 = vdwg.mxu0
          %3267 = vmatpush.msra.mxu0 %v2873
          %3268 = vmatpush.msra.mxu0 %v2865
          %3269 = vmatpush.msra.mxu0 %v2857
          %3270 = vmatpush.msra.mxu0 %v2849
          %3271 = vmatpush.msra.mxu0 %v2841
          %3272 = vmatpush.msra.mxu0 %v2833
          %3273 = vmatpush.msra.mxu0 %v2825
          %3274 = vmatpush.msra.mxu0 %v2817
          %3275 = vmatpush.msra.mxu0 %v2809
          %3276 = vmatpush.msra.mxu0 %v2801
          %3277 = vmatpush.msra.mxu0 %v2793
          %3278 = vmatpush.msra.mxu0 %v2785
          %3279 = vmatpush.msra.mxu0 %v2777
          %3280 = vmatpush.msra.mxu0 %v2769
          %3281 = vmatpush.msra.mxu0 %v2761
          %3282 = vmatpush.msra.mxu0 %v2753
          %3283 = vmatmul.f32.gmra.mxu0 %v3023
          %v3284 = vpop.f32.mrf.mxu0
          %v3285 = vadd.f32 %v3011, %v3284
          %3286 = vdwg.mxu0
          %3287 = vmatpush.msra.mxu0 %v3001
          %3288 = vmatpush.msra.mxu0 %v2993
          %3289 = vmatpush.msra.mxu0 %v2985
          %3290 = vmatpush.msra.mxu0 %v2977
          %3291 = vmatpush.msra.mxu0 %v2969
          %3292 = vmatpush.msra.mxu0 %v2961
          %3293 = vmatpush.msra.mxu0 %v2953
          %3294 = vmatpush.msra.mxu0 %v2945
          %3295 = vmatpush.msra.mxu0 %v2937
          %3296 = vmatpush.msra.mxu0 %v2929
          %3297 = vmatpush.msra.mxu0 %v2921
          %3298 = vmatpush.msra.mxu0 %v2913
          %3299 = vmatpush.msra.mxu0 %v2905
          %3300 = vmatpush.msra.mxu0 %v2897
          %3301 = vmatpush.msra.mxu0 %v2889
          %3302 = vmatpush.msra.mxu0 %v2881
          %3303 = vmatmul.f32.gmra.mxu0 %v3024
          %v3304 = vpop.f32.mrf.mxu0
          %v3305 = vadd.f32 %v3285, %v3304
          %3306 = vdwg.mxu0
          %3307 = vmatpush.msra.mxu0 %v2874
          %3308 = vmatpush.msra.mxu0 %v2866
          %3309 = vmatpush.msra.mxu0 %v2858
          %3310 = vmatpush.msra.mxu0 %v2850
          %3311 = vmatpush.msra.mxu0 %v2842
          %3312 = vmatpush.msra.mxu0 %v2834
          %3313 = vmatpush.msra.mxu0 %v2826
          %3314 = vmatpush.msra.mxu0 %v2818
          %3315 = vmatpush.msra.mxu0 %v2810
          %3316 = vmatpush.msra.mxu0 %v2802
          %3317 = vmatpush.msra.mxu0 %v2794
          %3318 = vmatpush.msra.mxu0 %v2786
          %3319 = vmatpush.msra.mxu0 %v2778
          %3320 = vmatpush.msra.mxu0 %v2770
          %3321 = vmatpush.msra.mxu0 %v2762
          %3322 = vmatpush.msra.mxu0 %v2754
          %3323 = vmatmul.f32.gmra.mxu0 %v3023
          %v3324 = vpop.f32.mrf.mxu0
          %v3325 = vadd.f32 %v3012, %v3324
          %3326 = vdwg.mxu0
          %3327 = vmatpush.msra.mxu0 %v3002
          %3328 = vmatpush.msra.mxu0 %v2994
          %3329 = vmatpush.msra.mxu0 %v2986
          %3330 = vmatpush.msra.mxu0 %v2978
          %3331 = vmatpush.msra.mxu0 %v2970
          %3332 = vmatpush.msra.mxu0 %v2962
          %3333 = vmatpush.msra.mxu0 %v2954
          %3334 = vmatpush.msra.mxu0 %v2946
          %3335 = vmatpush.msra.mxu0 %v2938
          %3336 = vmatpush.msra.mxu0 %v2930
          %3337 = vmatpush.msra.mxu0 %v2922
          %3338 = vmatpush.msra.mxu0 %v2914
          %3339 = vmatpush.msra.mxu0 %v2906
          %3340 = vmatpush.msra.mxu0 %v2898
          %3341 = vmatpush.msra.mxu0 %v2890
          %3342 = vmatpush.msra.mxu0 %v2882
          %3343 = vmatmul.f32.gmra.mxu0 %v3024
          %v3344 = vpop.f32.mrf.mxu0
          %v3345 = vadd.f32 %v3325, %v3344
          %3346 = vdwg.mxu0
          %v3347 = vmax.f32 %v3065, 0.0
          %v3348 = vmax.f32 %v3105, 0.0
          %v3349 = vmax.f32 %v3145, 0.0
          %v3350 = vmax.f32 %v3185, 0.0
          %v3351 = vmax.f32 %v3225, 0.0
          %v3352 = vmax.f32 %v3265, 0.0
          %v3353 = vmax.f32 %v3305, 0.0
          %v3354 = vmax.f32 %v3345, 0.0
          %v3355 = vld [vmem:[#allocation9] sm:$0xff]
          %v3356 = vld [vmem:[#allocation9 + $0x8] sm:$0xff]
          %v3357 = vld [vmem:[#allocation9 + $0x10] sm:$0xff]
          %v3358 = vld [vmem:[#allocation9 + $0x18] sm:$0xff]
          %v3359 = vld [vmem:[#allocation9 + $0x20] sm:$0xff]
          %v3360 = vld [vmem:[#allocation9 + $0x28] sm:$0xff]
          %v3361 = vld [vmem:[#allocation9 + $0x30] sm:$0xff]
          %v3362 = vld [vmem:[#allocation9 + $0x38] sm:$0xff]
          %v3363 = vld [vmem:[#allocation9 + $0x40] sm:$0xff]
          %v3364 = vld [vmem:[#allocation9 + $0x48] sm:$0xff]
          %v3365 = vld [vmem:[#allocation9 + $0x50] sm:$0xff]
          %v3366 = vld [vmem:[#allocation9 + $0x58] sm:$0xff]
          %v3367 = vld [vmem:[#allocation9 + $0x60] sm:$0xff]
          %v3368 = vld [vmem:[#allocation9 + $0x68] sm:$0xff]
          %v3369 = vld [vmem:[#allocation9 + $0x70] sm:$0xff]
          %v3370 = vld [vmem:[#allocation9 + $0x78] sm:$0xff]
          %v3371 = vld [vmem:[#allocation9 + $0x80] sm:$0xff]
          %v3372 = vld [vmem:[#allocation9 + $0x88] sm:$0xff]
          %v3373 = vld [vmem:[#allocation9 + $0x90] sm:$0xff]
          %v3374 = vld [vmem:[#allocation9 + $0x98] sm:$0xff]
          %v3375 = vld [vmem:[#allocation9 + $0xa0] sm:$0xff]
          %v3376 = vld [vmem:[#allocation9 + $0xa8] sm:$0xff]
          %v3377 = vld [vmem:[#allocation9 + $0xb0] sm:$0xff]
          %v3378 = vld [vmem:[#allocation9 + $0xb8] sm:$0xff]
          %v3379 = vld [vmem:[#allocation9 + $0xc0] sm:$0xff]
          %v3380 = vld [vmem:[#allocation9 + $0xc8] sm:$0xff]
          %v3381 = vld [vmem:[#allocation9 + $0xd0] sm:$0xff]
          %v3382 = vld [vmem:[#allocation9 + $0xd8] sm:$0xff]
          %v3383 = vld [vmem:[#allocation9 + $0xe0] sm:$0xff]
          %v3384 = vld [vmem:[#allocation9 + $0xe8] sm:$0xff]
          %v3385 = vld [vmem:[#allocation9 + $0xf0] sm:$0xff]
          %v3386 = vld [vmem:[#allocation9 + $0xf8] sm:$0xff]
          %v3387 = vld [vmem:[#allocation9 + $0x100] sm:$0xff]
          %v3388 = vld [vmem:[#allocation9 + $0x108] sm:$0xff]
          %v3389 = vld [vmem:[#allocation9 + $0x110] sm:$0xff]
          %v3390 = vld [vmem:[#allocation9 + $0x118] sm:$0xff]
          %v3391 = vld [vmem:[#allocation9 + $0x120] sm:$0xff]
          %v3392 = vld [vmem:[#allocation9 + $0x128] sm:$0xff]
          %v3393 = vld [vmem:[#allocation9 + $0x130] sm:$0xff]
          %v3394 = vld [vmem:[#allocation9 + $0x138] sm:$0xff]
          %v3395 = vld [vmem:[#allocation9 + $0x140] sm:$0xff]
          %v3396 = vld [vmem:[#allocation9 + $0x148] sm:$0xff]
          %v3397 = vld [vmem:[#allocation9 + $0x150] sm:$0xff]
          %v3398 = vld [vmem:[#allocation9 + $0x158] sm:$0xff]
          %v3399 = vld [vmem:[#allocation9 + $0x160] sm:$0xff]
          %v3400 = vld [vmem:[#allocation9 + $0x168] sm:$0xff]
          %v3401 = vld [vmem:[#allocation9 + $0x170] sm:$0xff]
          %v3402 = vld [vmem:[#allocation9 + $0x178] sm:$0xff]
          %v3403 = vld [vmem:[#allocation9 + $0x180] sm:$0xff]
          %v3404 = vld [vmem:[#allocation9 + $0x188] sm:$0xff]
          %v3405 = vld [vmem:[#allocation9 + $0x190] sm:$0xff]
          %v3406 = vld [vmem:[#allocation9 + $0x198] sm:$0xff]
          %v3407 = vld [vmem:[#allocation9 + $0x1a0] sm:$0xff]
          %v3408 = vld [vmem:[#allocation9 + $0x1a8] sm:$0xff]
          %v3409 = vld [vmem:[#allocation9 + $0x1b0] sm:$0xff]
          %v3410 = vld [vmem:[#allocation9 + $0x1b8] sm:$0xff]
          %v3411 = vld [vmem:[#allocation9 + $0x1c0] sm:$0xff]
          %v3412 = vld [vmem:[#allocation9 + $0x1c8] sm:$0xff]
          %v3413 = vld [vmem:[#allocation9 + $0x1d0] sm:$0xff]
          %v3414 = vld [vmem:[#allocation9 + $0x1d8] sm:$0xff]
          %v3415 = vld [vmem:[#allocation9 + $0x1e0] sm:$0xff]
          %v3416 = vld [vmem:[#allocation9 + $0x1e8] sm:$0xff]
          %v3417 = vld [vmem:[#allocation9 + $0x1f0] sm:$0xff]
          %v3418 = vld [vmem:[#allocation9 + $0x1f8] sm:$0xff]
          %v3419 = vld [vmem:[#allocation9 + $0x200] sm:$0xff]
          %v3420 = vld [vmem:[#allocation9 + $0x208] sm:$0xff]
          %v3421 = vld [vmem:[#allocation9 + $0x210] sm:$0xff]
          %v3422 = vld [vmem:[#allocation9 + $0x218] sm:$0xff]
          %v3423 = vld [vmem:[#allocation9 + $0x220] sm:$0xff]
          %v3424 = vld [vmem:[#allocation9 + $0x228] sm:$0xff]
          %v3425 = vld [vmem:[#allocation9 + $0x230] sm:$0xff]
          %v3426 = vld [vmem:[#allocation9 + $0x238] sm:$0xff]
          %v3427 = vld [vmem:[#allocation9 + $0x240] sm:$0xff]
          %v3428 = vld [vmem:[#allocation9 + $0x248] sm:$0xff]
          %v3429 = vld [vmem:[#allocation9 + $0x250] sm:$0xff]
          %v3430 = vld [vmem:[#allocation9 + $0x258] sm:$0xff]
          %v3431 = vld [vmem:[#allocation9 + $0x260] sm:$0xff]
          %v3432 = vld [vmem:[#allocation9 + $0x268] sm:$0xff]
          %v3433 = vld [vmem:[#allocation9 + $0x270] sm:$0xff]
          %v3434 = vld [vmem:[#allocation9 + $0x278] sm:$0xff]
          %v3435 = vld [vmem:[#allocation9 + $0x280] sm:$0xff]
          %v3436 = vld [vmem:[#allocation9 + $0x288] sm:$0xff]
          %v3437 = vld [vmem:[#allocation9 + $0x290] sm:$0xff]
          %v3438 = vld [vmem:[#allocation9 + $0x298] sm:$0xff]
          %v3439 = vld [vmem:[#allocation9 + $0x2a0] sm:$0xff]
          %v3440 = vld [vmem:[#allocation9 + $0x2a8] sm:$0xff]
          %v3441 = vld [vmem:[#allocation9 + $0x2b0] sm:$0xff]
          %v3442 = vld [vmem:[#allocation9 + $0x2b8] sm:$0xff]
          %v3443 = vld [vmem:[#allocation9 + $0x2c0] sm:$0xff]
          %v3444 = vld [vmem:[#allocation9 + $0x2c8] sm:$0xff]
          %v3445 = vld [vmem:[#allocation9 + $0x2d0] sm:$0xff]
          %v3446 = vld [vmem:[#allocation9 + $0x2d8] sm:$0xff]
          %v3447 = vld [vmem:[#allocation9 + $0x2e0] sm:$0xff]
          %v3448 = vld [vmem:[#allocation9 + $0x2e8] sm:$0xff]
          %v3449 = vld [vmem:[#allocation9 + $0x2f0] sm:$0xff]
          %v3450 = vld [vmem:[#allocation9 + $0x2f8] sm:$0xff]
          %v3451 = vld [vmem:[#allocation9 + $0x300] sm:$0xff]
          %v3452 = vld [vmem:[#allocation9 + $0x308] sm:$0xff]
          %v3453 = vld [vmem:[#allocation9 + $0x310] sm:$0xff]
          %v3454 = vld [vmem:[#allocation9 + $0x318] sm:$0xff]
          %v3455 = vld [vmem:[#allocation9 + $0x320] sm:$0xff]
          %v3456 = vld [vmem:[#allocation9 + $0x328] sm:$0xff]
          %v3457 = vld [vmem:[#allocation9 + $0x330] sm:$0xff]
          %v3458 = vld [vmem:[#allocation9 + $0x338] sm:$0xff]
          %v3459 = vld [vmem:[#allocation9 + $0x340] sm:$0xff]
          %v3460 = vld [vmem:[#allocation9 + $0x348] sm:$0xff]
          %v3461 = vld [vmem:[#allocation9 + $0x350] sm:$0xff]
          %v3462 = vld [vmem:[#allocation9 + $0x358] sm:$0xff]
          %v3463 = vld [vmem:[#allocation9 + $0x360] sm:$0xff]
          %v3464 = vld [vmem:[#allocation9 + $0x368] sm:$0xff]
          %v3465 = vld [vmem:[#allocation9 + $0x370] sm:$0xff]
          %v3466 = vld [vmem:[#allocation9 + $0x378] sm:$0xff]
          %v3467 = vld [vmem:[#allocation9 + $0x380] sm:$0xff]
          %v3468 = vld [vmem:[#allocation9 + $0x388] sm:$0xff]
          %v3469 = vld [vmem:[#allocation9 + $0x390] sm:$0xff]
          %v3470 = vld [vmem:[#allocation9 + $0x398] sm:$0xff]
          %v3471 = vld [vmem:[#allocation9 + $0x3a0] sm:$0xff]
          %v3472 = vld [vmem:[#allocation9 + $0x3a8] sm:$0xff]
          %v3473 = vld [vmem:[#allocation9 + $0x3b0] sm:$0xff]
          %v3474 = vld [vmem:[#allocation9 + $0x3b8] sm:$0xff]
          %v3475 = vld [vmem:[#allocation9 + $0x3c0] sm:$0xff]
          %v3476 = vld [vmem:[#allocation9 + $0x3c8] sm:$0xff]
          %v3477 = vld [vmem:[#allocation9 + $0x3d0] sm:$0xff]
          %v3478 = vld [vmem:[#allocation9 + $0x3d8] sm:$0xff]
          %v3479 = vld [vmem:[#allocation9 + $0x3e0] sm:$0xff]
          %v3480 = vld [vmem:[#allocation9 + $0x3e8] sm:$0xff]
          %v3481 = vld [vmem:[#allocation9 + $0x3f0] sm:$0xff]
          %v3482 = vld [vmem:[#allocation9 + $0x3f8] sm:$0xff]
          %v3483 = vld [vmem:[#allocation9 + $0x400] sm:$0xff]
          %v3484 = vld [vmem:[#allocation9 + $0x408] sm:$0xff]
          %v3485 = vld [vmem:[#allocation9 + $0x410] sm:$0xff]
          %v3486 = vld [vmem:[#allocation9 + $0x418] sm:$0xff]
          %v3487 = vld [vmem:[#allocation9 + $0x420] sm:$0xff]
          %v3488 = vld [vmem:[#allocation9 + $0x428] sm:$0xff]
          %v3489 = vld [vmem:[#allocation9 + $0x430] sm:$0xff]
          %v3490 = vld [vmem:[#allocation9 + $0x438] sm:$0xff]
          %v3491 = vld [vmem:[#allocation9 + $0x440] sm:$0xff]
          %v3492 = vld [vmem:[#allocation9 + $0x448] sm:$0xff]
          %v3493 = vld [vmem:[#allocation9 + $0x450] sm:$0xff]
          %v3494 = vld [vmem:[#allocation9 + $0x458] sm:$0xff]
          %v3495 = vld [vmem:[#allocation9 + $0x460] sm:$0xff]
          %v3496 = vld [vmem:[#allocation9 + $0x468] sm:$0xff]
          %v3497 = vld [vmem:[#allocation9 + $0x470] sm:$0xff]
          %v3498 = vld [vmem:[#allocation9 + $0x478] sm:$0xff]
          %v3499 = vld [vmem:[#allocation9 + $0x480] sm:$0xff]
          %v3500 = vld [vmem:[#allocation9 + $0x488] sm:$0xff]
          %v3501 = vld [vmem:[#allocation9 + $0x490] sm:$0xff]
          %v3502 = vld [vmem:[#allocation9 + $0x498] sm:$0xff]
          %v3503 = vld [vmem:[#allocation9 + $0x4a0] sm:$0xff]
          %v3504 = vld [vmem:[#allocation9 + $0x4a8] sm:$0xff]
          %v3505 = vld [vmem:[#allocation9 + $0x4b0] sm:$0xff]
          %v3506 = vld [vmem:[#allocation9 + $0x4b8] sm:$0xff]
          %v3507 = vld [vmem:[#allocation9 + $0x4c0] sm:$0xff]
          %v3508 = vld [vmem:[#allocation9 + $0x4c8] sm:$0xff]
          %v3509 = vld [vmem:[#allocation9 + $0x4d0] sm:$0xff]
          %v3510 = vld [vmem:[#allocation9 + $0x4d8] sm:$0xff]
          %v3511 = vld [vmem:[#allocation9 + $0x4e0] sm:$0xff]
          %v3512 = vld [vmem:[#allocation9 + $0x4e8] sm:$0xff]
          %v3513 = vld [vmem:[#allocation9 + $0x4f0] sm:$0xff]
          %v3514 = vld [vmem:[#allocation9 + $0x4f8] sm:$0xff]
          %v3515 = vld [vmem:[#allocation9 + $0x500] sm:$0xff]
          %v3516 = vld [vmem:[#allocation9 + $0x508] sm:$0xff]
          %v3517 = vld [vmem:[#allocation9 + $0x510] sm:$0xff]
          %v3518 = vld [vmem:[#allocation9 + $0x518] sm:$0xff]
          %v3519 = vld [vmem:[#allocation9 + $0x520] sm:$0xff]
          %v3520 = vld [vmem:[#allocation9 + $0x528] sm:$0xff]
          %v3521 = vld [vmem:[#allocation9 + $0x530] sm:$0xff]
          %v3522 = vld [vmem:[#allocation9 + $0x538] sm:$0xff]
          %v3523 = vld [vmem:[#allocation9 + $0x540] sm:$0xff]
          %v3524 = vld [vmem:[#allocation9 + $0x548] sm:$0xff]
          %v3525 = vld [vmem:[#allocation9 + $0x550] sm:$0xff]
          %v3526 = vld [vmem:[#allocation9 + $0x558] sm:$0xff]
          %v3527 = vld [vmem:[#allocation9 + $0x560] sm:$0xff]
          %v3528 = vld [vmem:[#allocation9 + $0x568] sm:$0xff]
          %v3529 = vld [vmem:[#allocation9 + $0x570] sm:$0xff]
          %v3530 = vld [vmem:[#allocation9 + $0x578] sm:$0xff]
          %v3531 = vld [vmem:[#allocation9 + $0x580] sm:$0xff]
          %v3532 = vld [vmem:[#allocation9 + $0x588] sm:$0xff]
          %v3533 = vld [vmem:[#allocation9 + $0x590] sm:$0xff]
          %v3534 = vld [vmem:[#allocation9 + $0x598] sm:$0xff]
          %v3535 = vld [vmem:[#allocation9 + $0x5a0] sm:$0xff]
          %v3536 = vld [vmem:[#allocation9 + $0x5a8] sm:$0xff]
          %v3537 = vld [vmem:[#allocation9 + $0x5b0] sm:$0xff]
          %v3538 = vld [vmem:[#allocation9 + $0x5b8] sm:$0xff]
          %v3539 = vld [vmem:[#allocation9 + $0x5c0] sm:$0xff]
          %v3540 = vld [vmem:[#allocation9 + $0x5c8] sm:$0xff]
          %v3541 = vld [vmem:[#allocation9 + $0x5d0] sm:$0xff]
          %v3542 = vld [vmem:[#allocation9 + $0x5d8] sm:$0xff]
          %v3543 = vld [vmem:[#allocation9 + $0x5e0] sm:$0xff]
          %v3544 = vld [vmem:[#allocation9 + $0x5e8] sm:$0xff]
          %v3545 = vld [vmem:[#allocation9 + $0x5f0] sm:$0xff]
          %v3546 = vld [vmem:[#allocation9 + $0x5f8] sm:$0xff]
          %v3547 = vld [vmem:[#allocation9 + $0x600] sm:$0xff]
          %v3548 = vld [vmem:[#allocation9 + $0x608] sm:$0xff]
          %v3549 = vld [vmem:[#allocation9 + $0x610] sm:$0xff]
          %v3550 = vld [vmem:[#allocation9 + $0x618] sm:$0xff]
          %v3551 = vld [vmem:[#allocation9 + $0x620] sm:$0xff]
          %v3552 = vld [vmem:[#allocation9 + $0x628] sm:$0xff]
          %v3553 = vld [vmem:[#allocation9 + $0x630] sm:$0xff]
          %v3554 = vld [vmem:[#allocation9 + $0x638] sm:$0xff]
          %v3555 = vld [vmem:[#allocation9 + $0x640] sm:$0xff]
          %v3556 = vld [vmem:[#allocation9 + $0x648] sm:$0xff]
          %v3557 = vld [vmem:[#allocation9 + $0x650] sm:$0xff]
          %v3558 = vld [vmem:[#allocation9 + $0x658] sm:$0xff]
          %v3559 = vld [vmem:[#allocation9 + $0x660] sm:$0xff]
          %v3560 = vld [vmem:[#allocation9 + $0x668] sm:$0xff]
          %v3561 = vld [vmem:[#allocation9 + $0x670] sm:$0xff]
          %v3562 = vld [vmem:[#allocation9 + $0x678] sm:$0xff]
          %v3563 = vld [vmem:[#allocation9 + $0x680] sm:$0xff]
          %v3564 = vld [vmem:[#allocation9 + $0x688] sm:$0xff]
          %v3565 = vld [vmem:[#allocation9 + $0x690] sm:$0xff]
          %v3566 = vld [vmem:[#allocation9 + $0x698] sm:$0xff]
          %v3567 = vld [vmem:[#allocation9 + $0x6a0] sm:$0xff]
          %v3568 = vld [vmem:[#allocation9 + $0x6a8] sm:$0xff]
          %v3569 = vld [vmem:[#allocation9 + $0x6b0] sm:$0xff]
          %v3570 = vld [vmem:[#allocation9 + $0x6b8] sm:$0xff]
          %v3571 = vld [vmem:[#allocation9 + $0x6c0] sm:$0xff]
          %v3572 = vld [vmem:[#allocation9 + $0x6c8] sm:$0xff]
          %v3573 = vld [vmem:[#allocation9 + $0x6d0] sm:$0xff]
          %v3574 = vld [vmem:[#allocation9 + $0x6d8] sm:$0xff]
          %v3575 = vld [vmem:[#allocation9 + $0x6e0] sm:$0xff]
          %v3576 = vld [vmem:[#allocation9 + $0x6e8] sm:$0xff]
          %v3577 = vld [vmem:[#allocation9 + $0x6f0] sm:$0xff]
          %v3578 = vld [vmem:[#allocation9 + $0x6f8] sm:$0xff]
          %v3579 = vld [vmem:[#allocation9 + $0x700] sm:$0xff]
          %v3580 = vld [vmem:[#allocation9 + $0x708] sm:$0xff]
          %v3581 = vld [vmem:[#allocation9 + $0x710] sm:$0xff]
          %v3582 = vld [vmem:[#allocation9 + $0x718] sm:$0xff]
          %v3583 = vld [vmem:[#allocation9 + $0x720] sm:$0xff]
          %v3584 = vld [vmem:[#allocation9 + $0x728] sm:$0xff]
          %v3585 = vld [vmem:[#allocation9 + $0x730] sm:$0xff]
          %v3586 = vld [vmem:[#allocation9 + $0x738] sm:$0xff]
          %v3587 = vld [vmem:[#allocation9 + $0x740] sm:$0xff]
          %v3588 = vld [vmem:[#allocation9 + $0x748] sm:$0xff]
          %v3589 = vld [vmem:[#allocation9 + $0x750] sm:$0xff]
          %v3590 = vld [vmem:[#allocation9 + $0x758] sm:$0xff]
          %v3591 = vld [vmem:[#allocation9 + $0x760] sm:$0xff]
          %v3592 = vld [vmem:[#allocation9 + $0x768] sm:$0xff]
          %v3593 = vld [vmem:[#allocation9 + $0x770] sm:$0xff]
          %v3594 = vld [vmem:[#allocation9 + $0x778] sm:$0xff]
          %v3595 = vld [vmem:[#allocation9 + $0x780] sm:$0xff]
          %v3596 = vld [vmem:[#allocation9 + $0x788] sm:$0xff]
          %v3597 = vld [vmem:[#allocation9 + $0x790] sm:$0xff]
          %v3598 = vld [vmem:[#allocation9 + $0x798] sm:$0xff]
          %v3599 = vld [vmem:[#allocation9 + $0x7a0] sm:$0xff]
          %v3600 = vld [vmem:[#allocation9 + $0x7a8] sm:$0xff]
          %v3601 = vld [vmem:[#allocation9 + $0x7b0] sm:$0xff]
          %v3602 = vld [vmem:[#allocation9 + $0x7b8] sm:$0xff]
          %v3603 = vld [vmem:[#allocation9 + $0x7c0] sm:$0xff]
          %v3604 = vld [vmem:[#allocation9 + $0x7c8] sm:$0xff]
          %v3605 = vld [vmem:[#allocation9 + $0x7d0] sm:$0xff]
          %v3606 = vld [vmem:[#allocation9 + $0x7d8] sm:$0xff]
          %v3607 = vld [vmem:[#allocation9 + $0x7e0] sm:$0xff]
          %v3608 = vld [vmem:[#allocation9 + $0x7e8] sm:$0xff]
          %v3609 = vld [vmem:[#allocation9 + $0x7f0] sm:$0xff]
          %v3610 = vld [vmem:[#allocation9 + $0x7f8] sm:$0xff]
          %v3611 = vld [vmem:[#allocation11] sm:$0x3]
          %v3613 = vperm.slane %v3611, 0
          %v3614 = vperm.slane %v3611, 1
          %3617 = vmatpush.msra.mxu0 %v3385
          %3618 = vmatpush.msra.mxu0 %v3383
          %3619 = vmatpush.msra.mxu0 %v3381
          %3620 = vmatpush.msra.mxu0 %v3379
          %3621 = vmatpush.msra.mxu0 %v3377
          %3622 = vmatpush.msra.mxu0 %v3375
          %3623 = vmatpush.msra.mxu0 %v3373
          %3624 = vmatpush.msra.mxu0 %v3371
          %3625 = vmatpush.msra.mxu0 %v3369
          %3626 = vmatpush.msra.mxu0 %v3367
          %3627 = vmatpush.msra.mxu0 %v3365
          %3628 = vmatpush.msra.mxu0 %v3363
          %3629 = vmatpush.msra.mxu0 %v3361
          %3630 = vmatpush.msra.mxu0 %v3359
          %3631 = vmatpush.msra.mxu0 %v3357
          %3632 = vmatpush.msra.mxu0 %v3355
          %3633 = vmatmul.f32.gmra.mxu0 %v3347
          %v3634 = vpop.f32.mrf.mxu0
          %v3635 = vadd.f32 %v3613, %v3634
          %3636 = vdwg.mxu0
          %3637 = vmatpush.msra.mxu0 %v3417
          %3638 = vmatpush.msra.mxu0 %v3415
          %3639 = vmatpush.msra.mxu0 %v3413
          %3640 = vmatpush.msra.mxu0 %v3411
          %3641 = vmatpush.msra.mxu0 %v3409
          %3642 = vmatpush.msra.mxu0 %v3407
          %3643 = vmatpush.msra.mxu0 %v3405
          %3644 = vmatpush.msra.mxu0 %v3403
          %3645 = vmatpush.msra.mxu0 %v3401
          %3646 = vmatpush.msra.mxu0 %v3399
          %3647 = vmatpush.msra.mxu0 %v3397
          %3648 = vmatpush.msra.mxu0 %v3395
          %3649 = vmatpush.msra.mxu0 %v3393
          %3650 = vmatpush.msra.mxu0 %v3391
          %3651 = vmatpush.msra.mxu0 %v3389
          %3652 = vmatpush.msra.mxu0 %v3387
          %3653 = vmatmul.f32.gmra.mxu0 %v3348
          %v3654 = vpop.f32.mrf.mxu0
          %v3655 = vadd.f32 %v3635, %v3654
          %3656 = vdwg.mxu0
          %3657 = vmatpush.msra.mxu0 %v3449
          %3658 = vmatpush.msra.mxu0 %v3447
          %3659 = vmatpush.msra.mxu0 %v3445
          %3660 = vmatpush.msra.mxu0 %v3443
          %3661 = vmatpush.msra.mxu0 %v3441
          %3662 = vmatpush.msra.mxu0 %v3439
          %3663 = vmatpush.msra.mxu0 %v3437
          %3664 = vmatpush.msra.mxu0 %v3435
          %3665 = vmatpush.msra.mxu0 %v3433
          %3666 = vmatpush.msra.mxu0 %v3431
          %3667 = vmatpush.msra.mxu0 %v3429
          %3668 = vmatpush.msra.mxu0 %v3427
          %3669 = vmatpush.msra.mxu0 %v3425
          %3670 = vmatpush.msra.mxu0 %v3423
          %3671 = vmatpush.msra.mxu0 %v3421
          %3672 = vmatpush.msra.mxu0 %v3419
          %3673 = vmatmul.f32.gmra.mxu0 %v3349
          %v3674 = vpop.f32.mrf.mxu0
          %v3675 = vadd.f32 %v3655, %v3674
          %3676 = vdwg.mxu0
          %3677 = vmatpush.msra.mxu0 %v3481
          %3678 = vmatpush.msra.mxu0 %v3479
          %3679 = vmatpush.msra.mxu0 %v3477
          %3680 = vmatpush.msra.mxu0 %v3475
          %3681 = vmatpush.msra.mxu0 %v3473
          %3682 = vmatpush.msra.mxu0 %v3471
          %3683 = vmatpush.msra.mxu0 %v3469
          %3684 = vmatpush.msra.mxu0 %v3467
          %3685 = vmatpush.msra.mxu0 %v3465
          %3686 = vmatpush.msra.mxu0 %v3463
          %3687 = vmatpush.msra.mxu0 %v3461
          %3688 = vmatpush.msra.mxu0 %v3459
          %3689 = vmatpush.msra.mxu0 %v3457
          %3690 = vmatpush.msra.mxu0 %v3455
          %3691 = vmatpush.msra.mxu0 %v3453
          %3692 = vmatpush.msra.mxu0 %v3451
          %3693 = vmatmul.f32.gmra.mxu0 %v3350
          %v3694 = vpop.f32.mrf.mxu0
          %v3695 = vadd.f32 %v3675, %v3694
          %3696 = vdwg.mxu0
          %3697 = vmatpush.msra.mxu0 %v3513
          %3698 = vmatpush.msra.mxu0 %v3511
          %3699 = vmatpush.msra.mxu0 %v3509
          %3700 = vmatpush.msra.mxu0 %v3507
          %3701 = vmatpush.msra.mxu0 %v3505
          %3702 = vmatpush.msra.mxu0 %v3503
          %3703 = vmatpush.msra.mxu0 %v3501
          %3704 = vmatpush.msra.mxu0 %v3499
          %3705 = vmatpush.msra.mxu0 %v3497
          %3706 = vmatpush.msra.mxu0 %v3495
          %3707 = vmatpush.msra.mxu0 %v3493
          %3708 = vmatpush.msra.mxu0 %v3491
          %3709 = vmatpush.msra.mxu0 %v3489
          %3710 = vmatpush.msra.mxu0 %v3487
          %3711 = vmatpush.msra.mxu0 %v3485
          %3712 = vmatpush.msra.mxu0 %v3483
          %3713 = vmatmul.f32.gmra.mxu0 %v3351
          %v3714 = vpop.f32.mrf.mxu0
          %v3715 = vadd.f32 %v3695, %v3714
          %3716 = vdwg.mxu0
          %3717 = vmatpush.msra.mxu0 %v3545
          %3718 = vmatpush.msra.mxu0 %v3543
          %3719 = vmatpush.msra.mxu0 %v3541
          %3720 = vmatpush.msra.mxu0 %v3539
          %3721 = vmatpush.msra.mxu0 %v3537
          %3722 = vmatpush.msra.mxu0 %v3535
          %3723 = vmatpush.msra.mxu0 %v3533
          %3724 = vmatpush.msra.mxu0 %v3531
          %3725 = vmatpush.msra.mxu0 %v3529
          %3726 = vmatpush.msra.mxu0 %v3527
          %3727 = vmatpush.msra.mxu0 %v3525
          %3728 = vmatpush.msra.mxu0 %v3523
          %3729 = vmatpush.msra.mxu0 %v3521
          %3730 = vmatpush.msra.mxu0 %v3519
          %3731 = vmatpush.msra.mxu0 %v3517
          %3732 = vmatpush.msra.mxu0 %v3515
          %3733 = vmatmul.f32.gmra.mxu0 %v3352
          %v3734 = vpop.f32.mrf.mxu0
          %v3735 = vadd.f32 %v3715, %v3734
          %3736 = vdwg.mxu0
          %3737 = vmatpush.msra.mxu0 %v3577
          %3738 = vmatpush.msra.mxu0 %v3575
          %3739 = vmatpush.msra.mxu0 %v3573
          %3740 = vmatpush.msra.mxu0 %v3571
          %3741 = vmatpush.msra.mxu0 %v3569
          %3742 = vmatpush.msra.mxu0 %v3567
          %3743 = vmatpush.msra.mxu0 %v3565
          %3744 = vmatpush.msra.mxu0 %v3563
          %3745 = vmatpush.msra.mxu0 %v3561
          %3746 = vmatpush.msra.mxu0 %v3559
          %3747 = vmatpush.msra.mxu0 %v3557
          %3748 = vmatpush.msra.mxu0 %v3555
          %3749 = vmatpush.msra.mxu0 %v3553
          %3750 = vmatpush.msra.mxu0 %v3551
          %3751 = vmatpush.msra.mxu0 %v3549
          %3752 = vmatpush.msra.mxu0 %v3547
          %3753 = vmatmul.f32.gmra.mxu0 %v3353
          %v3754 = vpop.f32.mrf.mxu0
          %v3755 = vadd.f32 %v3735, %v3754
          %3756 = vdwg.mxu0
          %3757 = vmatpush.msra.mxu0 %v3609
          %3758 = vmatpush.msra.mxu0 %v3607
          %3759 = vmatpush.msra.mxu0 %v3605
          %3760 = vmatpush.msra.mxu0 %v3603
          %3761 = vmatpush.msra.mxu0 %v3601
          %3762 = vmatpush.msra.mxu0 %v3599
          %3763 = vmatpush.msra.mxu0 %v3597
          %3764 = vmatpush.msra.mxu0 %v3595
          %3765 = vmatpush.msra.mxu0 %v3593
          %3766 = vmatpush.msra.mxu0 %v3591
          %3767 = vmatpush.msra.mxu0 %v3589
          %3768 = vmatpush.msra.mxu0 %v3587
          %3769 = vmatpush.msra.mxu0 %v3585
          %3770 = vmatpush.msra.mxu0 %v3583
          %3771 = vmatpush.msra.mxu0 %v3581
          %3772 = vmatpush.msra.mxu0 %v3579
          %3773 = vmatmul.f32.gmra.mxu0 %v3354
          %v3774 = vpop.f32.mrf.mxu0
          %v3775 = vadd.f32 %v3755, %v3774
          %3776 = vdwg.mxu0
          %3777 = vmatpush.msra.mxu0 %v3386
          %3778 = vmatpush.msra.mxu0 %v3384
          %3779 = vmatpush.msra.mxu0 %v3382
          %3780 = vmatpush.msra.mxu0 %v3380
          %3781 = vmatpush.msra.mxu0 %v3378
          %3782 = vmatpush.msra.mxu0 %v3376
          %3783 = vmatpush.msra.mxu0 %v3374
          %3784 = vmatpush.msra.mxu0 %v3372
          %3785 = vmatpush.msra.mxu0 %v3370
          %3786 = vmatpush.msra.mxu0 %v3368
          %3787 = vmatpush.msra.mxu0 %v3366
          %3788 = vmatpush.msra.mxu0 %v3364
          %3789 = vmatpush.msra.mxu0 %v3362
          %3790 = vmatpush.msra.mxu0 %v3360
          %3791 = vmatpush.msra.mxu0 %v3358
          %3792 = vmatpush.msra.mxu0 %v3356
          %3793 = vmatmul.f32.gmra.mxu0 %v3347
          %v3794 = vpop.f32.mrf.mxu0
          %v3795 = vadd.f32 %v3614, %v3794
          %3796 = vdwg.mxu0
          %3797 = vmatpush.msra.mxu0 %v3418
          %3798 = vmatpush.msra.mxu0 %v3416
          %3799 = vmatpush.msra.mxu0 %v3414
          %3800 = vmatpush.msra.mxu0 %v3412
          %3801 = vmatpush.msra.mxu0 %v3410
          %3802 = vmatpush.msra.mxu0 %v3408
          %3803 = vmatpush.msra.mxu0 %v3406
          %3804 = vmatpush.msra.mxu0 %v3404
          %3805 = vmatpush.msra.mxu0 %v3402
          %3806 = vmatpush.msra.mxu0 %v3400
          %3807 = vmatpush.msra.mxu0 %v3398
          %3808 = vmatpush.msra.mxu0 %v3396
          %3809 = vmatpush.msra.mxu0 %v3394
          %3810 = vmatpush.msra.mxu0 %v3392
          %3811 = vmatpush.msra.mxu0 %v3390
          %3812 = vmatpush.msra.mxu0 %v3388
          %3813 = vmatmul.f32.gmra.mxu0 %v3348
          %v3814 = vpop.f32.mrf.mxu0
          %v3815 = vadd.f32 %v3795, %v3814
          %3816 = vdwg.mxu0
          %3817 = vmatpush.msra.mxu0 %v3450
          %3818 = vmatpush.msra.mxu0 %v3448
          %3819 = vmatpush.msra.mxu0 %v3446
          %3820 = vmatpush.msra.mxu0 %v3444
          %3821 = vmatpush.msra.mxu0 %v3442
          %3822 = vmatpush.msra.mxu0 %v3440
          %3823 = vmatpush.msra.mxu0 %v3438
          %3824 = vmatpush.msra.mxu0 %v3436
          %3825 = vmatpush.msra.mxu0 %v3434
          %3826 = vmatpush.msra.mxu0 %v3432
          %3827 = vmatpush.msra.mxu0 %v3430
          %3828 = vmatpush.msra.mxu0 %v3428
          %3829 = vmatpush.msra.mxu0 %v3426
          %3830 = vmatpush.msra.mxu0 %v3424
          %3831 = vmatpush.msra.mxu0 %v3422
          %3832 = vmatpush.msra.mxu0 %v3420
          %3833 = vmatmul.f32.gmra.mxu0 %v3349
          %v3834 = vpop.f32.mrf.mxu0
          %v3835 = vadd.f32 %v3815, %v3834
          %3836 = vdwg.mxu0
          %3837 = vmatpush.msra.mxu0 %v3482
          %3838 = vmatpush.msra.mxu0 %v3480
          %3839 = vmatpush.msra.mxu0 %v3478
          %3840 = vmatpush.msra.mxu0 %v3476
          %3841 = vmatpush.msra.mxu0 %v3474
          %3842 = vmatpush.msra.mxu0 %v3472
          %3843 = vmatpush.msra.mxu0 %v3470
          %3844 = vmatpush.msra.mxu0 %v3468
          %3845 = vmatpush.msra.mxu0 %v3466
          %3846 = vmatpush.msra.mxu0 %v3464
          %3847 = vmatpush.msra.mxu0 %v3462
          %3848 = vmatpush.msra.mxu0 %v3460
          %3849 = vmatpush.msra.mxu0 %v3458
          %3850 = vmatpush.msra.mxu0 %v3456
          %3851 = vmatpush.msra.mxu0 %v3454
          %3852 = vmatpush.msra.mxu0 %v3452
          %3853 = vmatmul.f32.gmra.mxu0 %v3350
          %v3854 = vpop.f32.mrf.mxu0
          %v3855 = vadd.f32 %v3835, %v3854
          %3856 = vdwg.mxu0
          %3857 = vmatpush.msra.mxu0 %v3514
          %3858 = vmatpush.msra.mxu0 %v3512
          %3859 = vmatpush.msra.mxu0 %v3510
          %3860 = vmatpush.msra.mxu0 %v3508
          %3861 = vmatpush.msra.mxu0 %v3506
          %3862 = vmatpush.msra.mxu0 %v3504
          %3863 = vmatpush.msra.mxu0 %v3502
          %3864 = vmatpush.msra.mxu0 %v3500
          %3865 = vmatpush.msra.mxu0 %v3498
          %3866 = vmatpush.msra.mxu0 %v3496
          %3867 = vmatpush.msra.mxu0 %v3494
          %3868 = vmatpush.msra.mxu0 %v3492
          %3869 = vmatpush.msra.mxu0 %v3490
          %3870 = vmatpush.msra.mxu0 %v3488
          %3871 = vmatpush.msra.mxu0 %v3486
          %3872 = vmatpush.msra.mxu0 %v3484
          %3873 = vmatmul.f32.gmra.mxu0 %v3351
          %v3874 = vpop.f32.mrf.mxu0
          %v3875 = vadd.f32 %v3855, %v3874
          %3876 = vdwg.mxu0
          %3877 = vmatpush.msra.mxu0 %v3546
          %3878 = vmatpush.msra.mxu0 %v3544
          %3879 = vmatpush.msra.mxu0 %v3542
          %3880 = vmatpush.msra.mxu0 %v3540
          %3881 = vmatpush.msra.mxu0 %v3538
          %3882 = vmatpush.msra.mxu0 %v3536
          %3883 = vmatpush.msra.mxu0 %v3534
          %3884 = vmatpush.msra.mxu0 %v3532
          %3885 = vmatpush.msra.mxu0 %v3530
          %3886 = vmatpush.msra.mxu0 %v3528
          %3887 = vmatpush.msra.mxu0 %v3526
          %3888 = vmatpush.msra.mxu0 %v3524
          %3889 = vmatpush.msra.mxu0 %v3522
          %3890 = vmatpush.msra.mxu0 %v3520
          %3891 = vmatpush.msra.mxu0 %v3518
          %3892 = vmatpush.msra.mxu0 %v3516
          %3893 = vmatmul.f32.gmra.mxu0 %v3352
          %v3894 = vpop.f32.mrf.mxu0
          %v3895 = vadd.f32 %v3875, %v3894
          %3896 = vdwg.mxu0
          %3897 = vmatpush.msra.mxu0 %v3578
          %3898 = vmatpush.msra.mxu0 %v3576
          %3899 = vmatpush.msra.mxu0 %v3574
          %3900 = vmatpush.msra.mxu0 %v3572
          %3901 = vmatpush.msra.mxu0 %v3570
          %3902 = vmatpush.msra.mxu0 %v3568
          %3903 = vmatpush.msra.mxu0 %v3566
          %3904 = vmatpush.msra.mxu0 %v3564
          %3905 = vmatpush.msra.mxu0 %v3562
          %3906 = vmatpush.msra.mxu0 %v3560
          %3907 = vmatpush.msra.mxu0 %v3558
          %3908 = vmatpush.msra.mxu0 %v3556
          %3909 = vmatpush.msra.mxu0 %v3554
          %3910 = vmatpush.msra.mxu0 %v3552
          %3911 = vmatpush.msra.mxu0 %v3550
          %3912 = vmatpush.msra.mxu0 %v3548
          %3913 = vmatmul.f32.gmra.mxu0 %v3353
          %v3914 = vpop.f32.mrf.mxu0
          %v3915 = vadd.f32 %v3895, %v3914
          %3916 = vdwg.mxu0
          %3917 = vmatpush.msra.mxu0 %v3610
          %3918 = vmatpush.msra.mxu0 %v3608
          %3919 = vmatpush.msra.mxu0 %v3606
          %3920 = vmatpush.msra.mxu0 %v3604
          %3921 = vmatpush.msra.mxu0 %v3602
          %3922 = vmatpush.msra.mxu0 %v3600
          %3923 = vmatpush.msra.mxu0 %v3598
          %3924 = vmatpush.msra.mxu0 %v3596
          %3925 = vmatpush.msra.mxu0 %v3594
          %3926 = vmatpush.msra.mxu0 %v3592
          %3927 = vmatpush.msra.mxu0 %v3590
          %3928 = vmatpush.msra.mxu0 %v3588
          %3929 = vmatpush.msra.mxu0 %v3586
          %3930 = vmatpush.msra.mxu0 %v3584
          %3931 = vmatpush.msra.mxu0 %v3582
          %3932 = vmatpush.msra.mxu0 %v3580
          %3933 = vmatmul.f32.gmra.mxu0 %v3354
          %v3934 = vpop.f32.mrf.mxu0
          %v3935 = vadd.f32 %v3915, %v3934
          %3936 = vdwg.mxu0
          %v3937 = vmax.f32 %v3775, 0.0
          %v3938 = vmax.f32 %v3935, 0.0
          %v3939 = vld [vmem:[%s5] sm:$0xff]
          %v3940 = vld [vmem:[%s5 + $0x8] sm:$0xff]
          %v3941 = vld [vmem:[%s5 + $0x10] sm:$0xff]
          %v3942 = vld [vmem:[%s5 + $0x18] sm:$0xff]
          %v3943 = vld [vmem:[%s5 + $0x20] sm:$0xff]
          %v3944 = vld [vmem:[%s5 + $0x28] sm:$0xff]
          %v3945 = vld [vmem:[%s5 + $0x30] sm:$0xff]
          %v3946 = vld [vmem:[%s5 + $0x38] sm:$0xff]
          %v3947 = vld [vmem:[%s5 + $0x40] sm:$0xff]
          %v3948 = vld [vmem:[%s5 + $0x48] sm:$0xff]
          %v3949 = vld [vmem:[%s5 + $0x50] sm:$0xff]
          %v3950 = vld [vmem:[%s5 + $0x58] sm:$0xff]
          %v3951 = vld [vmem:[%s5 + $0x60] sm:$0xff]
          %v3952 = vld [vmem:[%s5 + $0x68] sm:$0xff]
          %v3953 = vld [vmem:[%s5 + $0x70] sm:$0xff]
          %v3954 = vld [vmem:[%s5 + $0x78] sm:$0xff]
          %v3955 = vld [vmem:[%s5 + $0x80] sm:$0xff]
          %v3956 = vld [vmem:[%s5 + $0x88] sm:$0xff]
          %v3957 = vld [vmem:[%s5 + $0x90] sm:$0xff]
          %v3958 = vld [vmem:[%s5 + $0x98] sm:$0xff]
          %v3959 = vld [vmem:[%s5 + $0xa0] sm:$0xff]
          %v3960 = vld [vmem:[%s5 + $0xa8] sm:$0xff]
          %v3961 = vld [vmem:[%s5 + $0xb0] sm:$0xff]
          %v3962 = vld [vmem:[%s5 + $0xb8] sm:$0xff]
          %v3963 = vld [vmem:[%s5 + $0xc0] sm:$0xff]
          %v3964 = vld [vmem:[%s5 + $0xc8] sm:$0xff]
          %v3965 = vld [vmem:[%s5 + $0xd0] sm:$0xff]
          %v3966 = vld [vmem:[%s5 + $0xd8] sm:$0xff]
          %v3967 = vld [vmem:[%s5 + $0xe0] sm:$0xff]
          %v3968 = vld [vmem:[%s5 + $0xe8] sm:$0xff]
          %v3969 = vld [vmem:[%s5 + $0xf0] sm:$0xff]
          %v3970 = vld [vmem:[%s5 + $0xf8] sm:$0xff]
          %v3971 = vld [vmem:[#allocation12] sm:$0x1]
          %v3973 = vperm.slane %v3971, 0
          %3975 = vmatpush.msra.mxu0 %v3954
          %3976 = vmatpush.msra.mxu0 %v3953
          %3977 = vmatpush.msra.mxu0 %v3952
          %3978 = vmatpush.msra.mxu0 %v3951
          %3979 = vmatpush.msra.mxu0 %v3950
          %3980 = vmatpush.msra.mxu0 %v3949
          %3981 = vmatpush.msra.mxu0 %v3948
          %3982 = vmatpush.msra.mxu0 %v3947
          %3983 = vmatpush.msra.mxu0 %v3946
          %3984 = vmatpush.msra.mxu0 %v3945
          %3985 = vmatpush.msra.mxu0 %v3944
          %3986 = vmatpush.msra.mxu0 %v3943
          %3987 = vmatpush.msra.mxu0 %v3942
          %3988 = vmatpush.msra.mxu0 %v3941
          %3989 = vmatpush.msra.mxu0 %v3940
          %3990 = vmatpush.msra.mxu0 %v3939
          %3991 = vmatmul.f32.gmra.mxu0 %v3937
          %v3992 = vpop.f32.mrf.mxu0
          %v3993 = vadd.f32 %v3973, %v3992
          %3994 = vdwg.mxu0
          %3995 = vmatpush.msra.mxu0 %v3970
          %3996 = vmatpush.msra.mxu0 %v3969
          %3997 = vmatpush.msra.mxu0 %v3968
          %3998 = vmatpush.msra.mxu0 %v3967
          %3999 = vmatpush.msra.mxu0 %v3966
          %4000 = vmatpush.msra.mxu0 %v3965
          %4001 = vmatpush.msra.mxu0 %v3964
          %4002 = vmatpush.msra.mxu0 %v3963
          %4003 = vmatpush.msra.mxu0 %v3962
          %4004 = vmatpush.msra.mxu0 %v3961
          %4005 = vmatpush.msra.mxu0 %v3960
          %4006 = vmatpush.msra.mxu0 %v3959
          %4007 = vmatpush.msra.mxu0 %v3958
          %4008 = vmatpush.msra.mxu0 %v3957
          %4009 = vmatpush.msra.mxu0 %v3956
          %4010 = vmatpush.msra.mxu0 %v3955
          %4011 = vmatmul.f32.gmra.mxu0 %v3938
          %v4012 = vpop.f32.mrf.mxu0
          %v4013 = vadd.f32 %v3993, %v4012
          %4014 = vdwg.mxu0
          %vm4015 = vcmp.eq.s32.totalorder %v2578, 0
          %v4016 = vxor.u32 %v4013, 2147483648
          %v4017 = vmul.f32 %v4016, 1.442695
          %v4018 = vpow.pop %v4017
          %v4019 = vadd.f32 %v4018, 1.0
          %v4020 = vrcp.pop %v4019
          %v4021 = vmul.f32 %v4019, %v4020
          %v4022 = vsub.f32 1.0, %v4021
          %v4023 = vmul.f32 %v4020, %v4022
          %v4024 = vadd.f32 %v4020, %v4023
          %vm4025 = vweird.f32 %v4019
          %vm4026 = vweird.f32 %v4020
          %vm4027 = vmor %vm4025, %vm4026
          %v4028 = vsel %vm4027, %v4020, %v4024
          %v4029 = vand.u32 2147483647, %v4019
          %vm4030 = vcmp.eq.f32.partialorder %v4029, 8.507059e+37
          %v4031 = vand.u32 %v4019, 2147483648
          %v4032 = vor.u32 1.1754944e-38, %v4031
          %v4033 = vsel %vm4030, %v4032, %v4028
          %v4034 = vmul.f32 1.0, %v4033
          %v4035 = vmul.f32 %v4034, 1.5707964
          %v4036 = vsel %vm4015, %v4013, %v4035
          %vm4037 = vcmask 9216
          %4038 = vst.msk [vmem:[#allocation14] sm:$0x3] %vm4037, %v4036
        $region80: #{tpu_custom_call.1} parent=47 // pred_fallthru
          _
        // Predicated region
        $region81: #{tpu_custom_call.1} parent=47 // pred_check
          %p4039 = pneg %p209
        $region82: #{tpu_custom_call.1} parent=47 // pred_check_branch
          %4041 = sbr.rel (%p4039) target = $region84
        $region83: #{tpu_custom_call.1} parent=47 // pred_region
          %4043 = vsyncadd [#allocation5], 0
          %s4044 = smul.addr %s29, 2
          %s4045 = scalar_lea.hbm %s7, %s4044
          %s4047 = sshll.u32 [#allocation14], 4
          %s4048 = int_to_ptr.vmem [resolvable:$true] %s4047
          %s4049 = sshll.u32 %s4045, 4
          %s4050 = int_to_ptr.hbm [resolvable:$true] %s4049
          %4052 = dma.vmem_to_hbm [thread:$0]  %s4048, 32, %s4050, [#allocation5]
        $region84: #{tpu_custom_call.1} parent=47 // pred_fallthru
          _
        // Predicated region
        $region85: #{tpu_custom_call.1} parent=47 // pred_check
          %p4053 = pneg %p209
        $region86: #{tpu_custom_call.1} parent=47 // pred_check_branch
          %4055 = sbr.rel (%p4053) target = $region88
        $region87: #{tpu_custom_call.1} parent=47 // pred_region
          %4057 = dma.done [#allocation5], 32
        $region88: #{tpu_custom_call.1} parent=47 // pred_fallthru
          _
      $region48: #{tpu_custom_call.1} parent=5 // pred_fallthru
        _
      %p4058 = scmp.le.s32.totalorder 2, %s20
      // Predicated region
      $region89: #{tpu_custom_call.1} parent=5 // pred_check
        %p4059 = pneg %p4058
      $region90: #{tpu_custom_call.1} parent=5 // pred_check_branch
        %4061 = sbr.rel (%p4059) target = $region92
      $region91: #{tpu_custom_call.1} parent=5 // pred_region
        %s4062 = ssub.s32 %s20, 2
      $region92: #{tpu_custom_call.1} parent=5 // pred_fallthru
        _
    $region6: #{tpu_custom_call.1} parent=1 // loop_footer
      %s24 = sadd.s32 1, %s20
    $region7: #{tpu_custom_call.1} parent=1 // loop_footer_branch
      %19 = sbr.rel target = $region3
    $region8: #{tpu_custom_call.1} parent=1 // loop_exit
      _
    %4063 = vsyncpa [#allocation4], 1
    %s4064 = scalar_lea.sflag [#allocation4], 1
    %4065 = vsyncpa %s4064, 1
    %4066 = vsyncpa [#allocation7], 1
    %4067 = vsyncpa [#allocation10], 1
    %4068 = vsyncpa [#allocation13], 1
    %4069 = vsyncpa [#allocation5], 1
    %s4070 = scalar_lea.sflag [#allocation5], 1
    %4071 = vsyncpa %s4070, 1

</llo_original>
